<compile_context>
chip_gen: v6e
topology: v6e:2x2x1
jax: 0.10.0
libtpu: 0.0.40
codegen_flags: <defaults>
</compile_context>

<pallas_src>
import functools

import jax
import jax.numpy as jnp
from jax.experimental import pallas as pl
from jax.experimental.pallas import tpu as pltpu

# Small-but-consistent config (module hardcodes h=3, w=5; input channels must equal d_model).
D_MODEL = 64
NHEAD = 4
NUM_LAYERS = 3
DFF = 128          # torch default dim_feedforward=2048, shrunk for this synthetic example
H_SPATIAL = 3
W_SPATIAL = 5
LN_EPS = 1e-5


def _layer_norm(x, w, b):
    mu = jnp.mean(x, axis=-1, keepdims=True)
    xc = x - mu
    var = jnp.mean(xc * xc, axis=-1, keepdims=True)
    return xc * jax.lax.rsqrt(var + LN_EPS) * w + b


def _encoder_kernel(x_ref, wqkv_ref, bqkv_ref, wo_ref, bo_ref,
                    w1_ref, b1_ref, w2_ref, b2_ref,
                    ln1w_ref, ln1b_ref, ln2w_ref, ln2b_ref,
                    hmask_ref, hmask_t_ref, out_ref,
                    *, num_layers, nhead, n_seq, s_len):
    # x_ref: (S*N, D) fp32, token-major rows (see layout comment at top of file).
    sn, d = x_ref.shape

    x = x_ref[...]
    hm = hmask_ref[...]       # (D, H)   hm[d,h] = 1 iff d belongs to head h
    hmt = hmask_t_ref[...]    # (H, D)

    for l in range(num_layers):
        # ---- multi-head self attention (post-norm, eval mode) ----
        # Fused QKV projection; the 1/sqrt(dh) scale is pre-folded into the Q columns.
        qkv = jnp.dot(x, wqkv_ref[l], preferred_element_type=jnp.float32) + bqkv_ref[l]
        q = qkv[:, :d]
        k = qkv[:, d:2 * d]
        v = qkv[:, 2 * d:]

        q3 = q.reshape(s_len, n_seq, d)     # (S, N, D) — aligned (N is a sublane multiple)
        k3 = k.reshape(s_len, n_seq, d)
        v3 = v.reshape(s_len, n_seq, d)

        # scores[s,t,n,h] = sum_d q[s,n,d] * k[t,n,d] * hm[d,h]   (scale already in q)
        prod = q3[:, None, :, :] * k3[None, :, :, :]              # (S, S, N, D)
        scores = jnp.dot(prod.reshape(s_len * s_len * n_seq, d), hm,
                         preferred_element_type=jnp.float32)      # (S*S*N, H)
        scores = scores.reshape(s_len, s_len, n_seq, nhead)       # (S, S, N, H)

        # softmax over the key axis t (= axis 1), numerically stabilized
        m = jnp.max(scores, axis=1, keepdims=True)                # (S, 1, N, H)
        e = jnp.exp(scores - m)                                   # (S, S, N, H)
        denom = jnp.sum(e, axis=1, keepdims=True)                 # (S, 1, N, H)
        p = e * (1.0 / denom)                                     # (S, S, N, H)

        # expand per-head weights back to lane width D (p_full[...,d] = p[..., d // dh])
        p_full = jnp.dot(p.reshape(s_len * s_len * n_seq, nhead), hmt,
                         preferred_element_type=jnp.float32)      # (S*S*N, D)
        p_full = p_full.reshape(s_len, s_len, n_seq, d)

        # attn[s,n,d] = sum_t p_full[s,t,n,d] * v[t,n,d]  (concat-heads layout by construction)
        attn = jnp.sum(p_full * v3[None, :, :, :], axis=1)        # (S, N, D)
        attn = attn.reshape(sn, d)

        attn = jnp.dot(attn, wo_ref[l], preferred_element_type=jnp.float32) + bo_ref[l]
        x = _layer_norm(x + attn, ln1w_ref[l], ln1b_ref[l])

        # ---- feed forward ----
        hidden = jnp.dot(x, w1_ref[l], preferred_element_type=jnp.float32) + b1_ref[l]
        hidden = jnp.maximum(hidden, 0.0)
        ff = jnp.dot(hidden, w2_ref[l], preferred_element_type=jnp.float32) + b2_ref[l]
        x = _layer_norm(x + ff, ln2w_ref[l], ln2b_ref[l])

    out_ref[...] = x


def pack_params(p, d_model=D_MODEL, nhead=NHEAD, num_layers=NUM_LAYERS):
    """Repack torch-convention weights into kernel operands.  Call ONCE, outside the hot path."""
    dh = d_model // nhead
    scale = 1.0 / float(dh) ** 0.5

    # fused QKV: qkv = x @ Wqkv + bqkv, with the attention scale folded into the Q columns
    wqkv = jnp.transpose(p["in_proj_w"], (0, 2, 1))               # (L, D, 3D)
    bqkv = p["in_proj_b"]                                         # (L, 3D)
    qscale = jnp.concatenate([jnp.full((d_model,), scale, jnp.float32),
                              jnp.ones((2 * d_model,), jnp.float32)])
    wqkv = wqkv * qscale[None, None, :]
    bqkv = (bqkv * qscale[None, :])[:, None, :]                   # (L, 1, 3D)

    head_ids = jnp.arange(d_model) // dh
    hmask = (head_ids[:, None] == jnp.arange(nhead)[None, :]).astype(jnp.float32)  # (D, H)

    return dict(
        pos_enc_h=p["pos_enc_h"], pos_enc_w=p["pos_enc_w"],
        wqkv=wqkv, bqkv=bqkv,
        wo=jnp.transpose(p["out_proj_w"], (0, 2, 1)), bo=p["out_proj_b"][:, None, :],
        w1=jnp.transpose(p["w1"], (0, 2, 1)), b1=p["b1"][:, None, :],
        w2=jnp.transpose(p["w2"], (0, 2, 1)), b2=p["b2"][:, None, :],
        ln1w=p["ln1_w"][:, None, :], ln1b=p["ln1_b"][:, None, :],
        ln2w=p["ln2_w"][:, None, :], ln2b=p["ln2_b"][:, None, :],
        hmask=hmask, hmask_t=hmask.T,
    )


def run_encoder_kernel(x2, kp, *, n_seq, s_len):
    sn, d = x2.shape
    kernel = functools.partial(_encoder_kernel, num_layers=NUM_LAYERS,
                               nhead=NHEAD, n_seq=n_seq, s_len=s_len)
    args = (x2, kp["wqkv"], kp["bqkv"], kp["wo"], kp["bo"],
            kp["w1"], kp["b1"], kp["w2"], kp["b2"],
            kp["ln1w"], kp["ln1b"], kp["ln2w"], kp["ln2b"],
            kp["hmask"], kp["hmask_t"])
    return pl.pallas_call(
        kernel,
        out_shape=jax.ShapeDtypeStruct((sn, d), jnp.float32),
        in_specs=[pl.BlockSpec(memory_space=pltpu.MemorySpace.VMEM) for _ in args],
        out_specs=pl.BlockSpec(memory_space=pltpu.MemorySpace.VMEM),
    )(*args)


def spatial_transformer_encoder_p7(x, packed):
    # layout: x is NCHW (B, C=d_model, H=3, W=5), matching the PyTorch module input.
    b, c, hh, ww = x.shape
    pe_h = jnp.broadcast_to(packed["pos_enc_h"][:, None, :], (hh, ww, c // 2))
    pe_w = jnp.broadcast_to(packed["pos_enc_w"][None, :, :], (hh, ww, c // 2))
    pos = jnp.concatenate([pe_h, pe_w], axis=-1)                  # (H, W, C)
    x = x + jnp.transpose(pos, (2, 0, 1))[None]                   # (B, C, H, W)

    n = b * ww
    n_pad = max(8, -(-n // 8) * 8)                                # round N up to sublane multiple
    seq = jnp.transpose(x, (0, 3, 2, 1)).reshape(n, hh, c)        # (N, S, D)
    seq = jnp.pad(seq, ((0, n_pad - n), (0, 0), (0, 0)))          # zero-padded sequences
    x2 = jnp.transpose(seq, (1, 0, 2)).reshape(hh * n_pad, c)     # (S*N_pad, D), token-major

    y2 = run_encoder_kernel(x2.astype(jnp.float32), packed, n_seq=n_pad, s_len=hh)

    y = jnp.transpose(y2.reshape(hh, n_pad, c), (1, 0, 2))[:n]    # (N, S, D), padding dropped
    # mirror torch: reshape(B, W, H, C, -1).permute(0,3,2,1,4).squeeze()
    y = jnp.transpose(y.reshape(b, ww, hh, c, 1), (0, 3, 2, 1, 4))
    return jnp.squeeze(y)


def init_params(key, d_model=D_MODEL, nhead=NHEAD, num_layers=NUM_LAYERS, dff=DFF,
                h=H_SPATIAL, w=W_SPATIAL):
    ks = jax.random.split(key, 10)
    L = num_layers

    def rnd(k, shape, scale):
        return scale * jax.random.normal(k, shape, dtype=jnp.float32)

    return {
        "pos_enc_h": rnd(ks[0], (h, d_model // 2), 1.0),
        "pos_enc_w": rnd(ks[1], (w, d_model // 2), 1.0),
        "in_proj_w": rnd(ks[2], (L, 3 * d_model, d_model), 0.05),
        "in_proj_b": rnd(ks[3], (L, 3 * d_model), 0.05),
        "out_proj_w": rnd(ks[4], (L, d_model, d_model), 0.05),
        "out_proj_b": rnd(ks[5], (L, d_model), 0.05),
        "w1": rnd(ks[6], (L, dff, d_model), 0.05),
        "b1": rnd(ks[7], (L, dff), 0.05),
        "w2": rnd(ks[8], (L, d_model, dff), 0.05),
        "b2": rnd(ks[9], (L, d_model), 0.05),
        "ln1_w": jnp.ones((L, d_model), jnp.float32),
        "ln1_b": jnp.zeros((L, d_model), jnp.float32),
        "ln2_w": jnp.ones((L, d_model), jnp.float32),
        "ln2_b": jnp.zeros((L, d_model), jnp.float32),
    }


def ref_forward(x, params):
    """Pure-JAX reference mirroring torch eval-mode semantics (for correctness check)."""
    b, c, hh, ww = x.shape
    nhead, L = NHEAD, NUM_LAYERS
    dh = c // nhead
    pe_h = jnp.broadcast_to(params["pos_enc_h"][:, None, :], (hh, ww, c // 2))
    pe_w = jnp.broadcast_to(params["pos_enc_w"][None, :, :], (hh, ww, c // 2))
    pos = jnp.concatenate([pe_h, pe_w], axis=-1)
    x = x + jnp.transpose(pos, (2, 0, 1))[None]
    xs = jnp.transpose(x, (0, 3, 2, 1)).reshape(b * ww, hh, c)

    def ln(v, wgt, bias):
        mu = v.mean(-1, keepdims=True)
        var = ((v - mu) ** 2).mean(-1, keepdims=True)
        return (v - mu) * jax.lax.rsqrt(var + LN_EPS) * wgt + bias

    for l in range(L):
        qkv = xs @ params["in_proj_w"][l].T + params["in_proj_b"][l]
        q, k, v = jnp.split(qkv, 3, axis=-1)

        def heads(t):
            n, s, _ = t.shape
            return t.reshape(n, s, nhead, dh).transpose(0, 2, 1, 3)

        q, k, v = heads(q), heads(k), heads(v)
        sc = jnp.einsum("nhsd,nhtd->nhst", q, k) / jnp.sqrt(jnp.float32(dh))
        p = jax.nn.softmax(sc, axis=-1)
        o = jnp.einsum("nhst,nhtd->nhsd", p, v).transpose(0, 2, 1, 3).reshape(xs.shape)
        o = o @ params["out_proj_w"][l].T + params["out_proj_b"][l]
        xs = ln(xs + o, params["ln1_w"][l], params["ln1_b"][l])
        hdn = jax.nn.relu(xs @ params["w1"][l].T + params["b1"][l])
        ff = hdn @ params["w2"][l].T + params["b2"][l]
        xs = ln(xs + ff, params["ln2_w"][l], params["ln2_b"][l])

    y = jnp.transpose(xs.reshape(b, ww, hh, c, 1), (0, 3, 2, 1, 4))
    return jnp.squeeze(y)


if __name__ == "__main__":
    key = jax.random.PRNGKey(0)
    kx, kparam = jax.random.split(key)
    x = jax.random.normal(kx, (2, D_MODEL, H_SPATIAL, W_SPATIAL), dtype=jnp.float32)
    params = init_params(kparam)

    packed = jax.tree_util.tree_map(jax.block_until_ready, pack_params(params))  # pack once
    fwd = jax.jit(spatial_transformer_encoder_p7)

    out = jax.block_until_ready(fwd(x, packed))
    assert out.shape == (2, D_MODEL, H_SPATIAL, W_SPATIAL), out.shape

    ref = ref_forward(x, params)
    err = float(jnp.max(jnp.abs(out - ref)))
    assert err < 5e-3, f"kernel/reference mismatch: max abs err = {err}"
    print("KERNEL_OK")
</pallas_src>

<mosaic_0001>
module attributes {stable_mosaic.version = 11 : i64} {
  func.func @_encoder_kernel(%arg0: memref<48x64xf32, #tpu.memory_space<vmem>>, %arg1: memref<3x64x192xf32, #tpu.memory_space<vmem>>, %arg2: memref<3x1x192xf32, #tpu.memory_space<vmem>>, %arg3: memref<3x64x64xf32, #tpu.memory_space<vmem>>, %arg4: memref<3x1x64xf32, #tpu.memory_space<vmem>>, %arg5: memref<3x64x128xf32, #tpu.memory_space<vmem>>, %arg6: memref<3x1x128xf32, #tpu.memory_space<vmem>>, %arg7: memref<3x128x64xf32, #tpu.memory_space<vmem>>, %arg8: memref<3x1x64xf32, #tpu.memory_space<vmem>>, %arg9: memref<3x1x64xf32, #tpu.memory_space<vmem>>, %arg10: memref<3x1x64xf32, #tpu.memory_space<vmem>>, %arg11: memref<3x1x64xf32, #tpu.memory_space<vmem>>, %arg12: memref<3x1x64xf32, #tpu.memory_space<vmem>>, %arg13: memref<64x4xf32, #tpu.memory_space<vmem>>, %arg14: memref<4x64xf32, #tpu.memory_space<vmem>>, %arg15: memref<48x64xf32, #tpu.memory_space<vmem>>) attributes {dimension_semantics = [], scalar_prefetch = 0 : i64, scratch_operands = 0 : i64, tpu.core_type = #tpu.core_type<tc>} {
    %c0 = arith.constant 0 : index
    %c0_0 = arith.constant 0 : index
    %0 = vector.load %arg0[%c0, %c0_0] : memref<48x64xf32, #tpu.memory_space<vmem>>, vector<48x64xf32>
    %c0_1 = arith.constant 0 : index
    %c0_2 = arith.constant 0 : index
    %1 = vector.load %arg13[%c0_1, %c0_2] : memref<64x4xf32, #tpu.memory_space<vmem>>, vector<64x4xf32>
    %c0_3 = arith.constant 0 : index
    %c0_4 = arith.constant 0 : index
    %2 = vector.load %arg14[%c0_3, %c0_4] : memref<4x64xf32, #tpu.memory_space<vmem>>, vector<4x64xf32>
    %c0_5 = arith.constant 0 : index
    %c0_6 = arith.constant 0 : index
    %c0_7 = arith.constant 0 : index
    %3 = vector.load %arg1[%c0_5, %c0_6, %c0_7] : memref<3x64x192xf32, #tpu.memory_space<vmem>>, vector<1x64x192xf32>
    %4 = vector.shape_cast %3 : vector<1x64x192xf32> to vector<64x192xf32>
    %cst = arith.constant dense<0.000000e+00> : vector<48x192xf32>
    %5 = tpu.matmul %0, %4, %cst {dimension_numbers = #tpu.dot_dimension_numbers<[1], [0], [0], [1], [0, 0, 1, 1], [], []>} : vector<48x64xf32>, vector<64x192xf32>, vector<48x192xf32> -> vector<48x192xf32>
    %c0_8 = arith.constant 0 : index
    %c0_9 = arith.constant 0 : index
    %c0_10 = arith.constant 0 : index
    %6 = vector.load %arg2[%c0_8, %c0_9, %c0_10] : memref<3x1x192xf32, #tpu.memory_space<vmem>>, vector<1x1x192xf32>
    %7 = vector.shape_cast %6 : vector<1x1x192xf32> to vector<1x192xf32>
    %8 = vector.broadcast %7 : vector<1x192xf32> to vector<48x192xf32>
    %9 = arith.addf %5, %8 : vector<48x192xf32>
    %10 = vector.extract_strided_slice %9 {offsets = [0, 0], sizes = [48, 64], strides = [1, 1]} : vector<48x192xf32> to vector<48x64xf32>
    %11 = vector.extract_strided_slice %9 {offsets = [0, 64], sizes = [48, 64], strides = [1, 1]} : vector<48x192xf32> to vector<48x64xf32>
    %12 = vector.extract_strided_slice %9 {offsets = [0, 128], sizes = [48, 64], strides = [1, 1]} : vector<48x192xf32> to vector<48x64xf32>
    %13 = vector.shape_cast %10 : vector<48x64xf32> to vector<3x16x64xf32>
    %14 = vector.shape_cast %11 : vector<48x64xf32> to vector<3x16x64xf32>
    %15 = vector.shape_cast %12 : vector<48x64xf32> to vector<3x16x64xf32>
    %16 = vector.shape_cast %13 : vector<3x16x64xf32> to vector<3x1x16x64xf32>
    %17 = vector.shape_cast %14 : vector<3x16x64xf32> to vector<1x3x16x64xf32>
    %18 = vector.broadcast %16 : vector<3x1x16x64xf32> to vector<3x3x16x64xf32>
    %19 = vector.broadcast %17 : vector<1x3x16x64xf32> to vector<3x3x16x64xf32>
    %20 = arith.mulf %18, %19 : vector<3x3x16x64xf32>
    %21 = vector.shape_cast %20 : vector<3x3x16x64xf32> to vector<144x64xf32>
    %cst_11 = arith.constant dense<0.000000e+00> : vector<144x4xf32>
    %22 = tpu.matmul %21, %1, %cst_11 {dimension_numbers = #tpu.dot_dimension_numbers<[1], [0], [0], [1], [0, 0, 1, 1], [], []>} : vector<144x64xf32>, vector<64x4xf32>, vector<144x4xf32> -> vector<144x4xf32>
    %23 = vector.shape_cast %22 : vector<144x4xf32> to vector<3x3x16x4xf32>
    %cst_12 = arith.constant dense<0xFF800000> : vector<3x16x4xf32>
    %24 = vector.multi_reduction <maximumf>, %23, %cst_12 [1] : vector<3x3x16x4xf32> to vector<3x16x4xf32>
    %25 = vector.shape_cast %24 : vector<3x16x4xf32> to vector<3x1x16x4xf32>
    %26 = vector.broadcast %25 : vector<3x1x16x4xf32> to vector<3x3x16x4xf32>
    %27 = arith.subf %23, %26 : vector<3x3x16x4xf32>
    %28 = math.exp %27 : vector<3x3x16x4xf32>
    %cst_13 = arith.constant dense<0.000000e+00> : vector<3x16x4xf32>
    %29 = vector.multi_reduction <add>, %28, %cst_13 [1] : vector<3x3x16x4xf32> to vector<3x16x4xf32>
    %30 = vector.shape_cast %29 : vector<3x16x4xf32> to vector<3x1x16x4xf32>
    %cst_14 = arith.constant 1.000000e+00 : f32
    %31 = vector.broadcast %cst_14 : f32 to vector<3x1x16x4xf32>
    %32 = arith.divf %31, %30 : vector<3x1x16x4xf32>
    %33 = vector.broadcast %32 : vector<3x1x16x4xf32> to vector<3x3x16x4xf32>
    %34 = arith.mulf %28, %33 : vector<3x3x16x4xf32>
    %35 = vector.shape_cast %34 : vector<3x3x16x4xf32> to vector<144x4xf32>
    %cst_15 = arith.constant dense<0.000000e+00> : vector<144x64xf32>
    %36 = tpu.matmul %35, %2, %cst_15 {dimension_numbers = #tpu.dot_dimension_numbers<[1], [0], [0], [1], [0, 0, 1, 1], [], []>} : vector<144x4xf32>, vector<4x64xf32>, vector<144x64xf32> -> vector<144x64xf32>
    %37 = vector.shape_cast %36 : vector<144x64xf32> to vector<3x3x16x64xf32>
    %38 = vector.shape_cast %15 : vector<3x16x64xf32> to vector<1x3x16x64xf32>
    %39 = vector.broadcast %38 : vector<1x3x16x64xf32> to vector<3x3x16x64xf32>
    %40 = arith.mulf %37, %39 : vector<3x3x16x64xf32>
    %cst_16 = arith.constant dense<0.000000e+00> : vector<3x16x64xf32>
    %41 = vector.multi_reduction <add>, %40, %cst_16 [1] : vector<3x3x16x64xf32> to vector<3x16x64xf32>
    %42 = vector.shape_cast %41 : vector<3x16x64xf32> to vector<48x64xf32>
    %c0_17 = arith.constant 0 : index
    %c0_18 = arith.constant 0 : index
    %c0_19 = arith.constant 0 : index
    %43 = vector.load %arg3[%c0_17, %c0_18, %c0_19] : memref<3x64x64xf32, #tpu.memory_space<vmem>>, vector<1x64x64xf32>
    %44 = vector.shape_cast %43 : vector<1x64x64xf32> to vector<64x64xf32>
    %cst_20 = arith.constant dense<0.000000e+00> : vector<48x64xf32>
    %45 = tpu.matmul %42, %44, %cst_20 {dimension_numbers = #tpu.dot_dimension_numbers<[1], [0], [0], [1], [0, 0, 1, 1], [], []>} : vector<48x64xf32>, vector<64x64xf32>, vector<48x64xf32> -> vector<48x64xf32>
    %c0_21 = arith.constant 0 : index
    %c0_22 = arith.constant 0 : index
    %c0_23 = arith.constant 0 : index
    %46 = vector.load %arg4[%c0_21, %c0_22, %c0_23] : memref<3x1x64xf32, #tpu.memory_space<vmem>>, vector<1x1x64xf32>
    %47 = vector.shape_cast %46 : vector<1x1x64xf32> to vector<1x64xf32>
    %48 = vector.broadcast %47 : vector<1x64xf32> to vector<48x64xf32>
    %49 = arith.addf %45, %48 : vector<48x64xf32>
    %50 = arith.addf %0, %49 : vector<48x64xf32>
    %c0_24 = arith.constant 0 : index
    %c0_25 = arith.constant 0 : index
    %c0_26 = arith.constant 0 : index
    %51 = vector.load %arg9[%c0_24, %c0_25, %c0_26] : memref<3x1x64xf32, #tpu.memory_space<vmem>>, vector<1x1x64xf32>
    %52 = vector.shape_cast %51 : vector<1x1x64xf32> to vector<1x64xf32>
    %c0_27 = arith.constant 0 : index
    %c0_28 = arith.constant 0 : index
    %c0_29 = arith.constant 0 : index
    %53 = vector.load %arg10[%c0_27, %c0_28, %c0_29] : memref<3x1x64xf32, #tpu.memory_space<vmem>>, vector<1x1x64xf32>
    %54 = vector.shape_cast %53 : vector<1x1x64xf32> to vector<1x64xf32>
    %cst_30 = arith.constant dense<0.000000e+00> : vector<48xf32>
    %55 = vector.multi_reduction <add>, %50, %cst_30 [1] : vector<48x64xf32> to vector<48xf32>
    %56 = vector.shape_cast %55 : vector<48xf32> to vector<48x1xf32>
    %cst_31 = arith.constant 6.400000e+01 : f32
    %57 = vector.broadcast %cst_31 : f32 to vector<48x1xf32>
    %58 = arith.divf %56, %57 : vector<48x1xf32>
    %59 = vector.broadcast %58 : vector<48x1xf32> to vector<48x64xf32>
    %60 = arith.subf %50, %59 : vector<48x64xf32>
    %61 = arith.mulf %60, %60 : vector<48x64xf32>
    %cst_32 = arith.constant dense<0.000000e+00> : vector<48xf32>
    %62 = vector.multi_reduction <add>, %61, %cst_32 [1] : vector<48x64xf32> to vector<48xf32>
    %63 = vector.shape_cast %62 : vector<48xf32> to vector<48x1xf32>
    %cst_33 = arith.constant 6.400000e+01 : f32
    %64 = vector.broadcast %cst_33 : f32 to vector<48x1xf32>
    %65 = arith.divf %63, %64 : vector<48x1xf32>
    %cst_34 = arith.constant 9.99999974E-6 : f32
    %66 = vector.broadcast %cst_34 : f32 to vector<48x1xf32>
    %67 = arith.addf %65, %66 : vector<48x1xf32>
    %68 = math.rsqrt %67 : vector<48x1xf32>
    %69 = vector.broadcast %68 : vector<48x1xf32> to vector<48x64xf32>
    %70 = arith.mulf %60, %69 : vector<48x64xf32>
    %71 = vector.broadcast %52 : vector<1x64xf32> to vector<48x64xf32>
    %72 = arith.mulf %70, %71 : vector<48x64xf32>
    %73 = vector.broadcast %54 : vector<1x64xf32> to vector<48x64xf32>
    %74 = arith.addf %72, %73 : vector<48x64xf32>
    %c0_35 = arith.constant 0 : index
    %c0_36 = arith.constant 0 : index
    %c0_37 = arith.constant 0 : index
    %75 = vector.load %arg5[%c0_35, %c0_36, %c0_37] : memref<3x64x128xf32, #tpu.memory_space<vmem>>, vector<1x64x128xf32>
    %76 = vector.shape_cast %75 : vector<1x64x128xf32> to vector<64x128xf32>
    %cst_38 = arith.constant dense<0.000000e+00> : vector<48x128xf32>
    %77 = tpu.matmul %74, %76, %cst_38 {dimension_numbers = #tpu.dot_dimension_numbers<[1], [0], [0], [1], [0, 0, 1, 1], [], []>} : vector<48x64xf32>, vector<64x128xf32>, vector<48x128xf32> -> vector<48x128xf32>
    %c0_39 = arith.constant 0 : index
    %c0_40 = arith.constant 0 : index
    %c0_41 = arith.constant 0 : index
    %78 = vector.load %arg6[%c0_39, %c0_40, %c0_41] : memref<3x1x128xf32, #tpu.memory_space<vmem>>, vector<1x1x128xf32>
    %79 = vector.shape_cast %78 : vector<1x1x128xf32> to vector<1x128xf32>
    %80 = vector.broadcast %79 : vector<1x128xf32> to vector<48x128xf32>
    %81 = arith.addf %77, %80 : vector<48x128xf32>
    %cst_42 = arith.constant 0.000000e+00 : f32
    %82 = vector.broadcast %cst_42 : f32 to vector<48x128xf32>
    %83 = arith.maximumf %81, %82 : vector<48x128xf32>
    %c0_43 = arith.constant 0 : index
    %c0_44 = arith.constant 0 : index
    %c0_45 = arith.constant 0 : index
    %84 = vector.load %arg7[%c0_43, %c0_44, %c0_45] : memref<3x128x64xf32, #tpu.memory_space<vmem>>, vector<1x128x64xf32>
    %85 = vector.shape_cast %84 : vector<1x128x64xf32> to vector<128x64xf32>
    %cst_46 = arith.constant dense<0.000000e+00> : vector<48x64xf32>
    %86 = tpu.matmul %83, %85, %cst_46 {dimension_numbers = #tpu.dot_dimension_numbers<[1], [0], [0], [1], [0, 0, 1, 1], [], []>} : vector<48x128xf32>, vector<128x64xf32>, vector<48x64xf32> -> vector<48x64xf32>
    %c0_47 = arith.constant 0 : index
    %c0_48 = arith.constant 0 : index
    %c0_49 = arith.constant 0 : index
    %87 = vector.load %arg8[%c0_47, %c0_48, %c0_49] : memref<3x1x64xf32, #tpu.memory_space<vmem>>, vector<1x1x64xf32>
    %88 = vector.shape_cast %87 : vector<1x1x64xf32> to vector<1x64xf32>
    %89 = vector.broadcast %88 : vector<1x64xf32> to vector<48x64xf32>
    %90 = arith.addf %86, %89 : vector<48x64xf32>
    %91 = arith.addf %74, %90 : vector<48x64xf32>
    %c0_50 = arith.constant 0 : index
    %c0_51 = arith.constant 0 : index
    %c0_52 = arith.constant 0 : index
    %92 = vector.load %arg11[%c0_50, %c0_51, %c0_52] : memref<3x1x64xf32, #tpu.memory_space<vmem>>, vector<1x1x64xf32>
    %93 = vector.shape_cast %92 : vector<1x1x64xf32> to vector<1x64xf32>
    %c0_53 = arith.constant 0 : index
    %c0_54 = arith.constant 0 : index
    %c0_55 = arith.constant 0 : index
    %94 = vector.load %arg12[%c0_53, %c0_54, %c0_55] : memref<3x1x64xf32, #tpu.memory_space<vmem>>, vector<1x1x64xf32>
    %95 = vector.shape_cast %94 : vector<1x1x64xf32> to vector<1x64xf32>
    %cst_56 = arith.constant dense<0.000000e+00> : vector<48xf32>
    %96 = vector.multi_reduction <add>, %91, %cst_56 [1] : vector<48x64xf32> to vector<48xf32>
    %97 = vector.shape_cast %96 : vector<48xf32> to vector<48x1xf32>
    %cst_57 = arith.constant 6.400000e+01 : f32
    %98 = vector.broadcast %cst_57 : f32 to vector<48x1xf32>
    %99 = arith.divf %97, %98 : vector<48x1xf32>
    %100 = vector.broadcast %99 : vector<48x1xf32> to vector<48x64xf32>
    %101 = arith.subf %91, %100 : vector<48x64xf32>
    %102 = arith.mulf %101, %101 : vector<48x64xf32>
    %cst_58 = arith.constant dense<0.000000e+00> : vector<48xf32>
    %103 = vector.multi_reduction <add>, %102, %cst_58 [1] : vector<48x64xf32> to vector<48xf32>
    %104 = vector.shape_cast %103 : vector<48xf32> to vector<48x1xf32>
    %cst_59 = arith.constant 6.400000e+01 : f32
    %105 = vector.broadcast %cst_59 : f32 to vector<48x1xf32>
    %106 = arith.divf %104, %105 : vector<48x1xf32>
    %cst_60 = arith.constant 9.99999974E-6 : f32
    %107 = vector.broadcast %cst_60 : f32 to vector<48x1xf32>
    %108 = arith.addf %106, %107 : vector<48x1xf32>
    %109 = math.rsqrt %108 : vector<48x1xf32>
    %110 = vector.broadcast %109 : vector<48x1xf32> to vector<48x64xf32>
    %111 = arith.mulf %101, %110 : vector<48x64xf32>
    %112 = vector.broadcast %93 : vector<1x64xf32> to vector<48x64xf32>
    %113 = arith.mulf %111, %112 : vector<48x64xf32>
    %114 = vector.broadcast %95 : vector<1x64xf32> to vector<48x64xf32>
    %115 = arith.addf %113, %114 : vector<48x64xf32>
    %c1 = arith.constant 1 : index
    %c0_61 = arith.constant 0 : index
    %c0_62 = arith.constant 0 : index
    %116 = vector.load %arg1[%c1, %c0_61, %c0_62] : memref<3x64x192xf32, #tpu.memory_space<vmem>>, vector<1x64x192xf32>
    %117 = vector.shape_cast %116 : vector<1x64x192xf32> to vector<64x192xf32>
    %cst_63 = arith.constant dense<0.000000e+00> : vector<48x192xf32>
    %118 = tpu.matmul %115, %117, %cst_63 {dimension_numbers = #tpu.dot_dimension_numbers<[1], [0], [0], [1], [0, 0, 1, 1], [], []>} : vector<48x64xf32>, vector<64x192xf32>, vector<48x192xf32> -> vector<48x192xf32>
    %c1_64 = arith.constant 1 : index
    %c0_65 = arith.constant 0 : index
    %c0_66 = arith.constant 0 : index
    %119 = vector.load %arg2[%c1_64, %c0_65, %c0_66] : memref<3x1x192xf32, #tpu.memory_space<vmem>>, vector<1x1x192xf32>
    %120 = vector.shape_cast %119 : vector<1x1x192xf32> to vector<1x192xf32>
    %121 = vector.broadcast %120 : vector<1x192xf32> to vector<48x192xf32>
    %122 = arith.addf %118, %121 : vector<48x192xf32>
    %123 = vector.extract_strided_slice %122 {offsets = [0, 0], sizes = [48, 64], strides = [1, 1]} : vector<48x192xf32> to vector<48x64xf32>
    %124 = vector.extract_strided_slice %122 {offsets = [0, 64], sizes = [48, 64], strides = [1, 1]} : vector<48x192xf32> to vector<48x64xf32>
    %125 = vector.extract_strided_slice %122 {offsets = [0, 128], sizes = [48, 64], strides = [1, 1]} : vector<48x192xf32> to vector<48x64xf32>
    %126 = vector.shape_cast %123 : vector<48x64xf32> to vector<3x16x64xf32>
    %127 = vector.shape_cast %124 : vector<48x64xf32> to vector<3x16x64xf32>
    %128 = vector.shape_cast %125 : vector<48x64xf32> to vector<3x16x64xf32>
    %129 = vector.shape_cast %126 : vector<3x16x64xf32> to vector<3x1x16x64xf32>
    %130 = vector.shape_cast %127 : vector<3x16x64xf32> to vector<1x3x16x64xf32>
    %131 = vector.broadcast %129 : vector<3x1x16x64xf32> to vector<3x3x16x64xf32>
    %132 = vector.broadcast %130 : vector<1x3x16x64xf32> to vector<3x3x16x64xf32>
    %133 = arith.mulf %131, %132 : vector<3x3x16x64xf32>
    %134 = vector.shape_cast %133 : vector<3x3x16x64xf32> to vector<144x64xf32>
    %cst_67 = arith.constant dense<0.000000e+00> : vector<144x4xf32>
    %135 = tpu.matmul %134, %1, %cst_67 {dimension_numbers = #tpu.dot_dimension_numbers<[1], [0], [0], [1], [0, 0, 1, 1], [], []>} : vector<144x64xf32>, vector<64x4xf32>, vector<144x4xf32> -> vector<144x4xf32>
    %136 = vector.shape_cast %135 : vector<144x4xf32> to vector<3x3x16x4xf32>
    %cst_68 = arith.constant dense<0xFF800000> : vector<3x16x4xf32>
    %137 = vector.multi_reduction <maximumf>, %136, %cst_68 [1] : vector<3x3x16x4xf32> to vector<3x16x4xf32>
    %138 = vector.shape_cast %137 : vector<3x16x4xf32> to vector<3x1x16x4xf32>
    %139 = vector.broadcast %138 : vector<3x1x16x4xf32> to vector<3x3x16x4xf32>
    %140 = arith.subf %136, %139 : vector<3x3x16x4xf32>
    %141 = math.exp %140 : vector<3x3x16x4xf32>
    %cst_69 = arith.constant dense<0.000000e+00> : vector<3x16x4xf32>
    %142 = vector.multi_reduction <add>, %141, %cst_69 [1] : vector<3x3x16x4xf32> to vector<3x16x4xf32>
    %143 = vector.shape_cast %142 : vector<3x16x4xf32> to vector<3x1x16x4xf32>
    %cst_70 = arith.constant 1.000000e+00 : f32
    %144 = vector.broadcast %cst_70 : f32 to vector<3x1x16x4xf32>
    %145 = arith.divf %144, %143 : vector<3x1x16x4xf32>
    %146 = vector.broadcast %145 : vector<3x1x16x4xf32> to vector<3x3x16x4xf32>
    %147 = arith.mulf %141, %146 : vector<3x3x16x4xf32>
    %148 = vector.shape_cast %147 : vector<3x3x16x4xf32> to vector<144x4xf32>
    %cst_71 = arith.constant dense<0.000000e+00> : vector<144x64xf32>
    %149 = tpu.matmul %148, %2, %cst_71 {dimension_numbers = #tpu.dot_dimension_numbers<[1], [0], [0], [1], [0, 0, 1, 1], [], []>} : vector<144x4xf32>, vector<4x64xf32>, vector<144x64xf32> -> vector<144x64xf32>
    %150 = vector.shape_cast %149 : vector<144x64xf32> to vector<3x3x16x64xf32>
    %151 = vector.shape_cast %128 : vector<3x16x64xf32> to vector<1x3x16x64xf32>
    %152 = vector.broadcast %151 : vector<1x3x16x64xf32> to vector<3x3x16x64xf32>
    %153 = arith.mulf %150, %152 : vector<3x3x16x64xf32>
    %cst_72 = arith.constant dense<0.000000e+00> : vector<3x16x64xf32>
    %154 = vector.multi_reduction <add>, %153, %cst_72 [1] : vector<3x3x16x64xf32> to vector<3x16x64xf32>
    %155 = vector.shape_cast %154 : vector<3x16x64xf32> to vector<48x64xf32>
    %c1_73 = arith.constant 1 : index
    %c0_74 = arith.constant 0 : index
    %c0_75 = arith.constant 0 : index
    %156 = vector.load %arg3[%c1_73, %c0_74, %c0_75] : memref<3x64x64xf32, #tpu.memory_space<vmem>>, vector<1x64x64xf32>
    %157 = vector.shape_cast %156 : vector<1x64x64xf32> to vector<64x64xf32>
    %cst_76 = arith.constant dense<0.000000e+00> : vector<48x64xf32>
    %158 = tpu.matmul %155, %157, %cst_76 {dimension_numbers = #tpu.dot_dimension_numbers<[1], [0], [0], [1], [0, 0, 1, 1], [], []>} : vector<48x64xf32>, vector<64x64xf32>, vector<48x64xf32> -> vector<48x64xf32>
    %c1_77 = arith.constant 1 : index
    %c0_78 = arith.constant 0 : index
    %c0_79 = arith.constant 0 : index
    %159 = vector.load %arg4[%c1_77, %c0_78, %c0_79] : memref<3x1x64xf32, #tpu.memory_space<vmem>>, vector<1x1x64xf32>
    %160 = vector.shape_cast %159 : vector<1x1x64xf32> to vector<1x64xf32>
    %161 = vector.broadcast %160 : vector<1x64xf32> to vector<48x64xf32>
    %162 = arith.addf %158, %161 : vector<48x64xf32>
    %163 = arith.addf %115, %162 : vector<48x64xf32>
    %c1_80 = arith.constant 1 : index
    %c0_81 = arith.constant 0 : index
    %c0_82 = arith.constant 0 : index
    %164 = vector.load %arg9[%c1_80, %c0_81, %c0_82] : memref<3x1x64xf32, #tpu.memory_space<vmem>>, vector<1x1x64xf32>
    %165 = vector.shape_cast %164 : vector<1x1x64xf32> to vector<1x64xf32>
    %c1_83 = arith.constant 1 : index
    %c0_84 = arith.constant 0 : index
    %c0_85 = arith.constant 0 : index
    %166 = vector.load %arg10[%c1_83, %c0_84, %c0_85] : memref<3x1x64xf32, #tpu.memory_space<vmem>>, vector<1x1x64xf32>
    %167 = vector.shape_cast %166 : vector<1x1x64xf32> to vector<1x64xf32>
    %cst_86 = arith.constant dense<0.000000e+00> : vector<48xf32>
    %168 = vector.multi_reduction <add>, %163, %cst_86 [1] : vector<48x64xf32> to vector<48xf32>
    %169 = vector.shape_cast %168 : vector<48xf32> to vector<48x1xf32>
    %cst_87 = arith.constant 6.400000e+01 : f32
    %170 = vector.broadcast %cst_87 : f32 to vector<48x1xf32>
    %171 = arith.divf %169, %170 : vector<48x1xf32>
    %172 = vector.broadcast %171 : vector<48x1xf32> to vector<48x64xf32>
    %173 = arith.subf %163, %172 : vector<48x64xf32>
    %174 = arith.mulf %173, %173 : vector<48x64xf32>
    %cst_88 = arith.constant dense<0.000000e+00> : vector<48xf32>
    %175 = vector.multi_reduction <add>, %174, %cst_88 [1] : vector<48x64xf32> to vector<48xf32>
    %176 = vector.shape_cast %175 : vector<48xf32> to vector<48x1xf32>
    %cst_89 = arith.constant 6.400000e+01 : f32
    %177 = vector.broadcast %cst_89 : f32 to vector<48x1xf32>
    %178 = arith.divf %176, %177 : vector<48x1xf32>
    %cst_90 = arith.constant 9.99999974E-6 : f32
    %179 = vector.broadcast %cst_90 : f32 to vector<48x1xf32>
    %180 = arith.addf %178, %179 : vector<48x1xf32>
    %181 = math.rsqrt %180 : vector<48x1xf32>
    %182 = vector.broadcast %181 : vector<48x1xf32> to vector<48x64xf32>
    %183 = arith.mulf %173, %182 : vector<48x64xf32>
    %184 = vector.broadcast %165 : vector<1x64xf32> to vector<48x64xf32>
    %185 = arith.mulf %183, %184 : vector<48x64xf32>
    %186 = vector.broadcast %167 : vector<1x64xf32> to vector<48x64xf32>
    %187 = arith.addf %185, %186 : vector<48x64xf32>
    %c1_91 = arith.constant 1 : index
    %c0_92 = arith.constant 0 : index
    %c0_93 = arith.constant 0 : index
    %188 = vector.load %arg5[%c1_91, %c0_92, %c0_93] : memref<3x64x128xf32, #tpu.memory_space<vmem>>, vector<1x64x128xf32>
    %189 = vector.shape_cast %188 : vector<1x64x128xf32> to vector<64x128xf32>
    %cst_94 = arith.constant dense<0.000000e+00> : vector<48x128xf32>
    %190 = tpu.matmul %187, %189, %cst_94 {dimension_numbers = #tpu.dot_dimension_numbers<[1], [0], [0], [1], [0, 0, 1, 1], [], []>} : vector<48x64xf32>, vector<64x128xf32>, vector<48x128xf32> -> vector<48x128xf32>
    %c1_95 = arith.constant 1 : index
    %c0_96 = arith.constant 0 : index
    %c0_97 = arith.constant 0 : index
    %191 = vector.load %arg6[%c1_95, %c0_96, %c0_97] : memref<3x1x128xf32, #tpu.memory_space<vmem>>, vector<1x1x128xf32>
    %192 = vector.shape_cast %191 : vector<1x1x128xf32> to vector<1x128xf32>
    %193 = vector.broadcast %192 : vector<1x128xf32> to vector<48x128xf32>
    %194 = arith.addf %190, %193 : vector<48x128xf32>
    %cst_98 = arith.constant 0.000000e+00 : f32
    %195 = vector.broadcast %cst_98 : f32 to vector<48x128xf32>
    %196 = arith.maximumf %194, %195 : vector<48x128xf32>
    %c1_99 = arith.constant 1 : index
    %c0_100 = arith.constant 0 : index
    %c0_101 = arith.constant 0 : index
    %197 = vector.load %arg7[%c1_99, %c0_100, %c0_101] : memref<3x128x64xf32, #tpu.memory_space<vmem>>, vector<1x128x64xf32>
    %198 = vector.shape_cast %197 : vector<1x128x64xf32> to vector<128x64xf32>
    %cst_102 = arith.constant dense<0.000000e+00> : vector<48x64xf32>
    %199 = tpu.matmul %196, %198, %cst_102 {dimension_numbers = #tpu.dot_dimension_numbers<[1], [0], [0], [1], [0, 0, 1, 1], [], []>} : vector<48x128xf32>, vector<128x64xf32>, vector<48x64xf32> -> vector<48x64xf32>
    %c1_103 = arith.constant 1 : index
    %c0_104 = arith.constant 0 : index
    %c0_105 = arith.constant 0 : index
    %200 = vector.load %arg8[%c1_103, %c0_104, %c0_105] : memref<3x1x64xf32, #tpu.memory_space<vmem>>, vector<1x1x64xf32>
    %201 = vector.shape_cast %200 : vector<1x1x64xf32> to vector<1x64xf32>
    %202 = vector.broadcast %201 : vector<1x64xf32> to vector<48x64xf32>
    %203 = arith.addf %199, %202 : vector<48x64xf32>
    %204 = arith.addf %187, %203 : vector<48x64xf32>
    %c1_106 = arith.constant 1 : index
    %c0_107 = arith.constant 0 : index
    %c0_108 = arith.constant 0 : index
    %205 = vector.load %arg11[%c1_106, %c0_107, %c0_108] : memref<3x1x64xf32, #tpu.memory_space<vmem>>, vector<1x1x64xf32>
    %206 = vector.shape_cast %205 : vector<1x1x64xf32> to vector<1x64xf32>
    %c1_109 = arith.constant 1 : index
    %c0_110 = arith.constant 0 : index
    %c0_111 = arith.constant 0 : index
    %207 = vector.load %arg12[%c1_109, %c0_110, %c0_111] : memref<3x1x64xf32, #tpu.memory_space<vmem>>, vector<1x1x64xf32>
    %208 = vector.shape_cast %207 : vector<1x1x64xf32> to vector<1x64xf32>
    %cst_112 = arith.constant dense<0.000000e+00> : vector<48xf32>
    %209 = vector.multi_reduction <add>, %204, %cst_112 [1] : vector<48x64xf32> to vector<48xf32>
    %210 = vector.shape_cast %209 : vector<48xf32> to vector<48x1xf32>
    %cst_113 = arith.constant 6.400000e+01 : f32
    %211 = vector.broadcast %cst_113 : f32 to vector<48x1xf32>
    %212 = arith.divf %210, %211 : vector<48x1xf32>
    %213 = vector.broadcast %212 : vector<48x1xf32> to vector<48x64xf32>
    %214 = arith.subf %204, %213 : vector<48x64xf32>
    %215 = arith.mulf %214, %214 : vector<48x64xf32>
    %cst_114 = arith.constant dense<0.000000e+00> : vector<48xf32>
    %216 = vector.multi_reduction <add>, %215, %cst_114 [1] : vector<48x64xf32> to vector<48xf32>
    %217 = vector.shape_cast %216 : vector<48xf32> to vector<48x1xf32>
    %cst_115 = arith.constant 6.400000e+01 : f32
    %218 = vector.broadcast %cst_115 : f32 to vector<48x1xf32>
    %219 = arith.divf %217, %218 : vector<48x1xf32>
    %cst_116 = arith.constant 9.99999974E-6 : f32
    %220 = vector.broadcast %cst_116 : f32 to vector<48x1xf32>
    %221 = arith.addf %219, %220 : vector<48x1xf32>
    %222 = math.rsqrt %221 : vector<48x1xf32>
    %223 = vector.broadcast %222 : vector<48x1xf32> to vector<48x64xf32>
    %224 = arith.mulf %214, %223 : vector<48x64xf32>
    %225 = vector.broadcast %206 : vector<1x64xf32> to vector<48x64xf32>
    %226 = arith.mulf %224, %225 : vector<48x64xf32>
    %227 = vector.broadcast %208 : vector<1x64xf32> to vector<48x64xf32>
    %228 = arith.addf %226, %227 : vector<48x64xf32>
    %c2 = arith.constant 2 : index
    %c0_117 = arith.constant 0 : index
    %c0_118 = arith.constant 0 : index
    %229 = vector.load %arg1[%c2, %c0_117, %c0_118] : memref<3x64x192xf32, #tpu.memory_space<vmem>>, vector<1x64x192xf32>
    %230 = vector.shape_cast %229 : vector<1x64x192xf32> to vector<64x192xf32>
    %cst_119 = arith.constant dense<0.000000e+00> : vector<48x192xf32>
    %231 = tpu.matmul %228, %230, %cst_119 {dimension_numbers = #tpu.dot_dimension_numbers<[1], [0], [0], [1], [0, 0, 1, 1], [], []>} : vector<48x64xf32>, vector<64x192xf32>, vector<48x192xf32> -> vector<48x192xf32>
    %c2_120 = arith.constant 2 : index
    %c0_121 = arith.constant 0 : index
    %c0_122 = arith.constant 0 : index
    %232 = vector.load %arg2[%c2_120, %c0_121, %c0_122] : memref<3x1x192xf32, #tpu.memory_space<vmem>>, vector<1x1x192xf32>
    %233 = vector.shape_cast %232 : vector<1x1x192xf32> to vector<1x192xf32>
    %234 = vector.broadcast %233 : vector<1x192xf32> to vector<48x192xf32>
    %235 = arith.addf %231, %234 : vector<48x192xf32>
    %236 = vector.extract_strided_slice %235 {offsets = [0, 0], sizes = [48, 64], strides = [1, 1]} : vector<48x192xf32> to vector<48x64xf32>
    %237 = vector.extract_strided_slice %235 {offsets = [0, 64], sizes = [48, 64], strides = [1, 1]} : vector<48x192xf32> to vector<48x64xf32>
    %238 = vector.extract_strided_slice %235 {offsets = [0, 128], sizes = [48, 64], strides = [1, 1]} : vector<48x192xf32> to vector<48x64xf32>
    %239 = vector.shape_cast %236 : vector<48x64xf32> to vector<3x16x64xf32>
    %240 = vector.shape_cast %237 : vector<48x64xf32> to vector<3x16x64xf32>
    %241 = vector.shape_cast %238 : vector<48x64xf32> to vector<3x16x64xf32>
    %242 = vector.shape_cast %239 : vector<3x16x64xf32> to vector<3x1x16x64xf32>
    %243 = vector.shape_cast %240 : vector<3x16x64xf32> to vector<1x3x16x64xf32>
    %244 = vector.broadcast %242 : vector<3x1x16x64xf32> to vector<3x3x16x64xf32>
    %245 = vector.broadcast %243 : vector<1x3x16x64xf32> to vector<3x3x16x64xf32>
    %246 = arith.mulf %244, %245 : vector<3x3x16x64xf32>
    %247 = vector.shape_cast %246 : vector<3x3x16x64xf32> to vector<144x64xf32>
    %cst_123 = arith.constant dense<0.000000e+00> : vector<144x4xf32>
    %248 = tpu.matmul %247, %1, %cst_123 {dimension_numbers = #tpu.dot_dimension_numbers<[1], [0], [0], [1], [0, 0, 1, 1], [], []>} : vector<144x64xf32>, vector<64x4xf32>, vector<144x4xf32> -> vector<144x4xf32>
    %249 = vector.shape_cast %248 : vector<144x4xf32> to vector<3x3x16x4xf32>
    %cst_124 = arith.constant dense<0xFF800000> : vector<3x16x4xf32>
    %250 = vector.multi_reduction <maximumf>, %249, %cst_124 [1] : vector<3x3x16x4xf32> to vector<3x16x4xf32>
    %251 = vector.shape_cast %250 : vector<3x16x4xf32> to vector<3x1x16x4xf32>
    %252 = vector.broadcast %251 : vector<3x1x16x4xf32> to vector<3x3x16x4xf32>
    %253 = arith.subf %249, %252 : vector<3x3x16x4xf32>
    %254 = math.exp %253 : vector<3x3x16x4xf32>
    %cst_125 = arith.constant dense<0.000000e+00> : vector<3x16x4xf32>
    %255 = vector.multi_reduction <add>, %254, %cst_125 [1] : vector<3x3x16x4xf32> to vector<3x16x4xf32>
    %256 = vector.shape_cast %255 : vector<3x16x4xf32> to vector<3x1x16x4xf32>
    %cst_126 = arith.constant 1.000000e+00 : f32
    %257 = vector.broadcast %cst_126 : f32 to vector<3x1x16x4xf32>
    %258 = arith.divf %257, %256 : vector<3x1x16x4xf32>
    %259 = vector.broadcast %258 : vector<3x1x16x4xf32> to vector<3x3x16x4xf32>
    %260 = arith.mulf %254, %259 : vector<3x3x16x4xf32>
    %261 = vector.shape_cast %260 : vector<3x3x16x4xf32> to vector<144x4xf32>
    %cst_127 = arith.constant dense<0.000000e+00> : vector<144x64xf32>
    %262 = tpu.matmul %261, %2, %cst_127 {dimension_numbers = #tpu.dot_dimension_numbers<[1], [0], [0], [1], [0, 0, 1, 1], [], []>} : vector<144x4xf32>, vector<4x64xf32>, vector<144x64xf32> -> vector<144x64xf32>
    %263 = vector.shape_cast %262 : vector<144x64xf32> to vector<3x3x16x64xf32>
    %264 = vector.shape_cast %241 : vector<3x16x64xf32> to vector<1x3x16x64xf32>
    %265 = vector.broadcast %264 : vector<1x3x16x64xf32> to vector<3x3x16x64xf32>
    %266 = arith.mulf %263, %265 : vector<3x3x16x64xf32>
    %cst_128 = arith.constant dense<0.000000e+00> : vector<3x16x64xf32>
    %267 = vector.multi_reduction <add>, %266, %cst_128 [1] : vector<3x3x16x64xf32> to vector<3x16x64xf32>
    %268 = vector.shape_cast %267 : vector<3x16x64xf32> to vector<48x64xf32>
    %c2_129 = arith.constant 2 : index
    %c0_130 = arith.constant 0 : index
    %c0_131 = arith.constant 0 : index
    %269 = vector.load %arg3[%c2_129, %c0_130, %c0_131] : memref<3x64x64xf32, #tpu.memory_space<vmem>>, vector<1x64x64xf32>
    %270 = vector.shape_cast %269 : vector<1x64x64xf32> to vector<64x64xf32>
    %cst_132 = arith.constant dense<0.000000e+00> : vector<48x64xf32>
    %271 = tpu.matmul %268, %270, %cst_132 {dimension_numbers = #tpu.dot_dimension_numbers<[1], [0], [0], [1], [0, 0, 1, 1], [], []>} : vector<48x64xf32>, vector<64x64xf32>, vector<48x64xf32> -> vector<48x64xf32>
    %c2_133 = arith.constant 2 : index
    %c0_134 = arith.constant 0 : index
    %c0_135 = arith.constant 0 : index
    %272 = vector.load %arg4[%c2_133, %c0_134, %c0_135] : memref<3x1x64xf32, #tpu.memory_space<vmem>>, vector<1x1x64xf32>
    %273 = vector.shape_cast %272 : vector<1x1x64xf32> to vector<1x64xf32>
    %274 = vector.broadcast %273 : vector<1x64xf32> to vector<48x64xf32>
    %275 = arith.addf %271, %274 : vector<48x64xf32>
    %276 = arith.addf %228, %275 : vector<48x64xf32>
    %c2_136 = arith.constant 2 : index
    %c0_137 = arith.constant 0 : index
    %c0_138 = arith.constant 0 : index
    %277 = vector.load %arg9[%c2_136, %c0_137, %c0_138] : memref<3x1x64xf32, #tpu.memory_space<vmem>>, vector<1x1x64xf32>
    %278 = vector.shape_cast %277 : vector<1x1x64xf32> to vector<1x64xf32>
    %c2_139 = arith.constant 2 : index
    %c0_140 = arith.constant 0 : index
    %c0_141 = arith.constant 0 : index
    %279 = vector.load %arg10[%c2_139, %c0_140, %c0_141] : memref<3x1x64xf32, #tpu.memory_space<vmem>>, vector<1x1x64xf32>
    %280 = vector.shape_cast %279 : vector<1x1x64xf32> to vector<1x64xf32>
    %cst_142 = arith.constant dense<0.000000e+00> : vector<48xf32>
    %281 = vector.multi_reduction <add>, %276, %cst_142 [1] : vector<48x64xf32> to vector<48xf32>
    %282 = vector.shape_cast %281 : vector<48xf32> to vector<48x1xf32>
    %cst_143 = arith.constant 6.400000e+01 : f32
    %283 = vector.broadcast %cst_143 : f32 to vector<48x1xf32>
    %284 = arith.divf %282, %283 : vector<48x1xf32>
    %285 = vector.broadcast %284 : vector<48x1xf32> to vector<48x64xf32>
    %286 = arith.subf %276, %285 : vector<48x64xf32>
    %287 = arith.mulf %286, %286 : vector<48x64xf32>
    %cst_144 = arith.constant dense<0.000000e+00> : vector<48xf32>
    %288 = vector.multi_reduction <add>, %287, %cst_144 [1] : vector<48x64xf32> to vector<48xf32>
    %289 = vector.shape_cast %288 : vector<48xf32> to vector<48x1xf32>
    %cst_145 = arith.constant 6.400000e+01 : f32
    %290 = vector.broadcast %cst_145 : f32 to vector<48x1xf32>
    %291 = arith.divf %289, %290 : vector<48x1xf32>
    %cst_146 = arith.constant 9.99999974E-6 : f32
    %292 = vector.broadcast %cst_146 : f32 to vector<48x1xf32>
    %293 = arith.addf %291, %292 : vector<48x1xf32>
    %294 = math.rsqrt %293 : vector<48x1xf32>
    %295 = vector.broadcast %294 : vector<48x1xf32> to vector<48x64xf32>
    %296 = arith.mulf %286, %295 : vector<48x64xf32>
    %297 = vector.broadcast %278 : vector<1x64xf32> to vector<48x64xf32>
    %298 = arith.mulf %296, %297 : vector<48x64xf32>
    %299 = vector.broadcast %280 : vector<1x64xf32> to vector<48x64xf32>
    %300 = arith.addf %298, %299 : vector<48x64xf32>
    %c2_147 = arith.constant 2 : index
    %c0_148 = arith.constant 0 : index
    %c0_149 = arith.constant 0 : index
    %301 = vector.load %arg5[%c2_147, %c0_148, %c0_149] : memref<3x64x128xf32, #tpu.memory_space<vmem>>, vector<1x64x128xf32>
    %302 = vector.shape_cast %301 : vector<1x64x128xf32> to vector<64x128xf32>
    %cst_150 = arith.constant dense<0.000000e+00> : vector<48x128xf32>
    %303 = tpu.matmul %300, %302, %cst_150 {dimension_numbers = #tpu.dot_dimension_numbers<[1], [0], [0], [1], [0, 0, 1, 1], [], []>} : vector<48x64xf32>, vector<64x128xf32>, vector<48x128xf32> -> vector<48x128xf32>
    %c2_151 = arith.constant 2 : index
    %c0_152 = arith.constant 0 : index
    %c0_153 = arith.constant 0 : index
    %304 = vector.load %arg6[%c2_151, %c0_152, %c0_153] : memref<3x1x128xf32, #tpu.memory_space<vmem>>, vector<1x1x128xf32>
    %305 = vector.shape_cast %304 : vector<1x1x128xf32> to vector<1x128xf32>
    %306 = vector.broadcast %305 : vector<1x128xf32> to vector<48x128xf32>
    %307 = arith.addf %303, %306 : vector<48x128xf32>
    %cst_154 = arith.constant 0.000000e+00 : f32
    %308 = vector.broadcast %cst_154 : f32 to vector<48x128xf32>
    %309 = arith.maximumf %307, %308 : vector<48x128xf32>
    %c2_155 = arith.constant 2 : index
    %c0_156 = arith.constant 0 : index
    %c0_157 = arith.constant 0 : index
    %310 = vector.load %arg7[%c2_155, %c0_156, %c0_157] : memref<3x128x64xf32, #tpu.memory_space<vmem>>, vector<1x128x64xf32>
    %311 = vector.shape_cast %310 : vector<1x128x64xf32> to vector<128x64xf32>
    %cst_158 = arith.constant dense<0.000000e+00> : vector<48x64xf32>
    %312 = tpu.matmul %309, %311, %cst_158 {dimension_numbers = #tpu.dot_dimension_numbers<[1], [0], [0], [1], [0, 0, 1, 1], [], []>} : vector<48x128xf32>, vector<128x64xf32>, vector<48x64xf32> -> vector<48x64xf32>
    %c2_159 = arith.constant 2 : index
    %c0_160 = arith.constant 0 : index
    %c0_161 = arith.constant 0 : index
    %313 = vector.load %arg8[%c2_159, %c0_160, %c0_161] : memref<3x1x64xf32, #tpu.memory_space<vmem>>, vector<1x1x64xf32>
    %314 = vector.shape_cast %313 : vector<1x1x64xf32> to vector<1x64xf32>
    %315 = vector.broadcast %314 : vector<1x64xf32> to vector<48x64xf32>
    %316 = arith.addf %312, %315 : vector<48x64xf32>
    %317 = arith.addf %300, %316 : vector<48x64xf32>
    %c2_162 = arith.constant 2 : index
    %c0_163 = arith.constant 0 : index
    %c0_164 = arith.constant 0 : index
    %318 = vector.load %arg11[%c2_162, %c0_163, %c0_164] : memref<3x1x64xf32, #tpu.memory_space<vmem>>, vector<1x1x64xf32>
    %319 = vector.shape_cast %318 : vector<1x1x64xf32> to vector<1x64xf32>
    %c2_165 = arith.constant 2 : index
    %c0_166 = arith.constant 0 : index
    %c0_167 = arith.constant 0 : index
    %320 = vector.load %arg12[%c2_165, %c0_166, %c0_167] : memref<3x1x64xf32, #tpu.memory_space<vmem>>, vector<1x1x64xf32>
    %321 = vector.shape_cast %320 : vector<1x1x64xf32> to vector<1x64xf32>
    %cst_168 = arith.constant dense<0.000000e+00> : vector<48xf32>
    %322 = vector.multi_reduction <add>, %317, %cst_168 [1] : vector<48x64xf32> to vector<48xf32>
    %323 = vector.shape_cast %322 : vector<48xf32> to vector<48x1xf32>
    %cst_169 = arith.constant 6.400000e+01 : f32
    %324 = vector.broadcast %cst_169 : f32 to vector<48x1xf32>
    %325 = arith.divf %323, %324 : vector<48x1xf32>
    %326 = vector.broadcast %325 : vector<48x1xf32> to vector<48x64xf32>
    %327 = arith.subf %317, %326 : vector<48x64xf32>
    %328 = arith.mulf %327, %327 : vector<48x64xf32>
    %cst_170 = arith.constant dense<0.000000e+00> : vector<48xf32>
    %329 = vector.multi_reduction <add>, %328, %cst_170 [1] : vector<48x64xf32> to vector<48xf32>
    %330 = vector.shape_cast %329 : vector<48xf32> to vector<48x1xf32>
    %cst_171 = arith.constant 6.400000e+01 : f32
    %331 = vector.broadcast %cst_171 : f32 to vector<48x1xf32>
    %332 = arith.divf %330, %331 : vector<48x1xf32>
    %cst_172 = arith.constant 9.99999974E-6 : f32
    %333 = vector.broadcast %cst_172 : f32 to vector<48x1xf32>
    %334 = arith.addf %332, %333 : vector<48x1xf32>
    %335 = math.rsqrt %334 : vector<48x1xf32>
    %336 = vector.broadcast %335 : vector<48x1xf32> to vector<48x64xf32>
    %337 = arith.mulf %327, %336 : vector<48x64xf32>
    %338 = vector.broadcast %319 : vector<1x64xf32> to vector<48x64xf32>
    %339 = arith.mulf %337, %338 : vector<48x64xf32>
    %340 = vector.broadcast %321 : vector<1x64xf32> to vector<48x64xf32>
    %341 = arith.addf %339, %340 : vector<48x64xf32>
    %c0_173 = arith.constant 0 : index
    %c0_174 = arith.constant 0 : index
    %342 = vector.load %arg15[%c0_173, %c0_174] : memref<48x64xf32, #tpu.memory_space<vmem>>, vector<48x64xf32>
    tpu.vector_store %arg15[%c0_173, %c0_174], %341 {strides = array<i32>} : memref<48x64xf32, #tpu.memory_space<vmem>>, vector<48x64xf32>,
    return
  }
}

</mosaic_0001>

<llo_original>
// kernel: spatial_transformer_encoder_p7.1
$region0: #{spatial_transformer_encoder_p7.1}
  #allocation0 [shape = 'u32[]', space=smem, size = 0x4, offset = 0x4, fixed_abs, tag = 'smem constant byte address 0x4 - core index']
  #allocation1 [shape = 'u32[144,128]{1,0:T(1,128)}', space=vmem, size = 0x12000, scoped, tag = 'internal scratch']
  %s0 = inlined_call_operand.vmem [shape: f32[48,64], index: 0, kind: input, shape index: {}]
  %s1 = inlined_call_operand.vmem [shape: f32[3,64,192], index: 1, kind: input, shape index: {}]
  %s2 = inlined_call_operand.vmem [shape: f32[3,1,192], index: 2, kind: input, shape index: {}]
  %s3 = inlined_call_operand.vmem [shape: f32[3,64,64], index: 3, kind: input, shape index: {}]
  %s4 = inlined_call_operand.vmem [shape: f32[3,1,64], index: 4, kind: input, shape index: {}]
  %s5 = inlined_call_operand.vmem [shape: f32[3,64,128], index: 5, kind: input, shape index: {}]
  %s6 = inlined_call_operand.vmem [shape: f32[3,1,128], index: 6, kind: input, shape index: {}]
  %s7 = inlined_call_operand.vmem [shape: f32[3,128,64], index: 7, kind: input, shape index: {}]
  %s8 = inlined_call_operand.vmem [shape: f32[3,1,64], index: 8, kind: input, shape index: {}]
  %s9 = inlined_call_operand.vmem [shape: f32[3,1,64], index: 9, kind: input, shape index: {}]
  %s10 = inlined_call_operand.vmem [shape: f32[3,1,64], index: 10, kind: input, shape index: {}]
  %s11 = inlined_call_operand.vmem [shape: f32[3,1,64], index: 11, kind: input, shape index: {}]
  %s12 = inlined_call_operand.vmem [shape: f32[3,1,64], index: 12, kind: input, shape index: {}]
  %s13 = inlined_call_operand.vmem [shape: f32[64,4], index: 13, kind: input, shape index: {}]
  %s14 = inlined_call_operand.vmem [shape: f32[4,64], index: 14, kind: input, shape index: {}]
  %s15 = inlined_call_operand.vmem [shape: f32[48,64], index: 15, kind: output, shape index: {}]
  %s16 = sld [smem:[#allocation0]]
  $region70: #{spatial_transformer_encoder_p7.1} parent=0
    _
  %s18 = ssub.s32 1, %s16
  %s19 = scalar_select 0, %s18, %s16
  // Predicated region
  $region2: #{spatial_transformer_encoder_p7.1} parent=0 // pred_check
    _
  $region3: #{spatial_transformer_encoder_p7.1} parent=0 // pred_check_branch
    %21 = sbr.rel (0) target = $region5
  $region4: #{spatial_transformer_encoder_p7.1} parent=0 // pred_region
    _
  $region5: #{spatial_transformer_encoder_p7.1} parent=0 // pred_fallthru
    _
  // Predicated region
  $region6: #{spatial_transformer_encoder_p7.1} parent=0 // pred_check
    _
  $region7: #{spatial_transformer_encoder_p7.1} parent=0 // pred_check_branch
    %23 = sbr.rel (0) target = $region9
  $region8: #{spatial_transformer_encoder_p7.1} parent=0 // pred_region
    _
  $region9: #{spatial_transformer_encoder_p7.1} parent=0 // pred_fallthru
    _
  // Predicated region
  $region10: #{spatial_transformer_encoder_p7.1} parent=0 // pred_check
    _
  $region11: #{spatial_transformer_encoder_p7.1} parent=0 // pred_check_branch
    %25 = sbr.rel (0) target = $region13
  $region12: #{spatial_transformer_encoder_p7.1} parent=0 // pred_region
    _
  $region13: #{spatial_transformer_encoder_p7.1} parent=0 // pred_fallthru
    _
  // Predicated region
  $region14: #{spatial_transformer_encoder_p7.1} parent=0 // pred_check
    _
  $region15: #{spatial_transformer_encoder_p7.1} parent=0 // pred_check_branch
    %27 = sbr.rel (0) target = $region17
  $region16: #{spatial_transformer_encoder_p7.1} parent=0 // pred_region
    _
  $region17: #{spatial_transformer_encoder_p7.1} parent=0 // pred_fallthru
    _
  // Predicated region
  $region18: #{spatial_transformer_encoder_p7.1} parent=0 // pred_check
    _
  $region19: #{spatial_transformer_encoder_p7.1} parent=0 // pred_check_branch
    %29 = sbr.rel (0) target = $region21
  $region20: #{spatial_transformer_encoder_p7.1} parent=0 // pred_region
    _
  $region21: #{spatial_transformer_encoder_p7.1} parent=0 // pred_fallthru
    _
  // Predicated region
  $region22: #{spatial_transformer_encoder_p7.1} parent=0 // pred_check
    _
  $region23: #{spatial_transformer_encoder_p7.1} parent=0 // pred_check_branch
    %31 = sbr.rel (0) target = $region25
  $region24: #{spatial_transformer_encoder_p7.1} parent=0 // pred_region
    _
  $region25: #{spatial_transformer_encoder_p7.1} parent=0 // pred_fallthru
    _
  // Predicated region
  $region26: #{spatial_transformer_encoder_p7.1} parent=0 // pred_check
    _
  $region27: #{spatial_transformer_encoder_p7.1} parent=0 // pred_check_branch
    %33 = sbr.rel (0) target = $region29
  $region28: #{spatial_transformer_encoder_p7.1} parent=0 // pred_region
    _
  $region29: #{spatial_transformer_encoder_p7.1} parent=0 // pred_fallthru
    _
  // Predicated region
  $region30: #{spatial_transformer_encoder_p7.1} parent=0 // pred_check
    _
  $region31: #{spatial_transformer_encoder_p7.1} parent=0 // pred_check_branch
    %35 = sbr.rel (0) target = $region33
  $region32: #{spatial_transformer_encoder_p7.1} parent=0 // pred_region
    _
  $region33: #{spatial_transformer_encoder_p7.1} parent=0 // pred_fallthru
    _
  // Predicated region
  $region34: #{spatial_transformer_encoder_p7.1} parent=0 // pred_check
    _
  $region35: #{spatial_transformer_encoder_p7.1} parent=0 // pred_check_branch
    %37 = sbr.rel (0) target = $region37
  $region36: #{spatial_transformer_encoder_p7.1} parent=0 // pred_region
    _
  $region37: #{spatial_transformer_encoder_p7.1} parent=0 // pred_fallthru
    _
  // Predicated region
  $region38: #{spatial_transformer_encoder_p7.1} parent=0 // pred_check
    _
  $region39: #{spatial_transformer_encoder_p7.1} parent=0 // pred_check_branch
    %39 = sbr.rel (0) target = $region41
  $region40: #{spatial_transformer_encoder_p7.1} parent=0 // pred_region
    _
  $region41: #{spatial_transformer_encoder_p7.1} parent=0 // pred_fallthru
    _
  // Predicated region
  $region42: #{spatial_transformer_encoder_p7.1} parent=0 // pred_check
    _
  $region43: #{spatial_transformer_encoder_p7.1} parent=0 // pred_check_branch
    %41 = sbr.rel (0) target = $region45
  $region44: #{spatial_transformer_encoder_p7.1} parent=0 // pred_region
    _
  $region45: #{spatial_transformer_encoder_p7.1} parent=0 // pred_fallthru
    _
  // Predicated region
  $region46: #{spatial_transformer_encoder_p7.1} parent=0 // pred_check
    _
  $region47: #{spatial_transformer_encoder_p7.1} parent=0 // pred_check_branch
    %43 = sbr.rel (0) target = $region49
  $region48: #{spatial_transformer_encoder_p7.1} parent=0 // pred_region
    _
  $region49: #{spatial_transformer_encoder_p7.1} parent=0 // pred_fallthru
    _
  // Predicated region
  $region50: #{spatial_transformer_encoder_p7.1} parent=0 // pred_check
    _
  $region51: #{spatial_transformer_encoder_p7.1} parent=0 // pred_check_branch
    %45 = sbr.rel (0) target = $region53
  $region52: #{spatial_transformer_encoder_p7.1} parent=0 // pred_region
    _
  $region53: #{spatial_transformer_encoder_p7.1} parent=0 // pred_fallthru
    _
  // Predicated region
  $region54: #{spatial_transformer_encoder_p7.1} parent=0 // pred_check
    _
  $region55: #{spatial_transformer_encoder_p7.1} parent=0 // pred_check_branch
    %47 = sbr.rel (0) target = $region57
  $region56: #{spatial_transformer_encoder_p7.1} parent=0 // pred_region
    _
  $region57: #{spatial_transformer_encoder_p7.1} parent=0 // pred_fallthru
    _
  // Predicated region
  $region58: #{spatial_transformer_encoder_p7.1} parent=0 // pred_check
    _
  $region59: #{spatial_transformer_encoder_p7.1} parent=0 // pred_check_branch
    %49 = sbr.rel (0) target = $region61
  $region60: #{spatial_transformer_encoder_p7.1} parent=0 // pred_region
    _
  $region61: #{spatial_transformer_encoder_p7.1} parent=0 // pred_fallthru
    _
  %v50 = vld [vmem:[%s0] sm:$0xff]
  %v51 = vld [vmem:[%s0 + $0x8] sm:$0xff]
  %v52 = vld [vmem:[%s0 + $0x10] sm:$0xff]
  %v53 = vld [vmem:[%s0 + $0x18] sm:$0xff]
  %v54 = vld [vmem:[%s0 + $0x20] sm:$0xff]
  %v55 = vld [vmem:[%s0 + $0x28] sm:$0xff]
  %v56 = vld [vmem:[%s13] sm:$0xff]
  %v57 = vld [vmem:[%s13 + $0x8] sm:$0xff]
  %v58 = vld [vmem:[%s13 + $0x10] sm:$0xff]
  %v59 = vld [vmem:[%s13 + $0x18] sm:$0xff]
  %v60 = vld [vmem:[%s13 + $0x20] sm:$0xff]
  %v61 = vld [vmem:[%s13 + $0x28] sm:$0xff]
  %v62 = vld [vmem:[%s13 + $0x30] sm:$0xff]
  %v63 = vld [vmem:[%s13 + $0x38] sm:$0xff]
  %v64 = vld [vmem:[%s14] sm:$0xf]
  %v65 = vld [vmem:[%s1] sm:$0xff]
  %v66 = vld [vmem:[%s1 + $0x8] sm:$0xff]
  %v67 = vld [vmem:[%s1 + $0x10] sm:$0xff]
  %v68 = vld [vmem:[%s1 + $0x18] sm:$0xff]
  %v69 = vld [vmem:[%s1 + $0x20] sm:$0xff]
  %v70 = vld [vmem:[%s1 + $0x28] sm:$0xff]
  %v71 = vld [vmem:[%s1 + $0x30] sm:$0xff]
  %v72 = vld [vmem:[%s1 + $0x38] sm:$0xff]
  %v73 = vld [vmem:[%s1 + $0x40] sm:$0xff]
  %v74 = vld [vmem:[%s1 + $0x48] sm:$0xff]
  %v75 = vld [vmem:[%s1 + $0x50] sm:$0xff]
  %v76 = vld [vmem:[%s1 + $0x58] sm:$0xff]
  %v77 = vld [vmem:[%s1 + $0x60] sm:$0xff]
  %v78 = vld [vmem:[%s1 + $0x68] sm:$0xff]
  %v79 = vld [vmem:[%s1 + $0x70] sm:$0xff]
  %v80 = vld [vmem:[%s1 + $0x78] sm:$0xff]
  %v81 = vld [vmem:[%s2] sm:$0x3]
  %v83 = vlaneseq
  %v84 = vshrl.u32 %v83, 7
  %v85 = vsub.s32 0, %v84
  %v86 = vrot.slane %v81, %v85
  %v87 = vlaneseq
  %v88 = vshrl.u32 %v87, 7
  %v89 = vsub.s32 1, %v88
  %v90 = vrot.slane %v81, %v89
  %vm93 = vcmask 523264
  %v95 = vsel %vm93, %v50, 0
  %v98 = vsel %vm93, %v51, 0
  %v101 = vsel %vm93, %v52, 0
  %v104 = vsel %vm93, %v53, 0
  %v107 = vsel %vm93, %v54, 0
  %v110 = vsel %vm93, %v55, 0
  %112 = vmatprep.subr.mxu0 0.0
  %113 = vmatpush1.msra.mxu0 0.0
  %114 = vmatprep.subr.mxu0 0.0
  %115 = vmatpush1.msra.mxu0 0.0
  %116 = vmatprep.subr.mxu0 0.0
  %117 = vmatpush1.msra.mxu0 0.0
  %118 = vmatprep.subr.mxu0 0.0
  %119 = vmatpush1.msra.mxu0 0.0
  %120 = vmatprep.subr.mxu0 0.0
  %121 = vmatpush1.msra.mxu0 0.0
  %122 = vmatprep.subr.mxu0 0.0
  %123 = vmatpush1.msra.mxu0 0.0
  %124 = vmatprep.subr.mxu0 0.0
  %125 = vmatpush1.msra.mxu0 0.0
  %126 = vmatprep.subr.mxu0 0.0
  %127 = vmatpush1.msra.mxu0 0.0
  %128 = vmatprep.subr.mxu0 %v80
  %129 = vmatpush1.msra.mxu0 %v79
  %130 = vmatprep.subr.mxu0 %v78
  %131 = vmatpush1.msra.mxu0 %v77
  %132 = vmatprep.subr.mxu0 %v76
  %133 = vmatpush1.msra.mxu0 %v75
  %134 = vmatprep.subr.mxu0 %v74
  %135 = vmatpush1.msra.mxu0 %v73
  %136 = vmatprep.subr.mxu0 %v72
  %137 = vmatpush1.msra.mxu0 %v71
  %138 = vmatprep.subr.mxu0 %v70
  %139 = vmatpush1.msra.mxu0 %v69
  %140 = vmatprep.subr.mxu0 %v68
  %141 = vmatpush1.msra.mxu0 %v67
  %142 = vmatprep.subr.mxu0 %v66
  %143 = vmatpush1.msra.mxu0 %v65
  %144 = vmatprep.subr.mxu0 0.0
  %145 = vmatpush2.msra.mxu0 0.0
  %146 = vmatprep.subr.mxu0 0.0
  %147 = vmatpush2.msra.mxu0 0.0
  %148 = vmatprep.subr.mxu0 0.0
  %149 = vmatpush2.msra.mxu0 0.0
  %150 = vmatprep.subr.mxu0 0.0
  %151 = vmatpush2.msra.mxu0 0.0
  %152 = vmatprep.subr.mxu0 0.0
  %153 = vmatpush2.msra.mxu0 0.0
  %154 = vmatprep.subr.mxu0 0.0
  %155 = vmatpush2.msra.mxu0 0.0
  %156 = vmatprep.subr.mxu0 0.0
  %157 = vmatpush2.msra.mxu0 0.0
  %158 = vmatprep.subr.mxu0 0.0
  %159 = vmatpush2.msra.mxu0 0.0
  %160 = vmatprep.subr.mxu0 0.0
  %161 = vmatpush2.msra.mxu0 0.0
  %162 = vmatprep.subr.mxu0 0.0
  %163 = vmatpush2.msra.mxu0 0.0
  %164 = vmatprep.subr.mxu0 0.0
  %165 = vmatpush2.msra.mxu0 0.0
  %166 = vmatprep.subr.mxu0 0.0
  %167 = vmatpush2.msra.mxu0 0.0
  %168 = vmatprep.subr.mxu0 0.0
  %169 = vmatpush2.msra.mxu0 0.0
  %170 = vmatprep.subr.mxu0 0.0
  %171 = vmatpush2.msra.mxu0 0.0
  %172 = vmatprep.subr.mxu0 0.0
  %173 = vmatpush2.msra.mxu0 0.0
  %174 = vmatprep.subr.mxu0 0.0
  %175 = vmatpush2.msra.mxu0 0.0
  %176 = vmatprep.mubr.f32.mxu0 0.0
  %177 = vmatmul.mubr.f32.gmra.mxu0 %v95
  %v178 = vpop.f32.mrf.mxu0
  %v179 = vadd.f32 %v86, %v178
  %v180 = vpop.f32.mrf.mxu0
  %v181 = vadd.f32 %v90, %v180
  %182 = vmatprep.mubr.f32.mxu0 0.0
  %183 = vmatmul.mubr.f32.gmra.mxu0 %v98
  %v184 = vpop.f32.mrf.mxu0
  %v185 = vadd.f32 %v86, %v184
  %v186 = vpop.f32.mrf.mxu0
  %v187 = vadd.f32 %v90, %v186
  %188 = vmatprep.mubr.f32.mxu0 0.0
  %189 = vmatmul.mubr.f32.gmra.mxu0 %v101
  %v190 = vpop.f32.mrf.mxu0
  %v191 = vadd.f32 %v86, %v190
  %v192 = vpop.f32.mrf.mxu0
  %v193 = vadd.f32 %v90, %v192
  %194 = vmatprep.mubr.f32.mxu0 0.0
  %195 = vmatmul.mubr.f32.gmra.mxu0 %v104
  %v196 = vpop.f32.mrf.mxu0
  %v197 = vadd.f32 %v86, %v196
  %v198 = vpop.f32.mrf.mxu0
  %v199 = vadd.f32 %v90, %v198
  %200 = vmatprep.mubr.f32.mxu0 0.0
  %201 = vmatmul.mubr.f32.gmra.mxu0 %v107
  %v202 = vpop.f32.mrf.mxu0
  %v203 = vadd.f32 %v86, %v202
  %v204 = vpop.f32.mrf.mxu0
  %v205 = vadd.f32 %v90, %v204
  %206 = vmatprep.mubr.f32.mxu0 0.0
  %207 = vmatmul.mubr.f32.gmra.mxu0 %v110
  %v208 = vpop.f32.mrf.mxu0
  %v209 = vadd.f32 %v86, %v208
  %v210 = vpop.f32.mrf.mxu0
  %v211 = vadd.f32 %v90, %v210
  %212 = vdwg.mxu0
  %219 = vrot.lane.b32.xlu0 %v179, 64
  %v220 = vpop.permute.xlu0 %219
  %221 = vrot.lane.b32.xlu0 %v185, 64
  %v222 = vpop.permute.xlu0 %221
  %223 = vrot.lane.b32.xlu0 %v191, 64
  %v224 = vpop.permute.xlu0 %223
  %225 = vrot.lane.b32.xlu0 %v197, 64
  %v226 = vpop.permute.xlu0 %225
  %227 = vrot.lane.b32.xlu0 %v203, 64
  %v228 = vpop.permute.xlu0 %227
  %229 = vrot.lane.b32.xlu0 %v209, 64
  %v230 = vpop.permute.xlu0 %229
  %v237 = vmul.f32 %v179, %v220
  %v238 = vmul.f32 %v185, %v222
  %v239 = vmul.f32 %v179, %v224
  %v240 = vmul.f32 %v185, %v226
  %v241 = vmul.f32 %v179, %v228
  %v242 = vmul.f32 %v185, %v230
  %v243 = vmul.f32 %v191, %v220
  %v244 = vmul.f32 %v197, %v222
  %v245 = vmul.f32 %v191, %v224
  %v246 = vmul.f32 %v197, %v226
  %v247 = vmul.f32 %v191, %v228
  %v248 = vmul.f32 %v197, %v230
  %v249 = vmul.f32 %v203, %v220
  %v250 = vmul.f32 %v209, %v222
  %v251 = vmul.f32 %v203, %v224
  %v252 = vmul.f32 %v209, %v226
  %v253 = vmul.f32 %v203, %v228
  %v254 = vmul.f32 %v209, %v230
  %v256 = vsel %vm93, %v237, 0
  %v259 = vsel %vm93, %v238, 0
  %v262 = vsel %vm93, %v239, 0
  %v265 = vsel %vm93, %v240, 0
  %v268 = vsel %vm93, %v241, 0
  %v271 = vsel %vm93, %v242, 0
  %v274 = vsel %vm93, %v243, 0
  %v277 = vsel %vm93, %v244, 0
  %v280 = vsel %vm93, %v245, 0
  %v283 = vsel %vm93, %v246, 0
  %v286 = vsel %vm93, %v247, 0
  %v289 = vsel %vm93, %v248, 0
  %v292 = vsel %vm93, %v249, 0
  %v295 = vsel %vm93, %v250, 0
  %v298 = vsel %vm93, %v251, 0
  %v301 = vsel %vm93, %v252, 0
  %v304 = vsel %vm93, %v253, 0
  %v307 = vsel %vm93, %v254, 0
  %309 = vmatprep.subr.mxu0 0.0
  %310 = vmatpush1.msra.mxu0 0.0
  %311 = vmatprep.subr.mxu0 0.0
  %312 = vmatpush1.msra.mxu0 0.0
  %313 = vmatprep.subr.mxu0 0.0
  %314 = vmatpush1.msra.mxu0 0.0
  %315 = vmatprep.subr.mxu0 0.0
  %316 = vmatpush1.msra.mxu0 0.0
  %317 = vmatprep.subr.mxu0 0.0
  %318 = vmatpush1.msra.mxu0 0.0
  %319 = vmatprep.subr.mxu0 0.0
  %320 = vmatpush1.msra.mxu0 0.0
  %321 = vmatprep.subr.mxu0 0.0
  %322 = vmatpush1.msra.mxu0 0.0
  %323 = vmatprep.subr.mxu0 0.0
  %324 = vmatpush1.msra.mxu0 0.0
  %325 = vmatprep.subr.mxu0 0.0
  %326 = vmatpush1.msra.mxu0 %v63
  %327 = vmatprep.subr.mxu0 0.0
  %328 = vmatpush1.msra.mxu0 %v62
  %329 = vmatprep.subr.mxu0 0.0
  %330 = vmatpush1.msra.mxu0 %v61
  %331 = vmatprep.subr.mxu0 0.0
  %332 = vmatpush1.msra.mxu0 %v60
  %333 = vmatprep.subr.mxu0 0.0
  %334 = vmatpush1.msra.mxu0 %v59
  %335 = vmatprep.subr.mxu0 0.0
  %336 = vmatpush1.msra.mxu0 %v58
  %337 = vmatprep.subr.mxu0 0.0
  %338 = vmatpush1.msra.mxu0 %v57
  %339 = vmatprep.subr.mxu0 0.0
  %340 = vmatpush1.msra.mxu0 %v56
  %341 = vmatprep.subr.mxu0 0.0
  %342 = vmatpush2.msra.mxu0 0.0
  %343 = vmatprep.subr.mxu0 0.0
  %344 = vmatpush2.msra.mxu0 0.0
  %345 = vmatprep.subr.mxu0 0.0
  %346 = vmatpush2.msra.mxu0 0.0
  %347 = vmatprep.subr.mxu0 0.0
  %348 = vmatpush2.msra.mxu0 0.0
  %349 = vmatprep.subr.mxu0 0.0
  %350 = vmatpush2.msra.mxu0 0.0
  %351 = vmatprep.subr.mxu0 0.0
  %352 = vmatpush2.msra.mxu0 0.0
  %353 = vmatprep.subr.mxu0 0.0
  %354 = vmatpush2.msra.mxu0 0.0
  %355 = vmatprep.subr.mxu0 0.0
  %356 = vmatpush2.msra.mxu0 0.0
  %357 = vmatprep.subr.mxu0 0.0
  %358 = vmatpush2.msra.mxu0 0.0
  %359 = vmatprep.subr.mxu0 0.0
  %360 = vmatpush2.msra.mxu0 0.0
  %361 = vmatprep.subr.mxu0 0.0
  %362 = vmatpush2.msra.mxu0 0.0
  %363 = vmatprep.subr.mxu0 0.0
  %364 = vmatpush2.msra.mxu0 0.0
  %365 = vmatprep.subr.mxu0 0.0
  %366 = vmatpush2.msra.mxu0 0.0
  %367 = vmatprep.subr.mxu0 0.0
  %368 = vmatpush2.msra.mxu0 0.0
  %369 = vmatprep.subr.mxu0 0.0
  %370 = vmatpush2.msra.mxu0 0.0
  %371 = vmatprep.subr.mxu0 0.0
  %372 = vmatpush2.msra.mxu0 0.0
  %373 = vmatprep.mubr.f32.mxu0 0.0
  %374 = vmatmul.mubr.f32.gmra.mxu0 %v256
  %v375 = vpop.f32.mrf.mxu0
  %v376 = vadd.f32 0.0, %v375
  %v377 = vpop.f32.mrf.mxu0
  %378 = vmatprep.mubr.f32.mxu0 0.0
  %379 = vmatmul.mubr.f32.gmra.mxu0 %v259
  %v380 = vpop.f32.mrf.mxu0
  %v381 = vadd.f32 0.0, %v380
  %v382 = vpop.f32.mrf.mxu0
  %383 = vmatprep.mubr.f32.mxu0 0.0
  %384 = vmatmul.mubr.f32.gmra.mxu0 %v262
  %v385 = vpop.f32.mrf.mxu0
  %v386 = vadd.f32 0.0, %v385
  %v387 = vpop.f32.mrf.mxu0
  %388 = vmatprep.mubr.f32.mxu0 0.0
  %389 = vmatmul.mubr.f32.gmra.mxu0 %v265
  %v390 = vpop.f32.mrf.mxu0
  %v391 = vadd.f32 0.0, %v390
  %v392 = vpop.f32.mrf.mxu0
  %393 = vmatprep.mubr.f32.mxu0 0.0
  %394 = vmatmul.mubr.f32.gmra.mxu0 %v268
  %v395 = vpop.f32.mrf.mxu0
  %v396 = vadd.f32 0.0, %v395
  %v397 = vpop.f32.mrf.mxu0
  %398 = vmatprep.mubr.f32.mxu0 0.0
  %399 = vmatmul.mubr.f32.gmra.mxu0 %v271
  %v400 = vpop.f32.mrf.mxu0
  %v401 = vadd.f32 0.0, %v400
  %v402 = vpop.f32.mrf.mxu0
  %403 = vmatprep.mubr.f32.mxu0 0.0
  %404 = vmatmul.mubr.f32.gmra.mxu0 %v274
  %v405 = vpop.f32.mrf.mxu0
  %v406 = vadd.f32 0.0, %v405
  %v407 = vpop.f32.mrf.mxu0
  %408 = vmatprep.mubr.f32.mxu0 0.0
  %409 = vmatmul.mubr.f32.gmra.mxu0 %v277
  %v410 = vpop.f32.mrf.mxu0
  %v411 = vadd.f32 0.0, %v410
  %v412 = vpop.f32.mrf.mxu0
  %413 = vmatprep.mubr.f32.mxu0 0.0
  %414 = vmatmul.mubr.f32.gmra.mxu0 %v280
  %v415 = vpop.f32.mrf.mxu0
  %v416 = vadd.f32 0.0, %v415
  %v417 = vpop.f32.mrf.mxu0
  %418 = vmatprep.mubr.f32.mxu0 0.0
  %419 = vmatmul.mubr.f32.gmra.mxu0 %v283
  %v420 = vpop.f32.mrf.mxu0
  %v421 = vadd.f32 0.0, %v420
  %v422 = vpop.f32.mrf.mxu0
  %423 = vmatprep.mubr.f32.mxu0 0.0
  %424 = vmatmul.mubr.f32.gmra.mxu0 %v286
  %v425 = vpop.f32.mrf.mxu0
  %v426 = vadd.f32 0.0, %v425
  %v427 = vpop.f32.mrf.mxu0
  %428 = vmatprep.mubr.f32.mxu0 0.0
  %429 = vmatmul.mubr.f32.gmra.mxu0 %v289
  %v430 = vpop.f32.mrf.mxu0
  %v431 = vadd.f32 0.0, %v430
  %v432 = vpop.f32.mrf.mxu0
  %433 = vmatprep.mubr.f32.mxu0 0.0
  %434 = vmatmul.mubr.f32.gmra.mxu0 %v292
  %v435 = vpop.f32.mrf.mxu0
  %v436 = vadd.f32 0.0, %v435
  %v437 = vpop.f32.mrf.mxu0
  %438 = vmatprep.mubr.f32.mxu0 0.0
  %439 = vmatmul.mubr.f32.gmra.mxu0 %v295
  %v440 = vpop.f32.mrf.mxu0
  %v441 = vadd.f32 0.0, %v440
  %v442 = vpop.f32.mrf.mxu0
  %443 = vmatprep.mubr.f32.mxu0 0.0
  %444 = vmatmul.mubr.f32.gmra.mxu0 %v298
  %v445 = vpop.f32.mrf.mxu0
  %v446 = vadd.f32 0.0, %v445
  %v447 = vpop.f32.mrf.mxu0
  %448 = vmatprep.mubr.f32.mxu0 0.0
  %449 = vmatmul.mubr.f32.gmra.mxu0 %v301
  %v450 = vpop.f32.mrf.mxu0
  %v451 = vadd.f32 0.0, %v450
  %v452 = vpop.f32.mrf.mxu0
  %453 = vmatprep.mubr.f32.mxu0 0.0
  %454 = vmatmul.mubr.f32.gmra.mxu0 %v304
  %v455 = vpop.f32.mrf.mxu0
  %v456 = vadd.f32 0.0, %v455
  %v457 = vpop.f32.mrf.mxu0
  %458 = vmatprep.mubr.f32.mxu0 0.0
  %459 = vmatmul.mubr.f32.gmra.mxu0 %v307
  %v460 = vpop.f32.mrf.mxu0
  %v461 = vadd.f32 0.0, %v460
  %v462 = vpop.f32.mrf.mxu0
  %463 = vdwg.mxu0
  %vm464 = vcmask 31744
  %v465 = vsel %vm464, %v376, -inf
  %v466 = vsel %vm464, %v386, -inf
  %v467 = vmax.f32 %v465, %v466
  %v468 = vsel %vm464, %v396, -inf
  %v469 = vmax.f32 %v467, %v468
  %v470 = vsel %vm464, %v381, -inf
  %v471 = vsel %vm464, %v391, -inf
  %v472 = vmax.f32 %v470, %v471
  %v473 = vsel %vm464, %v401, -inf
  %v474 = vmax.f32 %v472, %v473
  %v475 = vsel %vm464, %v406, -inf
  %v476 = vsel %vm464, %v416, -inf
  %v477 = vmax.f32 %v475, %v476
  %v478 = vsel %vm464, %v426, -inf
  %v479 = vmax.f32 %v477, %v478
  %v480 = vsel %vm464, %v411, -inf
  %v481 = vsel %vm464, %v421, -inf
  %v482 = vmax.f32 %v480, %v481
  %v483 = vsel %vm464, %v431, -inf
  %v484 = vmax.f32 %v482, %v483
  %v485 = vsel %vm464, %v436, -inf
  %v486 = vsel %vm464, %v446, -inf
  %v487 = vmax.f32 %v485, %v486
  %v488 = vsel %vm464, %v456, -inf
  %v489 = vmax.f32 %v487, %v488
  %v490 = vsel %vm464, %v441, -inf
  %v491 = vsel %vm464, %v451, -inf
  %v492 = vmax.f32 %v490, %v491
  %v493 = vsel %vm464, %v461, -inf
  %v494 = vmax.f32 %v492, %v493
  %v495 = vsub.f32 %v376, %v469
  %v496 = vsub.f32 %v381, %v474
  %v497 = vsub.f32 %v386, %v469
  %v498 = vsub.f32 %v391, %v474
  %v499 = vsub.f32 %v396, %v469
  %v500 = vsub.f32 %v401, %v474
  %v501 = vsub.f32 %v406, %v479
  %v502 = vsub.f32 %v411, %v484
  %v503 = vsub.f32 %v416, %v479
  %v504 = vsub.f32 %v421, %v484
  %v505 = vsub.f32 %v426, %v479
  %v506 = vsub.f32 %v431, %v484
  %v507 = vsub.f32 %v436, %v489
  %v508 = vsub.f32 %v441, %v494
  %v509 = vsub.f32 %v446, %v489
  %v510 = vsub.f32 %v451, %v494
  %v511 = vsub.f32 %v456, %v489
  %v512 = vsub.f32 %v461, %v494
  %v513 = vmul.f32 %v495, 1.442695
  %v514 = vpow.pop %v513
  %v515 = vmul.f32 %v496, 1.442695
  %v516 = vpow.pop %v515
  %v517 = vmul.f32 %v497, 1.442695
  %v518 = vpow.pop %v517
  %v519 = vmul.f32 %v498, 1.442695
  %v520 = vpow.pop %v519
  %v521 = vmul.f32 %v499, 1.442695
  %v522 = vpow.pop %v521
  %v523 = vmul.f32 %v500, 1.442695
  %v524 = vpow.pop %v523
  %v525 = vmul.f32 %v501, 1.442695
  %v526 = vpow.pop %v525
  %v527 = vmul.f32 %v502, 1.442695
  %v528 = vpow.pop %v527
  %v529 = vmul.f32 %v503, 1.442695
  %v530 = vpow.pop %v529
  %v531 = vmul.f32 %v504, 1.442695
  %v532 = vpow.pop %v531
  %v533 = vmul.f32 %v505, 1.442695
  %v534 = vpow.pop %v533
  %v535 = vmul.f32 %v506, 1.442695
  %v536 = vpow.pop %v535
  %v537 = vmul.f32 %v507, 1.442695
  %v538 = vpow.pop %v537
  %v539 = vmul.f32 %v508, 1.442695
  %v540 = vpow.pop %v539
  %v541 = vmul.f32 %v509, 1.442695
  %v542 = vpow.pop %v541
  %v543 = vmul.f32 %v510, 1.442695
  %v544 = vpow.pop %v543
  %v545 = vmul.f32 %v511, 1.442695
  %v546 = vpow.pop %v545
  %v547 = vmul.f32 %v512, 1.442695
  %v548 = vpow.pop %v547
  %v549 = vsel %vm464, %v514, 0.0
  %v550 = vsel %vm464, %v518, 0.0
  %v551 = vadd.f32 %v549, %v550
  %v552 = vsel %vm464, %v522, 0.0
  %v553 = vadd.f32 %v551, %v552
  %v554 = vsel %vm464, %v516, 0.0
  %v555 = vsel %vm464, %v520, 0.0
  %v556 = vadd.f32 %v554, %v555
  %v557 = vsel %vm464, %v524, 0.0
  %v558 = vadd.f32 %v556, %v557
  %v559 = vsel %vm464, %v526, 0.0
  %v560 = vsel %vm464, %v530, 0.0
  %v561 = vadd.f32 %v559, %v560
  %v562 = vsel %vm464, %v534, 0.0
  %v563 = vadd.f32 %v561, %v562
  %v564 = vsel %vm464, %v528, 0.0
  %v565 = vsel %vm464, %v532, 0.0
  %v566 = vadd.f32 %v564, %v565
  %v567 = vsel %vm464, %v536, 0.0
  %v568 = vadd.f32 %v566, %v567
  %v569 = vsel %vm464, %v538, 0.0
  %v570 = vsel %vm464, %v542, 0.0
  %v571 = vadd.f32 %v569, %v570
  %v572 = vsel %vm464, %v546, 0.0
  %v573 = vadd.f32 %v571, %v572
  %v574 = vsel %vm464, %v540, 0.0
  %v575 = vsel %vm464, %v544, 0.0
  %v576 = vadd.f32 %v574, %v575
  %v577 = vsel %vm464, %v548, 0.0
  %v578 = vadd.f32 %v576, %v577
  %v579 = vrcp.pop %v553
  %v580 = vmul.f32 1.0, %v579
  %v581 = vrcp.pop %v558
  %v582 = vmul.f32 1.0, %v581
  %v583 = vrcp.pop %v563
  %v584 = vmul.f32 1.0, %v583
  %v585 = vrcp.pop %v568
  %v586 = vmul.f32 1.0, %v585
  %v587 = vrcp.pop %v573
  %v588 = vmul.f32 1.0, %v587
  %v589 = vrcp.pop %v578
  %v590 = vmul.f32 1.0, %v589
  %v591 = vmul.f32 %v514, %v580
  %v592 = vmul.f32 %v516, %v582
  %v593 = vmul.f32 %v518, %v580
  %v594 = vmul.f32 %v520, %v582
  %v595 = vmul.f32 %v522, %v580
  %v596 = vmul.f32 %v524, %v582
  %v597 = vmul.f32 %v526, %v584
  %v598 = vmul.f32 %v528, %v586
  %v599 = vmul.f32 %v530, %v584
  %v600 = vmul.f32 %v532, %v586
  %v601 = vmul.f32 %v534, %v584
  %v602 = vmul.f32 %v536, %v586
  %v603 = vmul.f32 %v538, %v588
  %v604 = vmul.f32 %v540, %v590
  %v605 = vmul.f32 %v542, %v588
  %v606 = vmul.f32 %v544, %v590
  %v607 = vmul.f32 %v546, %v588
  %v608 = vmul.f32 %v548, %v590
  %v610 = vsel %vm464, %v591, 0
  %v613 = vsel %vm464, %v592, 0
  %v616 = vsel %vm464, %v593, 0
  %v619 = vsel %vm464, %v594, 0
  %v622 = vsel %vm464, %v595, 0
  %v625 = vsel %vm464, %v596, 0
  %v628 = vsel %vm464, %v597, 0
  %v631 = vsel %vm464, %v598, 0
  %v634 = vsel %vm464, %v599, 0
  %v637 = vsel %vm464, %v600, 0
  %v640 = vsel %vm464, %v601, 0
  %v643 = vsel %vm464, %v602, 0
  %v646 = vsel %vm464, %v603, 0
  %v649 = vsel %vm464, %v604, 0
  %v652 = vsel %vm464, %v605, 0
  %v655 = vsel %vm464, %v606, 0
  %v658 = vsel %vm464, %v607, 0
  %v661 = vsel %vm464, %v608, 0
  %vm663 = vcmask 1043456
  %v665 = vsel %vm663, %v64, 0
  %667 = vmatprep.subr.mxu0 0.0
  %668 = vmatpush1.msra.mxu0 0.0
  %669 = vmatprep.subr.mxu0 0.0
  %670 = vmatpush1.msra.mxu0 0.0
  %671 = vmatprep.subr.mxu0 0.0
  %672 = vmatpush1.msra.mxu0 0.0
  %673 = vmatprep.subr.mxu0 0.0
  %674 = vmatpush1.msra.mxu0 0.0
  %675 = vmatprep.subr.mxu0 0.0
  %676 = vmatpush1.msra.mxu0 0.0
  %677 = vmatprep.subr.mxu0 0.0
  %678 = vmatpush1.msra.mxu0 0.0
  %679 = vmatprep.subr.mxu0 0.0
  %680 = vmatpush1.msra.mxu0 0.0
  %681 = vmatprep.subr.mxu0 0.0
  %682 = vmatpush1.msra.mxu0 0.0
  %683 = vmatprep.subr.mxu0 0.0
  %684 = vmatpush1.msra.mxu0 0.0
  %685 = vmatprep.subr.mxu0 0.0
  %686 = vmatpush1.msra.mxu0 0.0
  %687 = vmatprep.subr.mxu0 0.0
  %688 = vmatpush1.msra.mxu0 0.0
  %689 = vmatprep.subr.mxu0 0.0
  %690 = vmatpush1.msra.mxu0 0.0
  %691 = vmatprep.subr.mxu0 0.0
  %692 = vmatpush1.msra.mxu0 0.0
  %693 = vmatprep.subr.mxu0 0.0
  %694 = vmatpush1.msra.mxu0 0.0
  %695 = vmatprep.subr.mxu0 0.0
  %696 = vmatpush1.msra.mxu0 0.0
  %697 = vmatprep.subr.mxu0 0.0
  %698 = vmatpush1.msra.mxu0 %v665
  %699 = vmatprep.subr.mxu0 0.0
  %700 = vmatpush2.msra.mxu0 0.0
  %701 = vmatprep.subr.mxu0 0.0
  %702 = vmatpush2.msra.mxu0 0.0
  %703 = vmatprep.subr.mxu0 0.0
  %704 = vmatpush2.msra.mxu0 0.0
  %705 = vmatprep.subr.mxu0 0.0
  %706 = vmatpush2.msra.mxu0 0.0
  %707 = vmatprep.subr.mxu0 0.0
  %708 = vmatpush2.msra.mxu0 0.0
  %709 = vmatprep.subr.mxu0 0.0
  %710 = vmatpush2.msra.mxu0 0.0
  %711 = vmatprep.subr.mxu0 0.0
  %712 = vmatpush2.msra.mxu0 0.0
  %713 = vmatprep.subr.mxu0 0.0
  %714 = vmatpush2.msra.mxu0 0.0
  %715 = vmatprep.subr.mxu0 0.0
  %716 = vmatpush2.msra.mxu0 0.0
  %717 = vmatprep.subr.mxu0 0.0
  %718 = vmatpush2.msra.mxu0 0.0
  %719 = vmatprep.subr.mxu0 0.0
  %720 = vmatpush2.msra.mxu0 0.0
  %721 = vmatprep.subr.mxu0 0.0
  %722 = vmatpush2.msra.mxu0 0.0
  %723 = vmatprep.subr.mxu0 0.0
  %724 = vmatpush2.msra.mxu0 0.0
  %725 = vmatprep.subr.mxu0 0.0
  %726 = vmatpush2.msra.mxu0 0.0
  %727 = vmatprep.subr.mxu0 0.0
  %728 = vmatpush2.msra.mxu0 0.0
  %729 = vmatprep.subr.mxu0 0.0
  %730 = vmatpush2.msra.mxu0 0.0
  %731 = vmatprep.mubr.f32.mxu0 0.0
  %732 = vmatmul.mubr.f32.gmra.mxu0 %v610
  %v733 = vpop.f32.mrf.mxu0
  %v734 = vadd.f32 0.0, %v733
  %v735 = vpop.f32.mrf.mxu0
  %736 = vmatprep.mubr.f32.mxu0 0.0
  %737 = vmatmul.mubr.f32.gmra.mxu0 %v613
  %v738 = vpop.f32.mrf.mxu0
  %v739 = vadd.f32 0.0, %v738
  %v740 = vpop.f32.mrf.mxu0
  %741 = vmatprep.mubr.f32.mxu0 0.0
  %742 = vmatmul.mubr.f32.gmra.mxu0 %v616
  %v743 = vpop.f32.mrf.mxu0
  %v744 = vadd.f32 0.0, %v743
  %v745 = vpop.f32.mrf.mxu0
  %746 = vmatprep.mubr.f32.mxu0 0.0
  %747 = vmatmul.mubr.f32.gmra.mxu0 %v619
  %v748 = vpop.f32.mrf.mxu0
  %v749 = vadd.f32 0.0, %v748
  %v750 = vpop.f32.mrf.mxu0
  %751 = vmatprep.mubr.f32.mxu0 0.0
  %752 = vmatmul.mubr.f32.gmra.mxu0 %v622
  %v753 = vpop.f32.mrf.mxu0
  %v754 = vadd.f32 0.0, %v753
  %v755 = vpop.f32.mrf.mxu0
  %756 = vmatprep.mubr.f32.mxu0 0.0
  %757 = vmatmul.mubr.f32.gmra.mxu0 %v625
  %v758 = vpop.f32.mrf.mxu0
  %v759 = vadd.f32 0.0, %v758
  %v760 = vpop.f32.mrf.mxu0
  %761 = vmatprep.mubr.f32.mxu0 0.0
  %762 = vmatmul.mubr.f32.gmra.mxu0 %v628
  %v763 = vpop.f32.mrf.mxu0
  %v764 = vadd.f32 0.0, %v763
  %v765 = vpop.f32.mrf.mxu0
  %766 = vmatprep.mubr.f32.mxu0 0.0
  %767 = vmatmul.mubr.f32.gmra.mxu0 %v631
  %v768 = vpop.f32.mrf.mxu0
  %v769 = vadd.f32 0.0, %v768
  %v770 = vpop.f32.mrf.mxu0
  %771 = vmatprep.mubr.f32.mxu0 0.0
  %772 = vmatmul.mubr.f32.gmra.mxu0 %v634
  %v773 = vpop.f32.mrf.mxu0
  %v774 = vadd.f32 0.0, %v773
  %v775 = vpop.f32.mrf.mxu0
  %776 = vmatprep.mubr.f32.mxu0 0.0
  %777 = vmatmul.mubr.f32.gmra.mxu0 %v637
  %v778 = vpop.f32.mrf.mxu0
  %v779 = vadd.f32 0.0, %v778
  %v780 = vpop.f32.mrf.mxu0
  %781 = vmatprep.mubr.f32.mxu0 0.0
  %782 = vmatmul.mubr.f32.gmra.mxu0 %v640
  %v783 = vpop.f32.mrf.mxu0
  %v784 = vadd.f32 0.0, %v783
  %v785 = vpop.f32.mrf.mxu0
  %786 = vmatprep.mubr.f32.mxu0 0.0
  %787 = vmatmul.mubr.f32.gmra.mxu0 %v643
  %v788 = vpop.f32.mrf.mxu0
  %v789 = vadd.f32 0.0, %v788
  %v790 = vpop.f32.mrf.mxu0
  %791 = vmatprep.mubr.f32.mxu0 0.0
  %792 = vmatmul.mubr.f32.gmra.mxu0 %v646
  %v793 = vpop.f32.mrf.mxu0
  %v794 = vadd.f32 0.0, %v793
  %v795 = vpop.f32.mrf.mxu0
  %796 = vmatprep.mubr.f32.mxu0 0.0
  %797 = vmatmul.mubr.f32.gmra.mxu0 %v649
  %v798 = vpop.f32.mrf.mxu0
  %v799 = vadd.f32 0.0, %v798
  %v800 = vpop.f32.mrf.mxu0
  %801 = vmatprep.mubr.f32.mxu0 0.0
  %802 = vmatmul.mubr.f32.gmra.mxu0 %v652
  %v803 = vpop.f32.mrf.mxu0
  %v804 = vadd.f32 0.0, %v803
  %v805 = vpop.f32.mrf.mxu0
  %806 = vmatprep.mubr.f32.mxu0 0.0
  %807 = vmatmul.mubr.f32.gmra.mxu0 %v655
  %v808 = vpop.f32.mrf.mxu0
  %v809 = vadd.f32 0.0, %v808
  %v810 = vpop.f32.mrf.mxu0
  %811 = vmatprep.mubr.f32.mxu0 0.0
  %812 = vmatmul.mubr.f32.gmra.mxu0 %v658
  %v813 = vpop.f32.mrf.mxu0
  %v814 = vadd.f32 0.0, %v813
  %v815 = vpop.f32.mrf.mxu0
  %816 = vmatprep.mubr.f32.mxu0 0.0
  %817 = vmatmul.mubr.f32.gmra.mxu0 %v661
  %v818 = vpop.f32.mrf.mxu0
  %v819 = vadd.f32 0.0, %v818
  %v820 = vpop.f32.mrf.mxu0
  %821 = vdwg.mxu0
  %v822 = vmul.f32 %v734, %v181
  %v823 = vmul.f32 %v739, %v187
  %v824 = vmul.f32 %v744, %v193
  %v825 = vmul.f32 %v749, %v199
  %v826 = vmul.f32 %v754, %v205
  %v827 = vmul.f32 %v759, %v211
  %v828 = vmul.f32 %v764, %v181
  %v829 = vmul.f32 %v769, %v187
  %v830 = vmul.f32 %v774, %v193
  %v831 = vmul.f32 %v779, %v199
  %v832 = vmul.f32 %v784, %v205
  %v833 = vmul.f32 %v789, %v211
  %v834 = vmul.f32 %v794, %v181
  %v835 = vmul.f32 %v799, %v187
  %v836 = vmul.f32 %v804, %v193
  %v837 = vmul.f32 %v809, %v199
  %v838 = vmul.f32 %v814, %v205
  %v839 = vmul.f32 %v819, %v211
  %v840 = vsel %vm93, %v822, 0.0
  %v841 = vsel %vm93, %v824, 0.0
  %v842 = vadd.f32 %v840, %v841
  %v843 = vsel %vm93, %v826, 0.0
  %v844 = vadd.f32 %v842, %v843
  %v845 = vsel %vm93, %v823, 0.0
  %v846 = vsel %vm93, %v825, 0.0
  %v847 = vadd.f32 %v845, %v846
  %v848 = vsel %vm93, %v827, 0.0
  %v849 = vadd.f32 %v847, %v848
  %v850 = vsel %vm93, %v828, 0.0
  %v851 = vsel %vm93, %v830, 0.0
  %v852 = vadd.f32 %v850, %v851
  %v853 = vsel %vm93, %v832, 0.0
  %v854 = vadd.f32 %v852, %v853
  %v855 = vsel %vm93, %v829, 0.0
  %v856 = vsel %vm93, %v831, 0.0
  %v857 = vadd.f32 %v855, %v856
  %v858 = vsel %vm93, %v833, 0.0
  %v859 = vadd.f32 %v857, %v858
  %v860 = vsel %vm93, %v834, 0.0
  %v861 = vsel %vm93, %v836, 0.0
  %v862 = vadd.f32 %v860, %v861
  %v863 = vsel %vm93, %v838, 0.0
  %v864 = vadd.f32 %v862, %v863
  %v865 = vsel %vm93, %v835, 0.0
  %v866 = vsel %vm93, %v837, 0.0
  %v867 = vadd.f32 %v865, %v866
  %v868 = vsel %vm93, %v839, 0.0
  %v869 = vadd.f32 %v867, %v868
  %v870 = vld [vmem:[%s3] sm:$0xff]
  %v871 = vld [vmem:[%s3 + $0x8] sm:$0xff]
  %v872 = vld [vmem:[%s3 + $0x10] sm:$0xff]
  %v873 = vld [vmem:[%s3 + $0x18] sm:$0xff]
  %v874 = vld [vmem:[%s3 + $0x20] sm:$0xff]
  %v875 = vld [vmem:[%s3 + $0x28] sm:$0xff]
  %v876 = vld [vmem:[%s3 + $0x30] sm:$0xff]
  %v877 = vld [vmem:[%s3 + $0x38] sm:$0xff]
  %v878 = vld [vmem:[%s4] sm:$0x1]
  %v880 = vlaneseq
  %v881 = vshrl.u32 %v880, 7
  %v882 = vsub.s32 0, %v881
  %v883 = vrot.slane %v878, %v882
  %v886 = vsel %vm93, %v844, 0
  %v889 = vsel %vm93, %v849, 0
  %v892 = vsel %vm93, %v854, 0
  %v895 = vsel %vm93, %v859, 0
  %v898 = vsel %vm93, %v864, 0
  %v901 = vsel %vm93, %v869, 0
  %903 = vmatprep.subr.mxu0 0.0
  %904 = vmatpush1.msra.mxu0 0.0
  %905 = vmatprep.subr.mxu0 0.0
  %906 = vmatpush1.msra.mxu0 0.0
  %907 = vmatprep.subr.mxu0 0.0
  %908 = vmatpush1.msra.mxu0 0.0
  %909 = vmatprep.subr.mxu0 0.0
  %910 = vmatpush1.msra.mxu0 0.0
  %911 = vmatprep.subr.mxu0 0.0
  %912 = vmatpush1.msra.mxu0 0.0
  %913 = vmatprep.subr.mxu0 0.0
  %914 = vmatpush1.msra.mxu0 0.0
  %915 = vmatprep.subr.mxu0 0.0
  %916 = vmatpush1.msra.mxu0 0.0
  %917 = vmatprep.subr.mxu0 0.0
  %918 = vmatpush1.msra.mxu0 0.0
  %919 = vmatprep.subr.mxu0 0.0
  %920 = vmatpush1.msra.mxu0 %v877
  %921 = vmatprep.subr.mxu0 0.0
  %922 = vmatpush1.msra.mxu0 %v876
  %923 = vmatprep.subr.mxu0 0.0
  %924 = vmatpush1.msra.mxu0 %v875
  %925 = vmatprep.subr.mxu0 0.0
  %926 = vmatpush1.msra.mxu0 %v874
  %927 = vmatprep.subr.mxu0 0.0
  %928 = vmatpush1.msra.mxu0 %v873
  %929 = vmatprep.subr.mxu0 0.0
  %930 = vmatpush1.msra.mxu0 %v872
  %931 = vmatprep.subr.mxu0 0.0
  %932 = vmatpush1.msra.mxu0 %v871
  %933 = vmatprep.subr.mxu0 0.0
  %934 = vmatpush1.msra.mxu0 %v870
  %935 = vmatprep.subr.mxu0 0.0
  %936 = vmatpush2.msra.mxu0 0.0
  %937 = vmatprep.subr.mxu0 0.0
  %938 = vmatpush2.msra.mxu0 0.0
  %939 = vmatprep.subr.mxu0 0.0
  %940 = vmatpush2.msra.mxu0 0.0
  %941 = vmatprep.subr.mxu0 0.0
  %942 = vmatpush2.msra.mxu0 0.0
  %943 = vmatprep.subr.mxu0 0.0
  %944 = vmatpush2.msra.mxu0 0.0
  %945 = vmatprep.subr.mxu0 0.0
  %946 = vmatpush2.msra.mxu0 0.0
  %947 = vmatprep.subr.mxu0 0.0
  %948 = vmatpush2.msra.mxu0 0.0
  %949 = vmatprep.subr.mxu0 0.0
  %950 = vmatpush2.msra.mxu0 0.0
  %951 = vmatprep.subr.mxu0 0.0
  %952 = vmatpush2.msra.mxu0 0.0
  %953 = vmatprep.subr.mxu0 0.0
  %954 = vmatpush2.msra.mxu0 0.0
  %955 = vmatprep.subr.mxu0 0.0
  %956 = vmatpush2.msra.mxu0 0.0
  %957 = vmatprep.subr.mxu0 0.0
  %958 = vmatpush2.msra.mxu0 0.0
  %959 = vmatprep.subr.mxu0 0.0
  %960 = vmatpush2.msra.mxu0 0.0
  %961 = vmatprep.subr.mxu0 0.0
  %962 = vmatpush2.msra.mxu0 0.0
  %963 = vmatprep.subr.mxu0 0.0
  %964 = vmatpush2.msra.mxu0 0.0
  %965 = vmatprep.subr.mxu0 0.0
  %966 = vmatpush2.msra.mxu0 0.0
  %967 = vmatprep.mubr.f32.mxu0 0.0
  %968 = vmatmul.mubr.f32.gmra.mxu0 %v886
  %v969 = vpop.f32.mrf.mxu0
  %v970 = vadd.f32 %v883, %v969
  %v971 = vpop.f32.mrf.mxu0
  %972 = vmatprep.mubr.f32.mxu0 0.0
  %973 = vmatmul.mubr.f32.gmra.mxu0 %v889
  %v974 = vpop.f32.mrf.mxu0
  %v975 = vadd.f32 %v883, %v974
  %v976 = vpop.f32.mrf.mxu0
  %977 = vmatprep.mubr.f32.mxu0 0.0
  %978 = vmatmul.mubr.f32.gmra.mxu0 %v892
  %v979 = vpop.f32.mrf.mxu0
  %v980 = vadd.f32 %v883, %v979
  %v981 = vpop.f32.mrf.mxu0
  %982 = vmatprep.mubr.f32.mxu0 0.0
  %983 = vmatmul.mubr.f32.gmra.mxu0 %v895
  %v984 = vpop.f32.mrf.mxu0
  %v985 = vadd.f32 %v883, %v984
  %v986 = vpop.f32.mrf.mxu0
  %987 = vmatprep.mubr.f32.mxu0 0.0
  %988 = vmatmul.mubr.f32.gmra.mxu0 %v898
  %v989 = vpop.f32.mrf.mxu0
  %v990 = vadd.f32 %v883, %v989
  %v991 = vpop.f32.mrf.mxu0
  %992 = vmatprep.mubr.f32.mxu0 0.0
  %993 = vmatmul.mubr.f32.gmra.mxu0 %v901
  %v994 = vpop.f32.mrf.mxu0
  %v995 = vadd.f32 %v883, %v994
  %v996 = vpop.f32.mrf.mxu0
  %997 = vdwg.mxu0
  %v998 = vadd.f32 %v50, %v970
  %v999 = vadd.f32 %v51, %v975
  %v1000 = vadd.f32 %v52, %v980
  %v1001 = vadd.f32 %v53, %v985
  %v1002 = vadd.f32 %v54, %v990
  %v1003 = vadd.f32 %v55, %v995
  %v1004 = vld [vmem:[%s9] sm:$0x1]
  %v1005 = vld [vmem:[%s10] sm:$0x1]
  %v1006 = vsel %vm93, %v998, 0.0
  %1007 = vadd.xlane.f32.xlu0 %v1006
  %v1008 = vpop.xlane.xlu0 %1007
  %v1009 = vsel %vm93, %v999, 0.0
  %1010 = vadd.xlane.f32.xlu0 %v1009
  %v1011 = vpop.xlane.xlu0 %1010
  %v1012 = vsel %vm93, %v1000, 0.0
  %1013 = vadd.xlane.f32.xlu0 %v1012
  %v1014 = vpop.xlane.xlu0 %1013
  %v1015 = vsel %vm93, %v1001, 0.0
  %1016 = vadd.xlane.f32.xlu0 %v1015
  %v1017 = vpop.xlane.xlu0 %1016
  %v1018 = vsel %vm93, %v1002, 0.0
  %1019 = vadd.xlane.f32.xlu0 %v1018
  %v1020 = vpop.xlane.xlu0 %1019
  %v1021 = vsel %vm93, %v1003, 0.0
  %1022 = vadd.xlane.f32.xlu0 %v1021
  %v1023 = vpop.xlane.xlu0 %1022
  %v1024 = vrcp.pop 64.0
  %v1025 = vmul.f32 %v1008, %v1024
  %v1026 = vmul.f32 %v1011, %v1024
  %v1027 = vmul.f32 %v1014, %v1024
  %v1028 = vmul.f32 %v1017, %v1024
  %v1029 = vmul.f32 %v1020, %v1024
  %v1030 = vmul.f32 %v1023, %v1024
  %v1031 = vsub.f32 %v998, %v1025
  %v1032 = vsub.f32 %v999, %v1026
  %v1033 = vsub.f32 %v1000, %v1027
  %v1034 = vsub.f32 %v1001, %v1028
  %v1035 = vsub.f32 %v1002, %v1029
  %v1036 = vsub.f32 %v1003, %v1030
  %v1037 = vmul.f32 %v1031, %v1031
  %v1038 = vmul.f32 %v1032, %v1032
  %v1039 = vmul.f32 %v1033, %v1033
  %v1040 = vmul.f32 %v1034, %v1034
  %v1041 = vmul.f32 %v1035, %v1035
  %v1042 = vmul.f32 %v1036, %v1036
  %v1043 = vsel %vm93, %v1037, 0.0
  %1044 = vadd.xlane.f32.xlu0 %v1043
  %v1045 = vpop.xlane.xlu0 %1044
  %v1046 = vsel %vm93, %v1038, 0.0
  %1047 = vadd.xlane.f32.xlu0 %v1046
  %v1048 = vpop.xlane.xlu0 %1047
  %v1049 = vsel %vm93, %v1039, 0.0
  %1050 = vadd.xlane.f32.xlu0 %v1049
  %v1051 = vpop.xlane.xlu0 %1050
  %v1052 = vsel %vm93, %v1040, 0.0
  %1053 = vadd.xlane.f32.xlu0 %v1052
  %v1054 = vpop.xlane.xlu0 %1053
  %v1055 = vsel %vm93, %v1041, 0.0
  %1056 = vadd.xlane.f32.xlu0 %v1055
  %v1057 = vpop.xlane.xlu0 %1056
  %v1058 = vsel %vm93, %v1042, 0.0
  %1059 = vadd.xlane.f32.xlu0 %v1058
  %v1060 = vpop.xlane.xlu0 %1059
  %v1061 = vmul.f32 %v1045, %v1024
  %v1062 = vmul.f32 %v1048, %v1024
  %v1063 = vmul.f32 %v1051, %v1024
  %v1064 = vmul.f32 %v1054, %v1024
  %v1065 = vmul.f32 %v1057, %v1024
  %v1066 = vmul.f32 %v1060, %v1024
  %v1067 = vadd.f32 %v1061, 1e-05
  %v1068 = vadd.f32 %v1062, 1e-05
  %v1069 = vadd.f32 %v1063, 1e-05
  %v1070 = vadd.f32 %v1064, 1e-05
  %v1071 = vadd.f32 %v1065, 1e-05
  %v1072 = vadd.f32 %v1066, 1e-05
  %v1073 = vrsqrt.pop %v1067
  %v1074 = vrsqrt.pop %v1068
  %v1075 = vrsqrt.pop %v1069
  %v1076 = vrsqrt.pop %v1070
  %v1077 = vrsqrt.pop %v1071
  %v1078 = vrsqrt.pop %v1072
  %v1079 = vmul.f32 %v1031, %v1073
  %v1080 = vmul.f32 %v1032, %v1074
  %v1081 = vmul.f32 %v1033, %v1075
  %v1082 = vmul.f32 %v1034, %v1076
  %v1083 = vmul.f32 %v1035, %v1077
  %v1084 = vmul.f32 %v1036, %v1078
  %v1086 = vlaneseq
  %v1087 = vshrl.u32 %v1086, 7
  %v1088 = vsub.s32 0, %v1087
  %v1089 = vrot.slane %v1004, %v1088
  %v1091 = vmul.f32 %v1079, %v1089
  %v1092 = vmul.f32 %v1080, %v1089
  %v1093 = vmul.f32 %v1081, %v1089
  %v1094 = vmul.f32 %v1082, %v1089
  %v1095 = vmul.f32 %v1083, %v1089
  %v1096 = vmul.f32 %v1084, %v1089
  %v1098 = vlaneseq
  %v1099 = vshrl.u32 %v1098, 7
  %v1100 = vsub.s32 0, %v1099
  %v1101 = vrot.slane %v1005, %v1100
  %v1103 = vadd.f32 %v1091, %v1101
  %v1104 = vadd.f32 %v1092, %v1101
  %v1105 = vadd.f32 %v1093, %v1101
  %v1106 = vadd.f32 %v1094, %v1101
  %v1107 = vadd.f32 %v1095, %v1101
  %v1108 = vadd.f32 %v1096, %v1101
  %v1109 = vld [vmem:[%s5] sm:$0xff]
  %v1110 = vld [vmem:[%s5 + $0x8] sm:$0xff]
  %v1111 = vld [vmem:[%s5 + $0x10] sm:$0xff]
  %v1112 = vld [vmem:[%s5 + $0x18] sm:$0xff]
  %v1113 = vld [vmem:[%s5 + $0x20] sm:$0xff]
  %v1114 = vld [vmem:[%s5 + $0x28] sm:$0xff]
  %v1115 = vld [vmem:[%s5 + $0x30] sm:$0xff]
  %v1116 = vld [vmem:[%s5 + $0x38] sm:$0xff]
  %v1117 = vld [vmem:[%s6] sm:$0x1]
  %v1119 = vlaneseq
  %v1120 = vshrl.u32 %v1119, 7
  %v1121 = vsub.s32 0, %v1120
  %v1122 = vrot.slane %v1117, %v1121
  %v1125 = vsel %vm93, %v1103, 0
  %v1128 = vsel %vm93, %v1104, 0
  %v1131 = vsel %vm93, %v1105, 0
  %v1134 = vsel %vm93, %v1106, 0
  %v1137 = vsel %vm93, %v1107, 0
  %v1140 = vsel %vm93, %v1108, 0
  %1142 = vmatprep.subr.mxu0 0.0
  %1143 = vmatpush1.msra.mxu0 0.0
  %1144 = vmatprep.subr.mxu0 0.0
  %1145 = vmatpush1.msra.mxu0 0.0
  %1146 = vmatprep.subr.mxu0 0.0
  %1147 = vmatpush1.msra.mxu0 0.0
  %1148 = vmatprep.subr.mxu0 0.0
  %1149 = vmatpush1.msra.mxu0 0.0
  %1150 = vmatprep.subr.mxu0 0.0
  %1151 = vmatpush1.msra.mxu0 0.0
  %1152 = vmatprep.subr.mxu0 0.0
  %1153 = vmatpush1.msra.mxu0 0.0
  %1154 = vmatprep.subr.mxu0 0.0
  %1155 = vmatpush1.msra.mxu0 0.0
  %1156 = vmatprep.subr.mxu0 0.0
  %1157 = vmatpush1.msra.mxu0 0.0
  %1158 = vmatprep.subr.mxu0 0.0
  %1159 = vmatpush1.msra.mxu0 %v1116
  %1160 = vmatprep.subr.mxu0 0.0
  %1161 = vmatpush1.msra.mxu0 %v1115
  %1162 = vmatprep.subr.mxu0 0.0
  %1163 = vmatpush1.msra.mxu0 %v1114
  %1164 = vmatprep.subr.mxu0 0.0
  %1165 = vmatpush1.msra.mxu0 %v1113
  %1166 = vmatprep.subr.mxu0 0.0
  %1167 = vmatpush1.msra.mxu0 %v1112
  %1168 = vmatprep.subr.mxu0 0.0
  %1169 = vmatpush1.msra.mxu0 %v1111
  %1170 = vmatprep.subr.mxu0 0.0
  %1171 = vmatpush1.msra.mxu0 %v1110
  %1172 = vmatprep.subr.mxu0 0.0
  %1173 = vmatpush1.msra.mxu0 %v1109
  %1174 = vmatprep.subr.mxu0 0.0
  %1175 = vmatpush2.msra.mxu0 0.0
  %1176 = vmatprep.subr.mxu0 0.0
  %1177 = vmatpush2.msra.mxu0 0.0
  %1178 = vmatprep.subr.mxu0 0.0
  %1179 = vmatpush2.msra.mxu0 0.0
  %1180 = vmatprep.subr.mxu0 0.0
  %1181 = vmatpush2.msra.mxu0 0.0
  %1182 = vmatprep.subr.mxu0 0.0
  %1183 = vmatpush2.msra.mxu0 0.0
  %1184 = vmatprep.subr.mxu0 0.0
  %1185 = vmatpush2.msra.mxu0 0.0
  %1186 = vmatprep.subr.mxu0 0.0
  %1187 = vmatpush2.msra.mxu0 0.0
  %1188 = vmatprep.subr.mxu0 0.0
  %1189 = vmatpush2.msra.mxu0 0.0
  %1190 = vmatprep.subr.mxu0 0.0
  %1191 = vmatpush2.msra.mxu0 0.0
  %1192 = vmatprep.subr.mxu0 0.0
  %1193 = vmatpush2.msra.mxu0 0.0
  %1194 = vmatprep.subr.mxu0 0.0
  %1195 = vmatpush2.msra.mxu0 0.0
  %1196 = vmatprep.subr.mxu0 0.0
  %1197 = vmatpush2.msra.mxu0 0.0
  %1198 = vmatprep.subr.mxu0 0.0
  %1199 = vmatpush2.msra.mxu0 0.0
  %1200 = vmatprep.subr.mxu0 0.0
  %1201 = vmatpush2.msra.mxu0 0.0
  %1202 = vmatprep.subr.mxu0 0.0
  %1203 = vmatpush2.msra.mxu0 0.0
  %1204 = vmatprep.subr.mxu0 0.0
  %1205 = vmatpush2.msra.mxu0 0.0
  %1206 = vmatprep.mubr.f32.mxu0 0.0
  %1207 = vmatmul.mubr.f32.gmra.mxu0 %v1125
  %v1208 = vpop.f32.mrf.mxu0
  %v1209 = vadd.f32 %v1122, %v1208
  %v1210 = vpop.f32.mrf.mxu0
  %1211 = vmatprep.mubr.f32.mxu0 0.0
  %1212 = vmatmul.mubr.f32.gmra.mxu0 %v1128
  %v1213 = vpop.f32.mrf.mxu0
  %v1214 = vadd.f32 %v1122, %v1213
  %v1215 = vpop.f32.mrf.mxu0
  %1216 = vmatprep.mubr.f32.mxu0 0.0
  %1217 = vmatmul.mubr.f32.gmra.mxu0 %v1131
  %v1218 = vpop.f32.mrf.mxu0
  %v1219 = vadd.f32 %v1122, %v1218
  %v1220 = vpop.f32.mrf.mxu0
  %1221 = vmatprep.mubr.f32.mxu0 0.0
  %1222 = vmatmul.mubr.f32.gmra.mxu0 %v1134
  %v1223 = vpop.f32.mrf.mxu0
  %v1224 = vadd.f32 %v1122, %v1223
  %v1225 = vpop.f32.mrf.mxu0
  %1226 = vmatprep.mubr.f32.mxu0 0.0
  %1227 = vmatmul.mubr.f32.gmra.mxu0 %v1137
  %v1228 = vpop.f32.mrf.mxu0
  %v1229 = vadd.f32 %v1122, %v1228
  %v1230 = vpop.f32.mrf.mxu0
  %1231 = vmatprep.mubr.f32.mxu0 0.0
  %1232 = vmatmul.mubr.f32.gmra.mxu0 %v1140
  %v1233 = vpop.f32.mrf.mxu0
  %v1234 = vadd.f32 %v1122, %v1233
  %v1235 = vpop.f32.mrf.mxu0
  %1236 = vdwg.mxu0
  %v1237 = vmax.f32 %v1209, 0.0
  %v1238 = vmax.f32 %v1214, 0.0
  %v1239 = vmax.f32 %v1219, 0.0
  %v1240 = vmax.f32 %v1224, 0.0
  %v1241 = vmax.f32 %v1229, 0.0
  %v1242 = vmax.f32 %v1234, 0.0
  %v1243 = vld [vmem:[%s7] sm:$0xff]
  %v1244 = vld [vmem:[%s7 + $0x8] sm:$0xff]
  %v1245 = vld [vmem:[%s7 + $0x10] sm:$0xff]
  %v1246 = vld [vmem:[%s7 + $0x18] sm:$0xff]
  %v1247 = vld [vmem:[%s7 + $0x20] sm:$0xff]
  %v1248 = vld [vmem:[%s7 + $0x28] sm:$0xff]
  %v1249 = vld [vmem:[%s7 + $0x30] sm:$0xff]
  %v1250 = vld [vmem:[%s7 + $0x38] sm:$0xff]
  %v1251 = vld [vmem:[%s7 + $0x40] sm:$0xff]
  %v1252 = vld [vmem:[%s7 + $0x48] sm:$0xff]
  %v1253 = vld [vmem:[%s7 + $0x50] sm:$0xff]
  %v1254 = vld [vmem:[%s7 + $0x58] sm:$0xff]
  %v1255 = vld [vmem:[%s7 + $0x60] sm:$0xff]
  %v1256 = vld [vmem:[%s7 + $0x68] sm:$0xff]
  %v1257 = vld [vmem:[%s7 + $0x70] sm:$0xff]
  %v1258 = vld [vmem:[%s7 + $0x78] sm:$0xff]
  %v1259 = vld [vmem:[%s8] sm:$0x1]
  %v1261 = vlaneseq
  %v1262 = vshrl.u32 %v1261, 7
  %v1263 = vsub.s32 0, %v1262
  %v1264 = vrot.slane %v1259, %v1263
  %1266 = vmatprep.subr.mxu0 0.0
  %1267 = vmatpush1.msra.mxu0 %v1258
  %1268 = vmatprep.subr.mxu0 0.0
  %1269 = vmatpush1.msra.mxu0 %v1257
  %1270 = vmatprep.subr.mxu0 0.0
  %1271 = vmatpush1.msra.mxu0 %v1256
  %1272 = vmatprep.subr.mxu0 0.0
  %1273 = vmatpush1.msra.mxu0 %v1255
  %1274 = vmatprep.subr.mxu0 0.0
  %1275 = vmatpush1.msra.mxu0 %v1254
  %1276 = vmatprep.subr.mxu0 0.0
  %1277 = vmatpush1.msra.mxu0 %v1253
  %1278 = vmatprep.subr.mxu0 0.0
  %1279 = vmatpush1.msra.mxu0 %v1252
  %1280 = vmatprep.subr.mxu0 0.0
  %1281 = vmatpush1.msra.mxu0 %v1251
  %1282 = vmatprep.subr.mxu0 0.0
  %1283 = vmatpush1.msra.mxu0 %v1250
  %1284 = vmatprep.subr.mxu0 0.0
  %1285 = vmatpush1.msra.mxu0 %v1249
  %1286 = vmatprep.subr.mxu0 0.0
  %1287 = vmatpush1.msra.mxu0 %v1248
  %1288 = vmatprep.subr.mxu0 0.0
  %1289 = vmatpush1.msra.mxu0 %v1247
  %1290 = vmatprep.subr.mxu0 0.0
  %1291 = vmatpush1.msra.mxu0 %v1246
  %1292 = vmatprep.subr.mxu0 0.0
  %1293 = vmatpush1.msra.mxu0 %v1245
  %1294 = vmatprep.subr.mxu0 0.0
  %1295 = vmatpush1.msra.mxu0 %v1244
  %1296 = vmatprep.subr.mxu0 0.0
  %1297 = vmatpush1.msra.mxu0 %v1243
  %1298 = vmatprep.subr.mxu0 0.0
  %1299 = vmatpush2.msra.mxu0 0.0
  %1300 = vmatprep.subr.mxu0 0.0
  %1301 = vmatpush2.msra.mxu0 0.0
  %1302 = vmatprep.subr.mxu0 0.0
  %1303 = vmatpush2.msra.mxu0 0.0
  %1304 = vmatprep.subr.mxu0 0.0
  %1305 = vmatpush2.msra.mxu0 0.0
  %1306 = vmatprep.subr.mxu0 0.0
  %1307 = vmatpush2.msra.mxu0 0.0
  %1308 = vmatprep.subr.mxu0 0.0
  %1309 = vmatpush2.msra.mxu0 0.0
  %1310 = vmatprep.subr.mxu0 0.0
  %1311 = vmatpush2.msra.mxu0 0.0
  %1312 = vmatprep.subr.mxu0 0.0
  %1313 = vmatpush2.msra.mxu0 0.0
  %1314 = vmatprep.subr.mxu0 0.0
  %1315 = vmatpush2.msra.mxu0 0.0
  %1316 = vmatprep.subr.mxu0 0.0
  %1317 = vmatpush2.msra.mxu0 0.0
  %1318 = vmatprep.subr.mxu0 0.0
  %1319 = vmatpush2.msra.mxu0 0.0
  %1320 = vmatprep.subr.mxu0 0.0
  %1321 = vmatpush2.msra.mxu0 0.0
  %1322 = vmatprep.subr.mxu0 0.0
  %1323 = vmatpush2.msra.mxu0 0.0
  %1324 = vmatprep.subr.mxu0 0.0
  %1325 = vmatpush2.msra.mxu0 0.0
  %1326 = vmatprep.subr.mxu0 0.0
  %1327 = vmatpush2.msra.mxu0 0.0
  %1328 = vmatprep.subr.mxu0 0.0
  %1329 = vmatpush2.msra.mxu0 0.0
  %1330 = vmatprep.mubr.f32.mxu0 0.0
  %1331 = vmatmul.mubr.f32.gmra.mxu0 %v1237
  %v1332 = vpop.f32.mrf.mxu0
  %v1333 = vadd.f32 %v1264, %v1332
  %v1334 = vpop.f32.mrf.mxu0
  %1335 = vmatprep.mubr.f32.mxu0 0.0
  %1336 = vmatmul.mubr.f32.gmra.mxu0 %v1238
  %v1337 = vpop.f32.mrf.mxu0
  %v1338 = vadd.f32 %v1264, %v1337
  %v1339 = vpop.f32.mrf.mxu0
  %1340 = vmatprep.mubr.f32.mxu0 0.0
  %1341 = vmatmul.mubr.f32.gmra.mxu0 %v1239
  %v1342 = vpop.f32.mrf.mxu0
  %v1343 = vadd.f32 %v1264, %v1342
  %v1344 = vpop.f32.mrf.mxu0
  %1345 = vmatprep.mubr.f32.mxu0 0.0
  %1346 = vmatmul.mubr.f32.gmra.mxu0 %v1240
  %v1347 = vpop.f32.mrf.mxu0
  %v1348 = vadd.f32 %v1264, %v1347
  %v1349 = vpop.f32.mrf.mxu0
  %1350 = vmatprep.mubr.f32.mxu0 0.0
  %1351 = vmatmul.mubr.f32.gmra.mxu0 %v1241
  %v1352 = vpop.f32.mrf.mxu0
  %v1353 = vadd.f32 %v1264, %v1352
  %v1354 = vpop.f32.mrf.mxu0
  %1355 = vmatprep.mubr.f32.mxu0 0.0
  %1356 = vmatmul.mubr.f32.gmra.mxu0 %v1242
  %v1357 = vpop.f32.mrf.mxu0
  %v1358 = vadd.f32 %v1264, %v1357
  %v1359 = vpop.f32.mrf.mxu0
  %1360 = vdwg.mxu0
  %v1361 = vadd.f32 %v1103, %v1333
  %v1362 = vadd.f32 %v1104, %v1338
  %v1363 = vadd.f32 %v1105, %v1343
  %v1364 = vadd.f32 %v1106, %v1348
  %v1365 = vadd.f32 %v1107, %v1353
  %v1366 = vadd.f32 %v1108, %v1358
  %v1367 = vld [vmem:[%s11] sm:$0x1]
  %v1368 = vld [vmem:[%s12] sm:$0x1]
  %v1369 = vsel %vm93, %v1361, 0.0
  %1370 = vadd.xlane.f32.xlu0 %v1369
  %v1371 = vpop.xlane.xlu0 %1370
  %v1372 = vsel %vm93, %v1362, 0.0
  %1373 = vadd.xlane.f32.xlu0 %v1372
  %v1374 = vpop.xlane.xlu0 %1373
  %v1375 = vsel %vm93, %v1363, 0.0
  %1376 = vadd.xlane.f32.xlu0 %v1375
  %v1377 = vpop.xlane.xlu0 %1376
  %v1378 = vsel %vm93, %v1364, 0.0
  %1379 = vadd.xlane.f32.xlu0 %v1378
  %v1380 = vpop.xlane.xlu0 %1379
  %v1381 = vsel %vm93, %v1365, 0.0
  %1382 = vadd.xlane.f32.xlu0 %v1381
  %v1383 = vpop.xlane.xlu0 %1382
  %v1384 = vsel %vm93, %v1366, 0.0
  %1385 = vadd.xlane.f32.xlu0 %v1384
  %v1386 = vpop.xlane.xlu0 %1385
  %v1387 = vmul.f32 %v1371, %v1024
  %v1388 = vmul.f32 %v1374, %v1024
  %v1389 = vmul.f32 %v1377, %v1024
  %v1390 = vmul.f32 %v1380, %v1024
  %v1391 = vmul.f32 %v1383, %v1024
  %v1392 = vmul.f32 %v1386, %v1024
  %v1393 = vsub.f32 %v1361, %v1387
  %v1394 = vsub.f32 %v1362, %v1388
  %v1395 = vsub.f32 %v1363, %v1389
  %v1396 = vsub.f32 %v1364, %v1390
  %v1397 = vsub.f32 %v1365, %v1391
  %v1398 = vsub.f32 %v1366, %v1392
  %v1399 = vmul.f32 %v1393, %v1393
  %v1400 = vmul.f32 %v1394, %v1394
  %v1401 = vmul.f32 %v1395, %v1395
  %v1402 = vmul.f32 %v1396, %v1396
  %v1403 = vmul.f32 %v1397, %v1397
  %v1404 = vmul.f32 %v1398, %v1398
  %v1405 = vsel %vm93, %v1399, 0.0
  %1406 = vadd.xlane.f32.xlu0 %v1405
  %v1407 = vpop.xlane.xlu0 %1406
  %v1408 = vsel %vm93, %v1400, 0.0
  %1409 = vadd.xlane.f32.xlu0 %v1408
  %v1410 = vpop.xlane.xlu0 %1409
  %v1411 = vsel %vm93, %v1401, 0.0
  %1412 = vadd.xlane.f32.xlu0 %v1411
  %v1413 = vpop.xlane.xlu0 %1412
  %v1414 = vsel %vm93, %v1402, 0.0
  %1415 = vadd.xlane.f32.xlu0 %v1414
  %v1416 = vpop.xlane.xlu0 %1415
  %v1417 = vsel %vm93, %v1403, 0.0
  %1418 = vadd.xlane.f32.xlu0 %v1417
  %v1419 = vpop.xlane.xlu0 %1418
  %v1420 = vsel %vm93, %v1404, 0.0
  %1421 = vadd.xlane.f32.xlu0 %v1420
  %v1422 = vpop.xlane.xlu0 %1421
  %v1423 = vmul.f32 %v1407, %v1024
  %v1424 = vmul.f32 %v1410, %v1024
  %v1425 = vmul.f32 %v1413, %v1024
  %v1426 = vmul.f32 %v1416, %v1024
  %v1427 = vmul.f32 %v1419, %v1024
  %v1428 = vmul.f32 %v1422, %v1024
  %v1429 = vadd.f32 %v1423, 1e-05
  %v1430 = vadd.f32 %v1424, 1e-05
  %v1431 = vadd.f32 %v1425, 1e-05
  %v1432 = vadd.f32 %v1426, 1e-05
  %v1433 = vadd.f32 %v1427, 1e-05
  %v1434 = vadd.f32 %v1428, 1e-05
  %v1435 = vrsqrt.pop %v1429
  %v1436 = vrsqrt.pop %v1430
  %v1437 = vrsqrt.pop %v1431
  %v1438 = vrsqrt.pop %v1432
  %v1439 = vrsqrt.pop %v1433
  %v1440 = vrsqrt.pop %v1434
  %v1441 = vmul.f32 %v1393, %v1435
  %v1442 = vmul.f32 %v1394, %v1436
  %v1443 = vmul.f32 %v1395, %v1437
  %v1444 = vmul.f32 %v1396, %v1438
  %v1445 = vmul.f32 %v1397, %v1439
  %v1446 = vmul.f32 %v1398, %v1440
  %v1448 = vlaneseq
  %v1449 = vshrl.u32 %v1448, 7
  %v1450 = vsub.s32 0, %v1449
  %v1451 = vrot.slane %v1367, %v1450
  %v1453 = vmul.f32 %v1441, %v1451
  %v1454 = vmul.f32 %v1442, %v1451
  %v1455 = vmul.f32 %v1443, %v1451
  %v1456 = vmul.f32 %v1444, %v1451
  %v1457 = vmul.f32 %v1445, %v1451
  %v1458 = vmul.f32 %v1446, %v1451
  %v1460 = vlaneseq
  %v1461 = vshrl.u32 %v1460, 7
  %v1462 = vsub.s32 0, %v1461
  %v1463 = vrot.slane %v1368, %v1462
  %v1465 = vadd.f32 %v1453, %v1463
  %v1466 = vadd.f32 %v1454, %v1463
  %v1467 = vadd.f32 %v1455, %v1463
  %v1468 = vadd.f32 %v1456, %v1463
  %v1469 = vadd.f32 %v1457, %v1463
  %v1470 = vadd.f32 %v1458, %v1463
  %s1471 = scalar_lea.vmem %s1, 128
  %v1472 = vld [vmem:[%s1471] sm:$0xff]
  %v1473 = vld [vmem:[%s1471 + $0x8] sm:$0xff]
  %v1474 = vld [vmem:[%s1471 + $0x10] sm:$0xff]
  %v1475 = vld [vmem:[%s1471 + $0x18] sm:$0xff]
  %v1476 = vld [vmem:[%s1471 + $0x20] sm:$0xff]
  %v1477 = vld [vmem:[%s1471 + $0x28] sm:$0xff]
  %v1478 = vld [vmem:[%s1471 + $0x30] sm:$0xff]
  %v1479 = vld [vmem:[%s1471 + $0x38] sm:$0xff]
  %v1480 = vld [vmem:[%s1471 + $0x40] sm:$0xff]
  %v1481 = vld [vmem:[%s1471 + $0x48] sm:$0xff]
  %v1482 = vld [vmem:[%s1471 + $0x50] sm:$0xff]
  %v1483 = vld [vmem:[%s1471 + $0x58] sm:$0xff]
  %v1484 = vld [vmem:[%s1471 + $0x60] sm:$0xff]
  %v1485 = vld [vmem:[%s1471 + $0x68] sm:$0xff]
  %v1486 = vld [vmem:[%s1471 + $0x70] sm:$0xff]
  %v1487 = vld [vmem:[%s1471 + $0x78] sm:$0xff]
  %s1488 = scalar_lea.vmem %s2, 2
  %v1489 = vld [vmem:[%s1488] sm:$0x3]
  %v1491 = vlaneseq
  %v1492 = vshrl.u32 %v1491, 7
  %v1493 = vsub.s32 0, %v1492
  %v1494 = vrot.slane %v1489, %v1493
  %v1495 = vlaneseq
  %v1496 = vshrl.u32 %v1495, 7
  %v1497 = vsub.s32 1, %v1496
  %v1498 = vrot.slane %v1489, %v1497
  %v1502 = vsel %vm93, %v1465, 0
  %v1505 = vsel %vm93, %v1466, 0
  %v1508 = vsel %vm93, %v1467, 0
  %v1511 = vsel %vm93, %v1468, 0
  %v1514 = vsel %vm93, %v1469, 0
  %v1517 = vsel %vm93, %v1470, 0
  %1519 = vmatprep.subr.mxu0 0.0
  %1520 = vmatpush1.msra.mxu0 0.0
  %1521 = vmatprep.subr.mxu0 0.0
  %1522 = vmatpush1.msra.mxu0 0.0
  %1523 = vmatprep.subr.mxu0 0.0
  %1524 = vmatpush1.msra.mxu0 0.0
  %1525 = vmatprep.subr.mxu0 0.0
  %1526 = vmatpush1.msra.mxu0 0.0
  %1527 = vmatprep.subr.mxu0 0.0
  %1528 = vmatpush1.msra.mxu0 0.0
  %1529 = vmatprep.subr.mxu0 0.0
  %1530 = vmatpush1.msra.mxu0 0.0
  %1531 = vmatprep.subr.mxu0 0.0
  %1532 = vmatpush1.msra.mxu0 0.0
  %1533 = vmatprep.subr.mxu0 0.0
  %1534 = vmatpush1.msra.mxu0 0.0
  %1535 = vmatprep.subr.mxu0 %v1487
  %1536 = vmatpush1.msra.mxu0 %v1486
  %1537 = vmatprep.subr.mxu0 %v1485
  %1538 = vmatpush1.msra.mxu0 %v1484
  %1539 = vmatprep.subr.mxu0 %v1483
  %1540 = vmatpush1.msra.mxu0 %v1482
  %1541 = vmatprep.subr.mxu0 %v1481
  %1542 = vmatpush1.msra.mxu0 %v1480
  %1543 = vmatprep.subr.mxu0 %v1479
  %1544 = vmatpush1.msra.mxu0 %v1478
  %1545 = vmatprep.subr.mxu0 %v1477
  %1546 = vmatpush1.msra.mxu0 %v1476
  %1547 = vmatprep.subr.mxu0 %v1475
  %1548 = vmatpush1.msra.mxu0 %v1474
  %1549 = vmatprep.subr.mxu0 %v1473
  %1550 = vmatpush1.msra.mxu0 %v1472
  %1551 = vmatprep.subr.mxu0 0.0
  %1552 = vmatpush2.msra.mxu0 0.0
  %1553 = vmatprep.subr.mxu0 0.0
  %1554 = vmatpush2.msra.mxu0 0.0
  %1555 = vmatprep.subr.mxu0 0.0
  %1556 = vmatpush2.msra.mxu0 0.0
  %1557 = vmatprep.subr.mxu0 0.0
  %1558 = vmatpush2.msra.mxu0 0.0
  %1559 = vmatprep.subr.mxu0 0.0
  %1560 = vmatpush2.msra.mxu0 0.0
  %1561 = vmatprep.subr.mxu0 0.0
  %1562 = vmatpush2.msra.mxu0 0.0
  %1563 = vmatprep.subr.mxu0 0.0
  %1564 = vmatpush2.msra.mxu0 0.0
  %1565 = vmatprep.subr.mxu0 0.0
  %1566 = vmatpush2.msra.mxu0 0.0
  %1567 = vmatprep.subr.mxu0 0.0
  %1568 = vmatpush2.msra.mxu0 0.0
  %1569 = vmatprep.subr.mxu0 0.0
  %1570 = vmatpush2.msra.mxu0 0.0
  %1571 = vmatprep.subr.mxu0 0.0
  %1572 = vmatpush2.msra.mxu0 0.0
  %1573 = vmatprep.subr.mxu0 0.0
  %1574 = vmatpush2.msra.mxu0 0.0
  %1575 = vmatprep.subr.mxu0 0.0
  %1576 = vmatpush2.msra.mxu0 0.0
  %1577 = vmatprep.subr.mxu0 0.0
  %1578 = vmatpush2.msra.mxu0 0.0
  %1579 = vmatprep.subr.mxu0 0.0
  %1580 = vmatpush2.msra.mxu0 0.0
  %1581 = vmatprep.subr.mxu0 0.0
  %1582 = vmatpush2.msra.mxu0 0.0
  %1583 = vmatprep.mubr.f32.mxu0 0.0
  %1584 = vmatmul.mubr.f32.gmra.mxu0 %v1502
  %v1585 = vpop.f32.mrf.mxu0
  %v1586 = vadd.f32 %v1494, %v1585
  %v1587 = vpop.f32.mrf.mxu0
  %v1588 = vadd.f32 %v1498, %v1587
  %1589 = vmatprep.mubr.f32.mxu0 0.0
  %1590 = vmatmul.mubr.f32.gmra.mxu0 %v1505
  %v1591 = vpop.f32.mrf.mxu0
  %v1592 = vadd.f32 %v1494, %v1591
  %v1593 = vpop.f32.mrf.mxu0
  %v1594 = vadd.f32 %v1498, %v1593
  %1595 = vmatprep.mubr.f32.mxu0 0.0
  %1596 = vmatmul.mubr.f32.gmra.mxu0 %v1508
  %v1597 = vpop.f32.mrf.mxu0
  %v1598 = vadd.f32 %v1494, %v1597
  %v1599 = vpop.f32.mrf.mxu0
  %v1600 = vadd.f32 %v1498, %v1599
  %1601 = vmatprep.mubr.f32.mxu0 0.0
  %1602 = vmatmul.mubr.f32.gmra.mxu0 %v1511
  %v1603 = vpop.f32.mrf.mxu0
  %v1604 = vadd.f32 %v1494, %v1603
  %v1605 = vpop.f32.mrf.mxu0
  %v1606 = vadd.f32 %v1498, %v1605
  %1607 = vmatprep.mubr.f32.mxu0 0.0
  %1608 = vmatmul.mubr.f32.gmra.mxu0 %v1514
  %v1609 = vpop.f32.mrf.mxu0
  %v1610 = vadd.f32 %v1494, %v1609
  %v1611 = vpop.f32.mrf.mxu0
  %v1612 = vadd.f32 %v1498, %v1611
  %1613 = vmatprep.mubr.f32.mxu0 0.0
  %1614 = vmatmul.mubr.f32.gmra.mxu0 %v1517
  %v1615 = vpop.f32.mrf.mxu0
  %v1616 = vadd.f32 %v1494, %v1615
  %v1617 = vpop.f32.mrf.mxu0
  %v1618 = vadd.f32 %v1498, %v1617
  %1619 = vdwg.mxu0
  %1626 = vrot.lane.b32.xlu0 %v1586, 64
  %v1627 = vpop.permute.xlu0 %1626
  %1628 = vrot.lane.b32.xlu0 %v1592, 64
  %v1629 = vpop.permute.xlu0 %1628
  %1630 = vrot.lane.b32.xlu0 %v1598, 64
  %v1631 = vpop.permute.xlu0 %1630
  %1632 = vrot.lane.b32.xlu0 %v1604, 64
  %v1633 = vpop.permute.xlu0 %1632
  %1634 = vrot.lane.b32.xlu0 %v1610, 64
  %v1635 = vpop.permute.xlu0 %1634
  %1636 = vrot.lane.b32.xlu0 %v1616, 64
  %v1637 = vpop.permute.xlu0 %1636
  %v1644 = vmul.f32 %v1586, %v1627
  %v1645 = vmul.f32 %v1592, %v1629
  %v1646 = vmul.f32 %v1586, %v1631
  %v1647 = vmul.f32 %v1592, %v1633
  %v1648 = vmul.f32 %v1586, %v1635
  %v1649 = vmul.f32 %v1592, %v1637
  %v1650 = vmul.f32 %v1598, %v1627
  %v1651 = vmul.f32 %v1604, %v1629
  %v1652 = vmul.f32 %v1598, %v1631
  %v1653 = vmul.f32 %v1604, %v1633
  %v1654 = vmul.f32 %v1598, %v1635
  %v1655 = vmul.f32 %v1604, %v1637
  %v1656 = vmul.f32 %v1610, %v1627
  %v1657 = vmul.f32 %v1616, %v1629
  %v1658 = vmul.f32 %v1610, %v1631
  %v1659 = vmul.f32 %v1616, %v1633
  %v1660 = vmul.f32 %v1610, %v1635
  %v1661 = vmul.f32 %v1616, %v1637
  %v1663 = vsel %vm93, %v1644, 0
  %v1666 = vsel %vm93, %v1645, 0
  %v1669 = vsel %vm93, %v1646, 0
  %v1672 = vsel %vm93, %v1647, 0
  %v1675 = vsel %vm93, %v1648, 0
  %v1678 = vsel %vm93, %v1649, 0
  %v1681 = vsel %vm93, %v1650, 0
  %v1684 = vsel %vm93, %v1651, 0
  %v1687 = vsel %vm93, %v1652, 0
  %v1690 = vsel %vm93, %v1653, 0
  %v1693 = vsel %vm93, %v1654, 0
  %v1696 = vsel %vm93, %v1655, 0
  %v1699 = vsel %vm93, %v1656, 0
  %v1702 = vsel %vm93, %v1657, 0
  %v1705 = vsel %vm93, %v1658, 0
  %v1708 = vsel %vm93, %v1659, 0
  %v1711 = vsel %vm93, %v1660, 0
  %v1714 = vsel %vm93, %v1661, 0
  %1716 = vmatprep.subr.mxu0 0.0
  %1717 = vmatpush1.msra.mxu0 0.0
  %1718 = vmatprep.subr.mxu0 0.0
  %1719 = vmatpush1.msra.mxu0 0.0
  %1720 = vmatprep.subr.mxu0 0.0
  %1721 = vmatpush1.msra.mxu0 0.0
  %1722 = vmatprep.subr.mxu0 0.0
  %1723 = vmatpush1.msra.mxu0 0.0
  %1724 = vmatprep.subr.mxu0 0.0
  %1725 = vmatpush1.msra.mxu0 0.0
  %1726 = vmatprep.subr.mxu0 0.0
  %1727 = vmatpush1.msra.mxu0 0.0
  %1728 = vmatprep.subr.mxu0 0.0
  %1729 = vmatpush1.msra.mxu0 0.0
  %1730 = vmatprep.subr.mxu0 0.0
  %1731 = vmatpush1.msra.mxu0 0.0
  %1732 = vmatprep.subr.mxu0 0.0
  %1733 = vmatpush1.msra.mxu0 %v63
  %1734 = vmatprep.subr.mxu0 0.0
  %1735 = vmatpush1.msra.mxu0 %v62
  %1736 = vmatprep.subr.mxu0 0.0
  %1737 = vmatpush1.msra.mxu0 %v61
  %1738 = vmatprep.subr.mxu0 0.0
  %1739 = vmatpush1.msra.mxu0 %v60
  %1740 = vmatprep.subr.mxu0 0.0
  %1741 = vmatpush1.msra.mxu0 %v59
  %1742 = vmatprep.subr.mxu0 0.0
  %1743 = vmatpush1.msra.mxu0 %v58
  %1744 = vmatprep.subr.mxu0 0.0
  %1745 = vmatpush1.msra.mxu0 %v57
  %1746 = vmatprep.subr.mxu0 0.0
  %1747 = vmatpush1.msra.mxu0 %v56
  %1748 = vmatprep.subr.mxu0 0.0
  %1749 = vmatpush2.msra.mxu0 0.0
  %1750 = vmatprep.subr.mxu0 0.0
  %1751 = vmatpush2.msra.mxu0 0.0
  %1752 = vmatprep.subr.mxu0 0.0
  %1753 = vmatpush2.msra.mxu0 0.0
  %1754 = vmatprep.subr.mxu0 0.0
  %1755 = vmatpush2.msra.mxu0 0.0
  %1756 = vmatprep.subr.mxu0 0.0
  %1757 = vmatpush2.msra.mxu0 0.0
  %1758 = vmatprep.subr.mxu0 0.0
  %1759 = vmatpush2.msra.mxu0 0.0
  %1760 = vmatprep.subr.mxu0 0.0
  %1761 = vmatpush2.msra.mxu0 0.0
  %1762 = vmatprep.subr.mxu0 0.0
  %1763 = vmatpush2.msra.mxu0 0.0
  %1764 = vmatprep.subr.mxu0 0.0
  %1765 = vmatpush2.msra.mxu0 0.0
  %1766 = vmatprep.subr.mxu0 0.0
  %1767 = vmatpush2.msra.mxu0 0.0
  %1768 = vmatprep.subr.mxu0 0.0
  %1769 = vmatpush2.msra.mxu0 0.0
  %1770 = vmatprep.subr.mxu0 0.0
  %1771 = vmatpush2.msra.mxu0 0.0
  %1772 = vmatprep.subr.mxu0 0.0
  %1773 = vmatpush2.msra.mxu0 0.0
  %1774 = vmatprep.subr.mxu0 0.0
  %1775 = vmatpush2.msra.mxu0 0.0
  %1776 = vmatprep.subr.mxu0 0.0
  %1777 = vmatpush2.msra.mxu0 0.0
  %1778 = vmatprep.subr.mxu0 0.0
  %1779 = vmatpush2.msra.mxu0 0.0
  %1780 = vmatprep.mubr.f32.mxu0 0.0
  %1781 = vmatmul.mubr.f32.gmra.mxu0 %v1663
  %v1782 = vpop.f32.mrf.mxu0
  %v1783 = vadd.f32 0.0, %v1782
  %v1784 = vpop.f32.mrf.mxu0
  %1785 = vmatprep.mubr.f32.mxu0 0.0
  %1786 = vmatmul.mubr.f32.gmra.mxu0 %v1666
  %v1787 = vpop.f32.mrf.mxu0
  %v1788 = vadd.f32 0.0, %v1787
  %v1789 = vpop.f32.mrf.mxu0
  %1790 = vmatprep.mubr.f32.mxu0 0.0
  %1791 = vmatmul.mubr.f32.gmra.mxu0 %v1669
  %v1792 = vpop.f32.mrf.mxu0
  %v1793 = vadd.f32 0.0, %v1792
  %v1794 = vpop.f32.mrf.mxu0
  %1795 = vmatprep.mubr.f32.mxu0 0.0
  %1796 = vmatmul.mubr.f32.gmra.mxu0 %v1672
  %v1797 = vpop.f32.mrf.mxu0
  %v1798 = vadd.f32 0.0, %v1797
  %v1799 = vpop.f32.mrf.mxu0
  %1800 = vmatprep.mubr.f32.mxu0 0.0
  %1801 = vmatmul.mubr.f32.gmra.mxu0 %v1675
  %v1802 = vpop.f32.mrf.mxu0
  %v1803 = vadd.f32 0.0, %v1802
  %v1804 = vpop.f32.mrf.mxu0
  %1805 = vmatprep.mubr.f32.mxu0 0.0
  %1806 = vmatmul.mubr.f32.gmra.mxu0 %v1678
  %v1807 = vpop.f32.mrf.mxu0
  %v1808 = vadd.f32 0.0, %v1807
  %v1809 = vpop.f32.mrf.mxu0
  %1810 = vmatprep.mubr.f32.mxu0 0.0
  %1811 = vmatmul.mubr.f32.gmra.mxu0 %v1681
  %v1812 = vpop.f32.mrf.mxu0
  %v1813 = vadd.f32 0.0, %v1812
  %v1814 = vpop.f32.mrf.mxu0
  %1815 = vmatprep.mubr.f32.mxu0 0.0
  %1816 = vmatmul.mubr.f32.gmra.mxu0 %v1684
  %v1817 = vpop.f32.mrf.mxu0
  %v1818 = vadd.f32 0.0, %v1817
  %v1819 = vpop.f32.mrf.mxu0
  %1820 = vmatprep.mubr.f32.mxu0 0.0
  %1821 = vmatmul.mubr.f32.gmra.mxu0 %v1687
  %v1822 = vpop.f32.mrf.mxu0
  %v1823 = vadd.f32 0.0, %v1822
  %v1824 = vpop.f32.mrf.mxu0
  %1825 = vmatprep.mubr.f32.mxu0 0.0
  %1826 = vmatmul.mubr.f32.gmra.mxu0 %v1690
  %v1827 = vpop.f32.mrf.mxu0
  %v1828 = vadd.f32 0.0, %v1827
  %v1829 = vpop.f32.mrf.mxu0
  %1830 = vmatprep.mubr.f32.mxu0 0.0
  %1831 = vmatmul.mubr.f32.gmra.mxu0 %v1693
  %v1832 = vpop.f32.mrf.mxu0
  %v1833 = vadd.f32 0.0, %v1832
  %v1834 = vpop.f32.mrf.mxu0
  %1835 = vmatprep.mubr.f32.mxu0 0.0
  %1836 = vmatmul.mubr.f32.gmra.mxu0 %v1696
  %v1837 = vpop.f32.mrf.mxu0
  %v1838 = vadd.f32 0.0, %v1837
  %v1839 = vpop.f32.mrf.mxu0
  %1840 = vmatprep.mubr.f32.mxu0 0.0
  %1841 = vmatmul.mubr.f32.gmra.mxu0 %v1699
  %v1842 = vpop.f32.mrf.mxu0
  %v1843 = vadd.f32 0.0, %v1842
  %v1844 = vpop.f32.mrf.mxu0
  %1845 = vmatprep.mubr.f32.mxu0 0.0
  %1846 = vmatmul.mubr.f32.gmra.mxu0 %v1702
  %v1847 = vpop.f32.mrf.mxu0
  %v1848 = vadd.f32 0.0, %v1847
  %v1849 = vpop.f32.mrf.mxu0
  %1850 = vmatprep.mubr.f32.mxu0 0.0
  %1851 = vmatmul.mubr.f32.gmra.mxu0 %v1705
  %v1852 = vpop.f32.mrf.mxu0
  %v1853 = vadd.f32 0.0, %v1852
  %v1854 = vpop.f32.mrf.mxu0
  %1855 = vmatprep.mubr.f32.mxu0 0.0
  %1856 = vmatmul.mubr.f32.gmra.mxu0 %v1708
  %v1857 = vpop.f32.mrf.mxu0
  %v1858 = vadd.f32 0.0, %v1857
  %v1859 = vpop.f32.mrf.mxu0
  %1860 = vmatprep.mubr.f32.mxu0 0.0
  %1861 = vmatmul.mubr.f32.gmra.mxu0 %v1711
  %v1862 = vpop.f32.mrf.mxu0
  %v1863 = vadd.f32 0.0, %v1862
  %v1864 = vpop.f32.mrf.mxu0
  %1865 = vmatprep.mubr.f32.mxu0 0.0
  %1866 = vmatmul.mubr.f32.gmra.mxu0 %v1714
  %v1867 = vpop.f32.mrf.mxu0
  %v1868 = vadd.f32 0.0, %v1867
  %v1869 = vpop.f32.mrf.mxu0
  %1870 = vdwg.mxu0
  %v1871 = vsel %vm464, %v1783, -inf
  %v1872 = vsel %vm464, %v1793, -inf
  %v1873 = vmax.f32 %v1871, %v1872
  %v1874 = vsel %vm464, %v1803, -inf
  %v1875 = vmax.f32 %v1873, %v1874
  %v1876 = vsel %vm464, %v1788, -inf
  %v1877 = vsel %vm464, %v1798, -inf
  %v1878 = vmax.f32 %v1876, %v1877
  %v1879 = vsel %vm464, %v1808, -inf
  %v1880 = vmax.f32 %v1878, %v1879
  %v1881 = vsel %vm464, %v1813, -inf
  %v1882 = vsel %vm464, %v1823, -inf
  %v1883 = vmax.f32 %v1881, %v1882
  %v1884 = vsel %vm464, %v1833, -inf
  %v1885 = vmax.f32 %v1883, %v1884
  %v1886 = vsel %vm464, %v1818, -inf
  %v1887 = vsel %vm464, %v1828, -inf
  %v1888 = vmax.f32 %v1886, %v1887
  %v1889 = vsel %vm464, %v1838, -inf
  %v1890 = vmax.f32 %v1888, %v1889
  %v1891 = vsel %vm464, %v1843, -inf
  %v1892 = vsel %vm464, %v1853, -inf
  %v1893 = vmax.f32 %v1891, %v1892
  %v1894 = vsel %vm464, %v1863, -inf
  %v1895 = vmax.f32 %v1893, %v1894
  %v1896 = vsel %vm464, %v1848, -inf
  %v1897 = vsel %vm464, %v1858, -inf
  %v1898 = vmax.f32 %v1896, %v1897
  %v1899 = vsel %vm464, %v1868, -inf
  %v1900 = vmax.f32 %v1898, %v1899
  %v1901 = vsub.f32 %v1783, %v1875
  %v1902 = vsub.f32 %v1788, %v1880
  %v1903 = vsub.f32 %v1793, %v1875
  %v1904 = vsub.f32 %v1798, %v1880
  %v1905 = vsub.f32 %v1803, %v1875
  %v1906 = vsub.f32 %v1808, %v1880
  %v1907 = vsub.f32 %v1813, %v1885
  %v1908 = vsub.f32 %v1818, %v1890
  %v1909 = vsub.f32 %v1823, %v1885
  %v1910 = vsub.f32 %v1828, %v1890
  %v1911 = vsub.f32 %v1833, %v1885
  %v1912 = vsub.f32 %v1838, %v1890
  %v1913 = vsub.f32 %v1843, %v1895
  %v1914 = vsub.f32 %v1848, %v1900
  %v1915 = vsub.f32 %v1853, %v1895
  %v1916 = vsub.f32 %v1858, %v1900
  %v1917 = vsub.f32 %v1863, %v1895
  %v1918 = vsub.f32 %v1868, %v1900
  %v1919 = vmul.f32 %v1901, 1.442695
  %v1920 = vpow.pop %v1919
  %v1921 = vmul.f32 %v1902, 1.442695
  %v1922 = vpow.pop %v1921
  %v1923 = vmul.f32 %v1903, 1.442695
  %v1924 = vpow.pop %v1923
  %v1925 = vmul.f32 %v1904, 1.442695
  %v1926 = vpow.pop %v1925
  %v1927 = vmul.f32 %v1905, 1.442695
  %v1928 = vpow.pop %v1927
  %v1929 = vmul.f32 %v1906, 1.442695
  %v1930 = vpow.pop %v1929
  %v1931 = vmul.f32 %v1907, 1.442695
  %v1932 = vpow.pop %v1931
  %v1933 = vmul.f32 %v1908, 1.442695
  %v1934 = vpow.pop %v1933
  %v1935 = vmul.f32 %v1909, 1.442695
  %v1936 = vpow.pop %v1935
  %v1937 = vmul.f32 %v1910, 1.442695
  %v1938 = vpow.pop %v1937
  %v1939 = vmul.f32 %v1911, 1.442695
  %v1940 = vpow.pop %v1939
  %v1941 = vmul.f32 %v1912, 1.442695
  %v1942 = vpow.pop %v1941
  %v1943 = vmul.f32 %v1913, 1.442695
  %v1944 = vpow.pop %v1943
  %v1945 = vmul.f32 %v1914, 1.442695
  %v1946 = vpow.pop %v1945
  %v1947 = vmul.f32 %v1915, 1.442695
  %v1948 = vpow.pop %v1947
  %v1949 = vmul.f32 %v1916, 1.442695
  %v1950 = vpow.pop %v1949
  %v1951 = vmul.f32 %v1917, 1.442695
  %v1952 = vpow.pop %v1951
  %v1953 = vmul.f32 %v1918, 1.442695
  %v1954 = vpow.pop %v1953
  %v1955 = vsel %vm464, %v1920, 0.0
  %v1956 = vsel %vm464, %v1924, 0.0
  %v1957 = vadd.f32 %v1955, %v1956
  %v1958 = vsel %vm464, %v1928, 0.0
  %v1959 = vadd.f32 %v1957, %v1958
  %v1960 = vsel %vm464, %v1922, 0.0
  %v1961 = vsel %vm464, %v1926, 0.0
  %v1962 = vadd.f32 %v1960, %v1961
  %v1963 = vsel %vm464, %v1930, 0.0
  %v1964 = vadd.f32 %v1962, %v1963
  %v1965 = vsel %vm464, %v1932, 0.0
  %v1966 = vsel %vm464, %v1936, 0.0
  %v1967 = vadd.f32 %v1965, %v1966
  %v1968 = vsel %vm464, %v1940, 0.0
  %v1969 = vadd.f32 %v1967, %v1968
  %v1970 = vsel %vm464, %v1934, 0.0
  %v1971 = vsel %vm464, %v1938, 0.0
  %v1972 = vadd.f32 %v1970, %v1971
  %v1973 = vsel %vm464, %v1942, 0.0
  %v1974 = vadd.f32 %v1972, %v1973
  %v1975 = vsel %vm464, %v1944, 0.0
  %v1976 = vsel %vm464, %v1948, 0.0
  %v1977 = vadd.f32 %v1975, %v1976
  %v1978 = vsel %vm464, %v1952, 0.0
  %v1979 = vadd.f32 %v1977, %v1978
  %v1980 = vsel %vm464, %v1946, 0.0
  %v1981 = vsel %vm464, %v1950, 0.0
  %v1982 = vadd.f32 %v1980, %v1981
  %v1983 = vsel %vm464, %v1954, 0.0
  %v1984 = vadd.f32 %v1982, %v1983
  %v1985 = vrcp.pop %v1959
  %v1986 = vmul.f32 1.0, %v1985
  %v1987 = vrcp.pop %v1964
  %v1988 = vmul.f32 1.0, %v1987
  %v1989 = vrcp.pop %v1969
  %v1990 = vmul.f32 1.0, %v1989
  %v1991 = vrcp.pop %v1974
  %v1992 = vmul.f32 1.0, %v1991
  %v1993 = vrcp.pop %v1979
  %v1994 = vmul.f32 1.0, %v1993
  %v1995 = vrcp.pop %v1984
  %v1996 = vmul.f32 1.0, %v1995
  %v1997 = vmul.f32 %v1920, %v1986
  %v1998 = vmul.f32 %v1922, %v1988
  %v1999 = vmul.f32 %v1924, %v1986
  %v2000 = vmul.f32 %v1926, %v1988
  %v2001 = vmul.f32 %v1928, %v1986
  %v2002 = vmul.f32 %v1930, %v1988
  %v2003 = vmul.f32 %v1932, %v1990
  %v2004 = vmul.f32 %v1934, %v1992
  %v2005 = vmul.f32 %v1936, %v1990
  %v2006 = vmul.f32 %v1938, %v1992
  %v2007 = vmul.f32 %v1940, %v1990
  %v2008 = vmul.f32 %v1942, %v1992
  %v2009 = vmul.f32 %v1944, %v1994
  %v2010 = vmul.f32 %v1946, %v1996
  %v2011 = vmul.f32 %v1948, %v1994
  %v2012 = vmul.f32 %v1950, %v1996
  %v2013 = vmul.f32 %v1952, %v1994
  %v2014 = vmul.f32 %v1954, %v1996
  %v2016 = vsel %vm464, %v1997, 0
  %v2019 = vsel %vm464, %v1998, 0
  %v2022 = vsel %vm464, %v1999, 0
  %v2025 = vsel %vm464, %v2000, 0
  %v2028 = vsel %vm464, %v2001, 0
  %v2031 = vsel %vm464, %v2002, 0
  %v2034 = vsel %vm464, %v2003, 0
  %v2037 = vsel %vm464, %v2004, 0
  %v2040 = vsel %vm464, %v2005, 0
  %v2043 = vsel %vm464, %v2006, 0
  %v2046 = vsel %vm464, %v2007, 0
  %v2049 = vsel %vm464, %v2008, 0
  %v2052 = vsel %vm464, %v2009, 0
  %v2055 = vsel %vm464, %v2010, 0
  %v2058 = vsel %vm464, %v2011, 0
  %v2061 = vsel %vm464, %v2012, 0
  %v2064 = vsel %vm464, %v2013, 0
  %v2067 = vsel %vm464, %v2014, 0
  %2069 = vmatprep.subr.mxu0 0.0
  %2070 = vmatpush1.msra.mxu0 0.0
  %2071 = vmatprep.subr.mxu0 0.0
  %2072 = vmatpush1.msra.mxu0 0.0
  %2073 = vmatprep.subr.mxu0 0.0
  %2074 = vmatpush1.msra.mxu0 0.0
  %2075 = vmatprep.subr.mxu0 0.0
  %2076 = vmatpush1.msra.mxu0 0.0
  %2077 = vmatprep.subr.mxu0 0.0
  %2078 = vmatpush1.msra.mxu0 0.0
  %2079 = vmatprep.subr.mxu0 0.0
  %2080 = vmatpush1.msra.mxu0 0.0
  %2081 = vmatprep.subr.mxu0 0.0
  %2082 = vmatpush1.msra.mxu0 0.0
  %2083 = vmatprep.subr.mxu0 0.0
  %2084 = vmatpush1.msra.mxu0 0.0
  %2085 = vmatprep.subr.mxu0 0.0
  %2086 = vmatpush1.msra.mxu0 0.0
  %2087 = vmatprep.subr.mxu0 0.0
  %2088 = vmatpush1.msra.mxu0 0.0
  %2089 = vmatprep.subr.mxu0 0.0
  %2090 = vmatpush1.msra.mxu0 0.0
  %2091 = vmatprep.subr.mxu0 0.0
  %2092 = vmatpush1.msra.mxu0 0.0
  %2093 = vmatprep.subr.mxu0 0.0
  %2094 = vmatpush1.msra.mxu0 0.0
  %2095 = vmatprep.subr.mxu0 0.0
  %2096 = vmatpush1.msra.mxu0 0.0
  %2097 = vmatprep.subr.mxu0 0.0
  %2098 = vmatpush1.msra.mxu0 0.0
  %2099 = vmatprep.subr.mxu0 0.0
  %2100 = vmatpush1.msra.mxu0 %v665
  %2101 = vmatprep.subr.mxu0 0.0
  %2102 = vmatpush2.msra.mxu0 0.0
  %2103 = vmatprep.subr.mxu0 0.0
  %2104 = vmatpush2.msra.mxu0 0.0
  %2105 = vmatprep.subr.mxu0 0.0
  %2106 = vmatpush2.msra.mxu0 0.0
  %2107 = vmatprep.subr.mxu0 0.0
  %2108 = vmatpush2.msra.mxu0 0.0
  %2109 = vmatprep.subr.mxu0 0.0
  %2110 = vmatpush2.msra.mxu0 0.0
  %2111 = vmatprep.subr.mxu0 0.0
  %2112 = vmatpush2.msra.mxu0 0.0
  %2113 = vmatprep.subr.mxu0 0.0
  %2114 = vmatpush2.msra.mxu0 0.0
  %2115 = vmatprep.subr.mxu0 0.0
  %2116 = vmatpush2.msra.mxu0 0.0
  %2117 = vmatprep.subr.mxu0 0.0
  %2118 = vmatpush2.msra.mxu0 0.0
  %2119 = vmatprep.subr.mxu0 0.0
  %2120 = vmatpush2.msra.mxu0 0.0
  %2121 = vmatprep.subr.mxu0 0.0
  %2122 = vmatpush2.msra.mxu0 0.0
  %2123 = vmatprep.subr.mxu0 0.0
  %2124 = vmatpush2.msra.mxu0 0.0
  %2125 = vmatprep.subr.mxu0 0.0
  %2126 = vmatpush2.msra.mxu0 0.0
  %2127 = vmatprep.subr.mxu0 0.0
  %2128 = vmatpush2.msra.mxu0 0.0
  %2129 = vmatprep.subr.mxu0 0.0
  %2130 = vmatpush2.msra.mxu0 0.0
  %2131 = vmatprep.subr.mxu0 0.0
  %2132 = vmatpush2.msra.mxu0 0.0
  %2133 = vmatprep.mubr.f32.mxu0 0.0
  %2134 = vmatmul.mubr.f32.gmra.mxu0 %v2016
  %v2135 = vpop.f32.mrf.mxu0
  %v2136 = vadd.f32 0.0, %v2135
  %v2137 = vpop.f32.mrf.mxu0
  %2138 = vmatprep.mubr.f32.mxu0 0.0
  %2139 = vmatmul.mubr.f32.gmra.mxu0 %v2019
  %v2140 = vpop.f32.mrf.mxu0
  %v2141 = vadd.f32 0.0, %v2140
  %v2142 = vpop.f32.mrf.mxu0
  %2143 = vmatprep.mubr.f32.mxu0 0.0
  %2144 = vmatmul.mubr.f32.gmra.mxu0 %v2022
  %v2145 = vpop.f32.mrf.mxu0
  %v2146 = vadd.f32 0.0, %v2145
  %v2147 = vpop.f32.mrf.mxu0
  %2148 = vmatprep.mubr.f32.mxu0 0.0
  %2149 = vmatmul.mubr.f32.gmra.mxu0 %v2025
  %v2150 = vpop.f32.mrf.mxu0
  %v2151 = vadd.f32 0.0, %v2150
  %v2152 = vpop.f32.mrf.mxu0
  %2153 = vmatprep.mubr.f32.mxu0 0.0
  %2154 = vmatmul.mubr.f32.gmra.mxu0 %v2028
  %v2155 = vpop.f32.mrf.mxu0
  %v2156 = vadd.f32 0.0, %v2155
  %v2157 = vpop.f32.mrf.mxu0
  %2158 = vmatprep.mubr.f32.mxu0 0.0
  %2159 = vmatmul.mubr.f32.gmra.mxu0 %v2031
  %v2160 = vpop.f32.mrf.mxu0
  %v2161 = vadd.f32 0.0, %v2160
  %v2162 = vpop.f32.mrf.mxu0
  %2163 = vmatprep.mubr.f32.mxu0 0.0
  %2164 = vmatmul.mubr.f32.gmra.mxu0 %v2034
  %v2165 = vpop.f32.mrf.mxu0
  %v2166 = vadd.f32 0.0, %v2165
  %v2167 = vpop.f32.mrf.mxu0
  %2168 = vmatprep.mubr.f32.mxu0 0.0
  %2169 = vmatmul.mubr.f32.gmra.mxu0 %v2037
  %v2170 = vpop.f32.mrf.mxu0
  %v2171 = vadd.f32 0.0, %v2170
  %v2172 = vpop.f32.mrf.mxu0
  %2173 = vmatprep.mubr.f32.mxu0 0.0
  %2174 = vmatmul.mubr.f32.gmra.mxu0 %v2040
  %v2175 = vpop.f32.mrf.mxu0
  %v2176 = vadd.f32 0.0, %v2175
  %v2177 = vpop.f32.mrf.mxu0
  %2178 = vmatprep.mubr.f32.mxu0 0.0
  %2179 = vmatmul.mubr.f32.gmra.mxu0 %v2043
  %v2180 = vpop.f32.mrf.mxu0
  %v2181 = vadd.f32 0.0, %v2180
  %v2182 = vpop.f32.mrf.mxu0
  %2183 = vmatprep.mubr.f32.mxu0 0.0
  %2184 = vmatmul.mubr.f32.gmra.mxu0 %v2046
  %v2185 = vpop.f32.mrf.mxu0
  %v2186 = vadd.f32 0.0, %v2185
  %v2187 = vpop.f32.mrf.mxu0
  %2188 = vmatprep.mubr.f32.mxu0 0.0
  %2189 = vmatmul.mubr.f32.gmra.mxu0 %v2049
  %v2190 = vpop.f32.mrf.mxu0
  %v2191 = vadd.f32 0.0, %v2190
  %v2192 = vpop.f32.mrf.mxu0
  %2193 = vmatprep.mubr.f32.mxu0 0.0
  %2194 = vmatmul.mubr.f32.gmra.mxu0 %v2052
  %v2195 = vpop.f32.mrf.mxu0
  %v2196 = vadd.f32 0.0, %v2195
  %v2197 = vpop.f32.mrf.mxu0
  %2198 = vmatprep.mubr.f32.mxu0 0.0
  %2199 = vmatmul.mubr.f32.gmra.mxu0 %v2055
  %v2200 = vpop.f32.mrf.mxu0
  %v2201 = vadd.f32 0.0, %v2200
  %v2202 = vpop.f32.mrf.mxu0
  %2203 = vmatprep.mubr.f32.mxu0 0.0
  %2204 = vmatmul.mubr.f32.gmra.mxu0 %v2058
  %v2205 = vpop.f32.mrf.mxu0
  %v2206 = vadd.f32 0.0, %v2205
  %v2207 = vpop.f32.mrf.mxu0
  %2208 = vmatprep.mubr.f32.mxu0 0.0
  %2209 = vmatmul.mubr.f32.gmra.mxu0 %v2061
  %v2210 = vpop.f32.mrf.mxu0
  %v2211 = vadd.f32 0.0, %v2210
  %v2212 = vpop.f32.mrf.mxu0
  %2213 = vmatprep.mubr.f32.mxu0 0.0
  %2214 = vmatmul.mubr.f32.gmra.mxu0 %v2064
  %v2215 = vpop.f32.mrf.mxu0
  %v2216 = vadd.f32 0.0, %v2215
  %v2217 = vpop.f32.mrf.mxu0
  %2218 = vmatprep.mubr.f32.mxu0 0.0
  %2219 = vmatmul.mubr.f32.gmra.mxu0 %v2067
  %v2220 = vpop.f32.mrf.mxu0
  %v2221 = vadd.f32 0.0, %v2220
  %v2222 = vpop.f32.mrf.mxu0
  %2223 = vdwg.mxu0
  %v2224 = vmul.f32 %v2136, %v1588
  %v2225 = vmul.f32 %v2141, %v1594
  %v2226 = vmul.f32 %v2146, %v1600
  %v2227 = vmul.f32 %v2151, %v1606
  %v2228 = vmul.f32 %v2156, %v1612
  %v2229 = vmul.f32 %v2161, %v1618
  %v2230 = vmul.f32 %v2166, %v1588
  %v2231 = vmul.f32 %v2171, %v1594
  %v2232 = vmul.f32 %v2176, %v1600
  %v2233 = vmul.f32 %v2181, %v1606
  %v2234 = vmul.f32 %v2186, %v1612
  %v2235 = vmul.f32 %v2191, %v1618
  %v2236 = vmul.f32 %v2196, %v1588
  %v2237 = vmul.f32 %v2201, %v1594
  %v2238 = vmul.f32 %v2206, %v1600
  %v2239 = vmul.f32 %v2211, %v1606
  %v2240 = vmul.f32 %v2216, %v1612
  %v2241 = vmul.f32 %v2221, %v1618
  %v2242 = vsel %vm93, %v2224, 0.0
  %v2243 = vsel %vm93, %v2226, 0.0
  %v2244 = vadd.f32 %v2242, %v2243
  %v2245 = vsel %vm93, %v2228, 0.0
  %v2246 = vadd.f32 %v2244, %v2245
  %v2247 = vsel %vm93, %v2225, 0.0
  %v2248 = vsel %vm93, %v2227, 0.0
  %v2249 = vadd.f32 %v2247, %v2248
  %v2250 = vsel %vm93, %v2229, 0.0
  %v2251 = vadd.f32 %v2249, %v2250
  %v2252 = vsel %vm93, %v2230, 0.0
  %v2253 = vsel %vm93, %v2232, 0.0
  %v2254 = vadd.f32 %v2252, %v2253
  %v2255 = vsel %vm93, %v2234, 0.0
  %v2256 = vadd.f32 %v2254, %v2255
  %v2257 = vsel %vm93, %v2231, 0.0
  %v2258 = vsel %vm93, %v2233, 0.0
  %v2259 = vadd.f32 %v2257, %v2258
  %v2260 = vsel %vm93, %v2235, 0.0
  %v2261 = vadd.f32 %v2259, %v2260
  %v2262 = vsel %vm93, %v2236, 0.0
  %v2263 = vsel %vm93, %v2238, 0.0
  %v2264 = vadd.f32 %v2262, %v2263
  %v2265 = vsel %vm93, %v2240, 0.0
  %v2266 = vadd.f32 %v2264, %v2265
  %v2267 = vsel %vm93, %v2237, 0.0
  %v2268 = vsel %vm93, %v2239, 0.0
  %v2269 = vadd.f32 %v2267, %v2268
  %v2270 = vsel %vm93, %v2241, 0.0
  %v2271 = vadd.f32 %v2269, %v2270
  %s2272 = scalar_lea.vmem %s3, 64
  %v2273 = vld [vmem:[%s2272] sm:$0xff]
  %v2274 = vld [vmem:[%s2272 + $0x8] sm:$0xff]
  %v2275 = vld [vmem:[%s2272 + $0x10] sm:$0xff]
  %v2276 = vld [vmem:[%s2272 + $0x18] sm:$0xff]
  %v2277 = vld [vmem:[%s2272 + $0x20] sm:$0xff]
  %v2278 = vld [vmem:[%s2272 + $0x28] sm:$0xff]
  %v2279 = vld [vmem:[%s2272 + $0x30] sm:$0xff]
  %v2280 = vld [vmem:[%s2272 + $0x38] sm:$0xff]
  %s2281 = scalar_lea.vmem %s4, 1
  %v2282 = vld [vmem:[%s2281] sm:$0x1]
  %v2284 = vlaneseq
  %v2285 = vshrl.u32 %v2284, 7
  %v2286 = vsub.s32 0, %v2285
  %v2287 = vrot.slane %v2282, %v2286
  %v2290 = vsel %vm93, %v2246, 0
  %v2293 = vsel %vm93, %v2251, 0
  %v2296 = vsel %vm93, %v2256, 0
  %v2299 = vsel %vm93, %v2261, 0
  %v2302 = vsel %vm93, %v2266, 0
  %v2305 = vsel %vm93, %v2271, 0
  %2307 = vmatprep.subr.mxu0 0.0
  %2308 = vmatpush1.msra.mxu0 0.0
  %2309 = vmatprep.subr.mxu0 0.0
  %2310 = vmatpush1.msra.mxu0 0.0
  %2311 = vmatprep.subr.mxu0 0.0
  %2312 = vmatpush1.msra.mxu0 0.0
  %2313 = vmatprep.subr.mxu0 0.0
  %2314 = vmatpush1.msra.mxu0 0.0
  %2315 = vmatprep.subr.mxu0 0.0
  %2316 = vmatpush1.msra.mxu0 0.0
  %2317 = vmatprep.subr.mxu0 0.0
  %2318 = vmatpush1.msra.mxu0 0.0
  %2319 = vmatprep.subr.mxu0 0.0
  %2320 = vmatpush1.msra.mxu0 0.0
  %2321 = vmatprep.subr.mxu0 0.0
  %2322 = vmatpush1.msra.mxu0 0.0
  %2323 = vmatprep.subr.mxu0 0.0
  %2324 = vmatpush1.msra.mxu0 %v2280
  %2325 = vmatprep.subr.mxu0 0.0
  %2326 = vmatpush1.msra.mxu0 %v2279
  %2327 = vmatprep.subr.mxu0 0.0
  %2328 = vmatpush1.msra.mxu0 %v2278
  %2329 = vmatprep.subr.mxu0 0.0
  %2330 = vmatpush1.msra.mxu0 %v2277
  %2331 = vmatprep.subr.mxu0 0.0
  %2332 = vmatpush1.msra.mxu0 %v2276
  %2333 = vmatprep.subr.mxu0 0.0
  %2334 = vmatpush1.msra.mxu0 %v2275
  %2335 = vmatprep.subr.mxu0 0.0
  %2336 = vmatpush1.msra.mxu0 %v2274
  %2337 = vmatprep.subr.mxu0 0.0
  %2338 = vmatpush1.msra.mxu0 %v2273
  %2339 = vmatprep.subr.mxu0 0.0
  %2340 = vmatpush2.msra.mxu0 0.0
  %2341 = vmatprep.subr.mxu0 0.0
  %2342 = vmatpush2.msra.mxu0 0.0
  %2343 = vmatprep.subr.mxu0 0.0
  %2344 = vmatpush2.msra.mxu0 0.0
  %2345 = vmatprep.subr.mxu0 0.0
  %2346 = vmatpush2.msra.mxu0 0.0
  %2347 = vmatprep.subr.mxu0 0.0
  %2348 = vmatpush2.msra.mxu0 0.0
  %2349 = vmatprep.subr.mxu0 0.0
  %2350 = vmatpush2.msra.mxu0 0.0
  %2351 = vmatprep.subr.mxu0 0.0
  %2352 = vmatpush2.msra.mxu0 0.0
  %2353 = vmatprep.subr.mxu0 0.0
  %2354 = vmatpush2.msra.mxu0 0.0
  %2355 = vmatprep.subr.mxu0 0.0
  %2356 = vmatpush2.msra.mxu0 0.0
  %2357 = vmatprep.subr.mxu0 0.0
  %2358 = vmatpush2.msra.mxu0 0.0
  %2359 = vmatprep.subr.mxu0 0.0
  %2360 = vmatpush2.msra.mxu0 0.0
  %2361 = vmatprep.subr.mxu0 0.0
  %2362 = vmatpush2.msra.mxu0 0.0
  %2363 = vmatprep.subr.mxu0 0.0
  %2364 = vmatpush2.msra.mxu0 0.0
  %2365 = vmatprep.subr.mxu0 0.0
  %2366 = vmatpush2.msra.mxu0 0.0
  %2367 = vmatprep.subr.mxu0 0.0
  %2368 = vmatpush2.msra.mxu0 0.0
  %2369 = vmatprep.subr.mxu0 0.0
  %2370 = vmatpush2.msra.mxu0 0.0
  %2371 = vmatprep.mubr.f32.mxu0 0.0
  %2372 = vmatmul.mubr.f32.gmra.mxu0 %v2290
  %v2373 = vpop.f32.mrf.mxu0
  %v2374 = vadd.f32 %v2287, %v2373
  %v2375 = vpop.f32.mrf.mxu0
  %2376 = vmatprep.mubr.f32.mxu0 0.0
  %2377 = vmatmul.mubr.f32.gmra.mxu0 %v2293
  %v2378 = vpop.f32.mrf.mxu0
  %v2379 = vadd.f32 %v2287, %v2378
  %v2380 = vpop.f32.mrf.mxu0
  %2381 = vmatprep.mubr.f32.mxu0 0.0
  %2382 = vmatmul.mubr.f32.gmra.mxu0 %v2296
  %v2383 = vpop.f32.mrf.mxu0
  %v2384 = vadd.f32 %v2287, %v2383
  %v2385 = vpop.f32.mrf.mxu0
  %2386 = vmatprep.mubr.f32.mxu0 0.0
  %2387 = vmatmul.mubr.f32.gmra.mxu0 %v2299
  %v2388 = vpop.f32.mrf.mxu0
  %v2389 = vadd.f32 %v2287, %v2388
  %v2390 = vpop.f32.mrf.mxu0
  %2391 = vmatprep.mubr.f32.mxu0 0.0
  %2392 = vmatmul.mubr.f32.gmra.mxu0 %v2302
  %v2393 = vpop.f32.mrf.mxu0
  %v2394 = vadd.f32 %v2287, %v2393
  %v2395 = vpop.f32.mrf.mxu0
  %2396 = vmatprep.mubr.f32.mxu0 0.0
  %2397 = vmatmul.mubr.f32.gmra.mxu0 %v2305
  %v2398 = vpop.f32.mrf.mxu0
  %v2399 = vadd.f32 %v2287, %v2398
  %v2400 = vpop.f32.mrf.mxu0
  %2401 = vdwg.mxu0
  %v2402 = vadd.f32 %v1465, %v2374
  %v2403 = vadd.f32 %v1466, %v2379
  %v2404 = vadd.f32 %v1467, %v2384
  %v2405 = vadd.f32 %v1468, %v2389
  %v2406 = vadd.f32 %v1469, %v2394
  %v2407 = vadd.f32 %v1470, %v2399
  %s2408 = scalar_lea.vmem %s9, 1
  %v2409 = vld [vmem:[%s2408] sm:$0x1]
  %s2410 = scalar_lea.vmem %s10, 1
  %v2411 = vld [vmem:[%s2410] sm:$0x1]
  %v2412 = vsel %vm93, %v2402, 0.0
  %2413 = vadd.xlane.f32.xlu0 %v2412
  %v2414 = vpop.xlane.xlu0 %2413
  %v2415 = vsel %vm93, %v2403, 0.0
  %2416 = vadd.xlane.f32.xlu0 %v2415
  %v2417 = vpop.xlane.xlu0 %2416
  %v2418 = vsel %vm93, %v2404, 0.0
  %2419 = vadd.xlane.f32.xlu0 %v2418
  %v2420 = vpop.xlane.xlu0 %2419
  %v2421 = vsel %vm93, %v2405, 0.0
  %2422 = vadd.xlane.f32.xlu0 %v2421
  %v2423 = vpop.xlane.xlu0 %2422
  %v2424 = vsel %vm93, %v2406, 0.0
  %2425 = vadd.xlane.f32.xlu0 %v2424
  %v2426 = vpop.xlane.xlu0 %2425
  %v2427 = vsel %vm93, %v2407, 0.0
  %2428 = vadd.xlane.f32.xlu0 %v2427
  %v2429 = vpop.xlane.xlu0 %2428
  %v2430 = vmul.f32 %v2414, %v1024
  %v2431 = vmul.f32 %v2417, %v1024
  %v2432 = vmul.f32 %v2420, %v1024
  %v2433 = vmul.f32 %v2423, %v1024
  %v2434 = vmul.f32 %v2426, %v1024
  %v2435 = vmul.f32 %v2429, %v1024
  %v2436 = vsub.f32 %v2402, %v2430
  %v2437 = vsub.f32 %v2403, %v2431
  %v2438 = vsub.f32 %v2404, %v2432
  %v2439 = vsub.f32 %v2405, %v2433
  %v2440 = vsub.f32 %v2406, %v2434
  %v2441 = vsub.f32 %v2407, %v2435
  %v2442 = vmul.f32 %v2436, %v2436
  %v2443 = vmul.f32 %v2437, %v2437
  %v2444 = vmul.f32 %v2438, %v2438
  %v2445 = vmul.f32 %v2439, %v2439
  %v2446 = vmul.f32 %v2440, %v2440
  %v2447 = vmul.f32 %v2441, %v2441
  %v2448 = vsel %vm93, %v2442, 0.0
  %2449 = vadd.xlane.f32.xlu0 %v2448
  %v2450 = vpop.xlane.xlu0 %2449
  %v2451 = vsel %vm93, %v2443, 0.0
  %2452 = vadd.xlane.f32.xlu0 %v2451
  %v2453 = vpop.xlane.xlu0 %2452
  %v2454 = vsel %vm93, %v2444, 0.0
  %2455 = vadd.xlane.f32.xlu0 %v2454
  %v2456 = vpop.xlane.xlu0 %2455
  %v2457 = vsel %vm93, %v2445, 0.0
  %2458 = vadd.xlane.f32.xlu0 %v2457
  %v2459 = vpop.xlane.xlu0 %2458
  %v2460 = vsel %vm93, %v2446, 0.0
  %2461 = vadd.xlane.f32.xlu0 %v2460
  %v2462 = vpop.xlane.xlu0 %2461
  %v2463 = vsel %vm93, %v2447, 0.0
  %2464 = vadd.xlane.f32.xlu0 %v2463
  %v2465 = vpop.xlane.xlu0 %2464
  %v2466 = vmul.f32 %v2450, %v1024
  %v2467 = vmul.f32 %v2453, %v1024
  %v2468 = vmul.f32 %v2456, %v1024
  %v2469 = vmul.f32 %v2459, %v1024
  %v2470 = vmul.f32 %v2462, %v1024
  %v2471 = vmul.f32 %v2465, %v1024
  %v2472 = vadd.f32 %v2466, 1e-05
  %v2473 = vadd.f32 %v2467, 1e-05
  %v2474 = vadd.f32 %v2468, 1e-05
  %v2475 = vadd.f32 %v2469, 1e-05
  %v2476 = vadd.f32 %v2470, 1e-05
  %v2477 = vadd.f32 %v2471, 1e-05
  %v2478 = vrsqrt.pop %v2472
  %v2479 = vrsqrt.pop %v2473
  %v2480 = vrsqrt.pop %v2474
  %v2481 = vrsqrt.pop %v2475
  %v2482 = vrsqrt.pop %v2476
  %v2483 = vrsqrt.pop %v2477
  %v2484 = vmul.f32 %v2436, %v2478
  %v2485 = vmul.f32 %v2437, %v2479
  %v2486 = vmul.f32 %v2438, %v2480
  %v2487 = vmul.f32 %v2439, %v2481
  %v2488 = vmul.f32 %v2440, %v2482
  %v2489 = vmul.f32 %v2441, %v2483
  %v2491 = vlaneseq
  %v2492 = vshrl.u32 %v2491, 7
  %v2493 = vsub.s32 0, %v2492
  %v2494 = vrot.slane %v2409, %v2493
  %v2496 = vmul.f32 %v2484, %v2494
  %v2497 = vmul.f32 %v2485, %v2494
  %v2498 = vmul.f32 %v2486, %v2494
  %v2499 = vmul.f32 %v2487, %v2494
  %v2500 = vmul.f32 %v2488, %v2494
  %v2501 = vmul.f32 %v2489, %v2494
  %v2503 = vlaneseq
  %v2504 = vshrl.u32 %v2503, 7
  %v2505 = vsub.s32 0, %v2504
  %v2506 = vrot.slane %v2411, %v2505
  %v2508 = vadd.f32 %v2496, %v2506
  %v2509 = vadd.f32 %v2497, %v2506
  %v2510 = vadd.f32 %v2498, %v2506
  %v2511 = vadd.f32 %v2499, %v2506
  %v2512 = vadd.f32 %v2500, %v2506
  %v2513 = vadd.f32 %v2501, %v2506
  %s2514 = scalar_lea.vmem %s5, 64
  %v2515 = vld [vmem:[%s2514] sm:$0xff]
  %v2516 = vld [vmem:[%s2514 + $0x8] sm:$0xff]
  %v2517 = vld [vmem:[%s2514 + $0x10] sm:$0xff]
  %v2518 = vld [vmem:[%s2514 + $0x18] sm:$0xff]
  %v2519 = vld [vmem:[%s2514 + $0x20] sm:$0xff]
  %v2520 = vld [vmem:[%s2514 + $0x28] sm:$0xff]
  %v2521 = vld [vmem:[%s2514 + $0x30] sm:$0xff]
  %v2522 = vld [vmem:[%s2514 + $0x38] sm:$0xff]
  %s2523 = scalar_lea.vmem %s6, 1
  %v2524 = vld [vmem:[%s2523] sm:$0x1]
  %v2526 = vlaneseq
  %v2527 = vshrl.u32 %v2526, 7
  %v2528 = vsub.s32 0, %v2527
  %v2529 = vrot.slane %v2524, %v2528
  %v2532 = vsel %vm93, %v2508, 0
  %v2535 = vsel %vm93, %v2509, 0
  %v2538 = vsel %vm93, %v2510, 0
  %v2541 = vsel %vm93, %v2511, 0
  %v2544 = vsel %vm93, %v2512, 0
  %v2547 = vsel %vm93, %v2513, 0
  %2549 = vmatprep.subr.mxu0 0.0
  %2550 = vmatpush1.msra.mxu0 0.0
  %2551 = vmatprep.subr.mxu0 0.0
  %2552 = vmatpush1.msra.mxu0 0.0
  %2553 = vmatprep.subr.mxu0 0.0
  %2554 = vmatpush1.msra.mxu0 0.0
  %2555 = vmatprep.subr.mxu0 0.0
  %2556 = vmatpush1.msra.mxu0 0.0
  %2557 = vmatprep.subr.mxu0 0.0
  %2558 = vmatpush1.msra.mxu0 0.0
  %2559 = vmatprep.subr.mxu0 0.0
  %2560 = vmatpush1.msra.mxu0 0.0
  %2561 = vmatprep.subr.mxu0 0.0
  %2562 = vmatpush1.msra.mxu0 0.0
  %2563 = vmatprep.subr.mxu0 0.0
  %2564 = vmatpush1.msra.mxu0 0.0
  %2565 = vmatprep.subr.mxu0 0.0
  %2566 = vmatpush1.msra.mxu0 %v2522
  %2567 = vmatprep.subr.mxu0 0.0
  %2568 = vmatpush1.msra.mxu0 %v2521
  %2569 = vmatprep.subr.mxu0 0.0
  %2570 = vmatpush1.msra.mxu0 %v2520
  %2571 = vmatprep.subr.mxu0 0.0
  %2572 = vmatpush1.msra.mxu0 %v2519
  %2573 = vmatprep.subr.mxu0 0.0
  %2574 = vmatpush1.msra.mxu0 %v2518
  %2575 = vmatprep.subr.mxu0 0.0
  %2576 = vmatpush1.msra.mxu0 %v2517
  %2577 = vmatprep.subr.mxu0 0.0
  %2578 = vmatpush1.msra.mxu0 %v2516
  %2579 = vmatprep.subr.mxu0 0.0
  %2580 = vmatpush1.msra.mxu0 %v2515
  %2581 = vmatprep.subr.mxu0 0.0
  %2582 = vmatpush2.msra.mxu0 0.0
  %2583 = vmatprep.subr.mxu0 0.0
  %2584 = vmatpush2.msra.mxu0 0.0
  %2585 = vmatprep.subr.mxu0 0.0
  %2586 = vmatpush2.msra.mxu0 0.0
  %2587 = vmatprep.subr.mxu0 0.0
  %2588 = vmatpush2.msra.mxu0 0.0
  %2589 = vmatprep.subr.mxu0 0.0
  %2590 = vmatpush2.msra.mxu0 0.0
  %2591 = vmatprep.subr.mxu0 0.0
  %2592 = vmatpush2.msra.mxu0 0.0
  %2593 = vmatprep.subr.mxu0 0.0
  %2594 = vmatpush2.msra.mxu0 0.0
  %2595 = vmatprep.subr.mxu0 0.0
  %2596 = vmatpush2.msra.mxu0 0.0
  %2597 = vmatprep.subr.mxu0 0.0
  %2598 = vmatpush2.msra.mxu0 0.0
  %2599 = vmatprep.subr.mxu0 0.0
  %2600 = vmatpush2.msra.mxu0 0.0
  %2601 = vmatprep.subr.mxu0 0.0
  %2602 = vmatpush2.msra.mxu0 0.0
  %2603 = vmatprep.subr.mxu0 0.0
  %2604 = vmatpush2.msra.mxu0 0.0
  %2605 = vmatprep.subr.mxu0 0.0
  %2606 = vmatpush2.msra.mxu0 0.0
  %2607 = vmatprep.subr.mxu0 0.0
  %2608 = vmatpush2.msra.mxu0 0.0
  %2609 = vmatprep.subr.mxu0 0.0
  %2610 = vmatpush2.msra.mxu0 0.0
  %2611 = vmatprep.subr.mxu0 0.0
  %2612 = vmatpush2.msra.mxu0 0.0
  %2613 = vmatprep.mubr.f32.mxu0 0.0
  %2614 = vmatmul.mubr.f32.gmra.mxu0 %v2532
  %v2615 = vpop.f32.mrf.mxu0
  %v2616 = vadd.f32 %v2529, %v2615
  %v2617 = vpop.f32.mrf.mxu0
  %2618 = vmatprep.mubr.f32.mxu0 0.0
  %2619 = vmatmul.mubr.f32.gmra.mxu0 %v2535
  %v2620 = vpop.f32.mrf.mxu0
  %v2621 = vadd.f32 %v2529, %v2620
  %v2622 = vpop.f32.mrf.mxu0
  %2623 = vmatprep.mubr.f32.mxu0 0.0
  %2624 = vmatmul.mubr.f32.gmra.mxu0 %v2538
  %v2625 = vpop.f32.mrf.mxu0
  %v2626 = vadd.f32 %v2529, %v2625
  %v2627 = vpop.f32.mrf.mxu0
  %2628 = vmatprep.mubr.f32.mxu0 0.0
  %2629 = vmatmul.mubr.f32.gmra.mxu0 %v2541
  %v2630 = vpop.f32.mrf.mxu0
  %v2631 = vadd.f32 %v2529, %v2630
  %v2632 = vpop.f32.mrf.mxu0
  %2633 = vmatprep.mubr.f32.mxu0 0.0
  %2634 = vmatmul.mubr.f32.gmra.mxu0 %v2544
  %v2635 = vpop.f32.mrf.mxu0
  %v2636 = vadd.f32 %v2529, %v2635
  %v2637 = vpop.f32.mrf.mxu0
  %2638 = vmatprep.mubr.f32.mxu0 0.0
  %2639 = vmatmul.mubr.f32.gmra.mxu0 %v2547
  %v2640 = vpop.f32.mrf.mxu0
  %v2641 = vadd.f32 %v2529, %v2640
  %v2642 = vpop.f32.mrf.mxu0
  %2643 = vdwg.mxu0
  %v2644 = vmax.f32 %v2616, 0.0
  %v2645 = vmax.f32 %v2621, 0.0
  %v2646 = vmax.f32 %v2626, 0.0
  %v2647 = vmax.f32 %v2631, 0.0
  %v2648 = vmax.f32 %v2636, 0.0
  %v2649 = vmax.f32 %v2641, 0.0
  %s2650 = scalar_lea.vmem %s7, 128
  %v2651 = vld [vmem:[%s2650] sm:$0xff]
  %v2652 = vld [vmem:[%s2650 + $0x8] sm:$0xff]
  %v2653 = vld [vmem:[%s2650 + $0x10] sm:$0xff]
  %v2654 = vld [vmem:[%s2650 + $0x18] sm:$0xff]
  %v2655 = vld [vmem:[%s2650 + $0x20] sm:$0xff]
  %v2656 = vld [vmem:[%s2650 + $0x28] sm:$0xff]
  %v2657 = vld [vmem:[%s2650 + $0x30] sm:$0xff]
  %v2658 = vld [vmem:[%s2650 + $0x38] sm:$0xff]
  %v2659 = vld [vmem:[%s2650 + $0x40] sm:$0xff]
  %v2660 = vld [vmem:[%s2650 + $0x48] sm:$0xff]
  %v2661 = vld [vmem:[%s2650 + $0x50] sm:$0xff]
  %v2662 = vld [vmem:[%s2650 + $0x58] sm:$0xff]
  %v2663 = vld [vmem:[%s2650 + $0x60] sm:$0xff]
  %v2664 = vld [vmem:[%s2650 + $0x68] sm:$0xff]
  %v2665 = vld [vmem:[%s2650 + $0x70] sm:$0xff]
  %v2666 = vld [vmem:[%s2650 + $0x78] sm:$0xff]
  %s2667 = scalar_lea.vmem %s8, 1
  %v2668 = vld [vmem:[%s2667] sm:$0x1]
  %v2670 = vlaneseq
  %v2671 = vshrl.u32 %v2670, 7
  %v2672 = vsub.s32 0, %v2671
  %v2673 = vrot.slane %v2668, %v2672
  %2675 = vmatprep.subr.mxu0 0.0
  %2676 = vmatpush1.msra.mxu0 %v2666
  %2677 = vmatprep.subr.mxu0 0.0
  %2678 = vmatpush1.msra.mxu0 %v2665
  %2679 = vmatprep.subr.mxu0 0.0
  %2680 = vmatpush1.msra.mxu0 %v2664
  %2681 = vmatprep.subr.mxu0 0.0
  %2682 = vmatpush1.msra.mxu0 %v2663
  %2683 = vmatprep.subr.mxu0 0.0
  %2684 = vmatpush1.msra.mxu0 %v2662
  %2685 = vmatprep.subr.mxu0 0.0
  %2686 = vmatpush1.msra.mxu0 %v2661
  %2687 = vmatprep.subr.mxu0 0.0
  %2688 = vmatpush1.msra.mxu0 %v2660
  %2689 = vmatprep.subr.mxu0 0.0
  %2690 = vmatpush1.msra.mxu0 %v2659
  %2691 = vmatprep.subr.mxu0 0.0
  %2692 = vmatpush1.msra.mxu0 %v2658
  %2693 = vmatprep.subr.mxu0 0.0
  %2694 = vmatpush1.msra.mxu0 %v2657
  %2695 = vmatprep.subr.mxu0 0.0
  %2696 = vmatpush1.msra.mxu0 %v2656
  %2697 = vmatprep.subr.mxu0 0.0
  %2698 = vmatpush1.msra.mxu0 %v2655
  %2699 = vmatprep.subr.mxu0 0.0
  %2700 = vmatpush1.msra.mxu0 %v2654
  %2701 = vmatprep.subr.mxu0 0.0
  %2702 = vmatpush1.msra.mxu0 %v2653
  %2703 = vmatprep.subr.mxu0 0.0
  %2704 = vmatpush1.msra.mxu0 %v2652
  %2705 = vmatprep.subr.mxu0 0.0
  %2706 = vmatpush1.msra.mxu0 %v2651
  %2707 = vmatprep.subr.mxu0 0.0
  %2708 = vmatpush2.msra.mxu0 0.0
  %2709 = vmatprep.subr.mxu0 0.0
  %2710 = vmatpush2.msra.mxu0 0.0
  %2711 = vmatprep.subr.mxu0 0.0
  %2712 = vmatpush2.msra.mxu0 0.0
  %2713 = vmatprep.subr.mxu0 0.0
  %2714 = vmatpush2.msra.mxu0 0.0
  %2715 = vmatprep.subr.mxu0 0.0
  %2716 = vmatpush2.msra.mxu0 0.0
  %2717 = vmatprep.subr.mxu0 0.0
  %2718 = vmatpush2.msra.mxu0 0.0
  %2719 = vmatprep.subr.mxu0 0.0
  %2720 = vmatpush2.msra.mxu0 0.0
  %2721 = vmatprep.subr.mxu0 0.0
  %2722 = vmatpush2.msra.mxu0 0.0
  %2723 = vmatprep.subr.mxu0 0.0
  %2724 = vmatpush2.msra.mxu0 0.0
  %2725 = vmatprep.subr.mxu0 0.0
  %2726 = vmatpush2.msra.mxu0 0.0
  %2727 = vmatprep.subr.mxu0 0.0
  %2728 = vmatpush2.msra.mxu0 0.0
  %2729 = vmatprep.subr.mxu0 0.0
  %2730 = vmatpush2.msra.mxu0 0.0
  %2731 = vmatprep.subr.mxu0 0.0
  %2732 = vmatpush2.msra.mxu0 0.0
  %2733 = vmatprep.subr.mxu0 0.0
  %2734 = vmatpush2.msra.mxu0 0.0
  %2735 = vmatprep.subr.mxu0 0.0
  %2736 = vmatpush2.msra.mxu0 0.0
  %2737 = vmatprep.subr.mxu0 0.0
  %2738 = vmatpush2.msra.mxu0 0.0
  %2739 = vmatprep.mubr.f32.mxu0 0.0
  %2740 = vmatmul.mubr.f32.gmra.mxu0 %v2644
  %v2741 = vpop.f32.mrf.mxu0
  %v2742 = vadd.f32 %v2673, %v2741
  %v2743 = vpop.f32.mrf.mxu0
  %2744 = vmatprep.mubr.f32.mxu0 0.0
  %2745 = vmatmul.mubr.f32.gmra.mxu0 %v2645
  %v2746 = vpop.f32.mrf.mxu0
  %v2747 = vadd.f32 %v2673, %v2746
  %v2748 = vpop.f32.mrf.mxu0
  %2749 = vmatprep.mubr.f32.mxu0 0.0
  %2750 = vmatmul.mubr.f32.gmra.mxu0 %v2646
  %v2751 = vpop.f32.mrf.mxu0
  %v2752 = vadd.f32 %v2673, %v2751
  %v2753 = vpop.f32.mrf.mxu0
  %2754 = vmatprep.mubr.f32.mxu0 0.0
  %2755 = vmatmul.mubr.f32.gmra.mxu0 %v2647
  %v2756 = vpop.f32.mrf.mxu0
  %v2757 = vadd.f32 %v2673, %v2756
  %v2758 = vpop.f32.mrf.mxu0
  %2759 = vmatprep.mubr.f32.mxu0 0.0
  %2760 = vmatmul.mubr.f32.gmra.mxu0 %v2648
  %v2761 = vpop.f32.mrf.mxu0
  %v2762 = vadd.f32 %v2673, %v2761
  %v2763 = vpop.f32.mrf.mxu0
  %2764 = vmatprep.mubr.f32.mxu0 0.0
  %2765 = vmatmul.mubr.f32.gmra.mxu0 %v2649
  %v2766 = vpop.f32.mrf.mxu0
  %v2767 = vadd.f32 %v2673, %v2766
  %v2768 = vpop.f32.mrf.mxu0
  %2769 = vdwg.mxu0
  %v2770 = vadd.f32 %v2508, %v2742
  %v2771 = vadd.f32 %v2509, %v2747
  %v2772 = vadd.f32 %v2510, %v2752
  %v2773 = vadd.f32 %v2511, %v2757
  %v2774 = vadd.f32 %v2512, %v2762
  %v2775 = vadd.f32 %v2513, %v2767
  %s2776 = scalar_lea.vmem %s11, 1
  %v2777 = vld [vmem:[%s2776] sm:$0x1]
  %s2778 = scalar_lea.vmem %s12, 1
  %v2779 = vld [vmem:[%s2778] sm:$0x1]
  %v2780 = vsel %vm93, %v2770, 0.0
  %2781 = vadd.xlane.f32.xlu0 %v2780
  %v2782 = vpop.xlane.xlu0 %2781
  %v2783 = vsel %vm93, %v2771, 0.0
  %2784 = vadd.xlane.f32.xlu0 %v2783
  %v2785 = vpop.xlane.xlu0 %2784
  %v2786 = vsel %vm93, %v2772, 0.0
  %2787 = vadd.xlane.f32.xlu0 %v2786
  %v2788 = vpop.xlane.xlu0 %2787
  %v2789 = vsel %vm93, %v2773, 0.0
  %2790 = vadd.xlane.f32.xlu0 %v2789
  %v2791 = vpop.xlane.xlu0 %2790
  %v2792 = vsel %vm93, %v2774, 0.0
  %2793 = vadd.xlane.f32.xlu0 %v2792
  %v2794 = vpop.xlane.xlu0 %2793
  %v2795 = vsel %vm93, %v2775, 0.0
  %2796 = vadd.xlane.f32.xlu0 %v2795
  %v2797 = vpop.xlane.xlu0 %2796
  %v2798 = vmul.f32 %v2782, %v1024
  %v2799 = vmul.f32 %v2785, %v1024
  %v2800 = vmul.f32 %v2788, %v1024
  %v2801 = vmul.f32 %v2791, %v1024
  %v2802 = vmul.f32 %v2794, %v1024
  %v2803 = vmul.f32 %v2797, %v1024
  %v2804 = vsub.f32 %v2770, %v2798
  %v2805 = vsub.f32 %v2771, %v2799
  %v2806 = vsub.f32 %v2772, %v2800
  %v2807 = vsub.f32 %v2773, %v2801
  %v2808 = vsub.f32 %v2774, %v2802
  %v2809 = vsub.f32 %v2775, %v2803
  %v2810 = vmul.f32 %v2804, %v2804
  %v2811 = vmul.f32 %v2805, %v2805
  %v2812 = vmul.f32 %v2806, %v2806
  %v2813 = vmul.f32 %v2807, %v2807
  %v2814 = vmul.f32 %v2808, %v2808
  %v2815 = vmul.f32 %v2809, %v2809
  %v2816 = vsel %vm93, %v2810, 0.0
  %2817 = vadd.xlane.f32.xlu0 %v2816
  %v2818 = vpop.xlane.xlu0 %2817
  %v2819 = vsel %vm93, %v2811, 0.0
  %2820 = vadd.xlane.f32.xlu0 %v2819
  %v2821 = vpop.xlane.xlu0 %2820
  %v2822 = vsel %vm93, %v2812, 0.0
  %2823 = vadd.xlane.f32.xlu0 %v2822
  %v2824 = vpop.xlane.xlu0 %2823
  %v2825 = vsel %vm93, %v2813, 0.0
  %2826 = vadd.xlane.f32.xlu0 %v2825
  %v2827 = vpop.xlane.xlu0 %2826
  %v2828 = vsel %vm93, %v2814, 0.0
  %2829 = vadd.xlane.f32.xlu0 %v2828
  %v2830 = vpop.xlane.xlu0 %2829
  %v2831 = vsel %vm93, %v2815, 0.0
  %2832 = vadd.xlane.f32.xlu0 %v2831
  %v2833 = vpop.xlane.xlu0 %2832
  %v2834 = vmul.f32 %v2818, %v1024
  %v2835 = vmul.f32 %v2821, %v1024
  %v2836 = vmul.f32 %v2824, %v1024
  %v2837 = vmul.f32 %v2827, %v1024
  %v2838 = vmul.f32 %v2830, %v1024
  %v2839 = vmul.f32 %v2833, %v1024
  %v2840 = vadd.f32 %v2834, 1e-05
  %v2841 = vadd.f32 %v2835, 1e-05
  %v2842 = vadd.f32 %v2836, 1e-05
  %v2843 = vadd.f32 %v2837, 1e-05
  %v2844 = vadd.f32 %v2838, 1e-05
  %v2845 = vadd.f32 %v2839, 1e-05
  %v2846 = vrsqrt.pop %v2840
  %v2847 = vrsqrt.pop %v2841
  %v2848 = vrsqrt.pop %v2842
  %v2849 = vrsqrt.pop %v2843
  %v2850 = vrsqrt.pop %v2844
  %v2851 = vrsqrt.pop %v2845
  %v2852 = vmul.f32 %v2804, %v2846
  %v2853 = vmul.f32 %v2805, %v2847
  %v2854 = vmul.f32 %v2806, %v2848
  %v2855 = vmul.f32 %v2807, %v2849
  %v2856 = vmul.f32 %v2808, %v2850
  %v2857 = vmul.f32 %v2809, %v2851
  %v2859 = vlaneseq
  %v2860 = vshrl.u32 %v2859, 7
  %v2861 = vsub.s32 0, %v2860
  %v2862 = vrot.slane %v2777, %v2861
  %v2864 = vmul.f32 %v2852, %v2862
  %v2865 = vmul.f32 %v2853, %v2862
  %v2866 = vmul.f32 %v2854, %v2862
  %v2867 = vmul.f32 %v2855, %v2862
  %v2868 = vmul.f32 %v2856, %v2862
  %v2869 = vmul.f32 %v2857, %v2862
  %v2871 = vlaneseq
  %v2872 = vshrl.u32 %v2871, 7
  %v2873 = vsub.s32 0, %v2872
  %v2874 = vrot.slane %v2779, %v2873
  %v2876 = vadd.f32 %v2864, %v2874
  %v2877 = vadd.f32 %v2865, %v2874
  %v2878 = vadd.f32 %v2866, %v2874
  %v2879 = vadd.f32 %v2867, %v2874
  %v2880 = vadd.f32 %v2868, %v2874
  %v2881 = vadd.f32 %v2869, %v2874
  %s2882 = scalar_lea.vmem %s1, 256
  %v2883 = vld [vmem:[%s2882] sm:$0xff]
  %v2884 = vld [vmem:[%s2882 + $0x8] sm:$0xff]
  %v2885 = vld [vmem:[%s2882 + $0x10] sm:$0xff]
  %v2886 = vld [vmem:[%s2882 + $0x18] sm:$0xff]
  %v2887 = vld [vmem:[%s2882 + $0x20] sm:$0xff]
  %v2888 = vld [vmem:[%s2882 + $0x28] sm:$0xff]
  %v2889 = vld [vmem:[%s2882 + $0x30] sm:$0xff]
  %v2890 = vld [vmem:[%s2882 + $0x38] sm:$0xff]
  %v2891 = vld [vmem:[%s2882 + $0x40] sm:$0xff]
  %v2892 = vld [vmem:[%s2882 + $0x48] sm:$0xff]
  %v2893 = vld [vmem:[%s2882 + $0x50] sm:$0xff]
  %v2894 = vld [vmem:[%s2882 + $0x58] sm:$0xff]
  %v2895 = vld [vmem:[%s2882 + $0x60] sm:$0xff]
  %v2896 = vld [vmem:[%s2882 + $0x68] sm:$0xff]
  %v2897 = vld [vmem:[%s2882 + $0x70] sm:$0xff]
  %v2898 = vld [vmem:[%s2882 + $0x78] sm:$0xff]
  %s2899 = scalar_lea.vmem %s2, 4
  %v2900 = vld [vmem:[%s2899] sm:$0x3]
  %v2902 = vlaneseq
  %v2903 = vshrl.u32 %v2902, 7
  %v2904 = vsub.s32 0, %v2903
  %v2905 = vrot.slane %v2900, %v2904
  %v2906 = vlaneseq
  %v2907 = vshrl.u32 %v2906, 7
  %v2908 = vsub.s32 1, %v2907
  %v2909 = vrot.slane %v2900, %v2908
  %v2913 = vsel %vm93, %v2876, 0
  %v2916 = vsel %vm93, %v2877, 0
  %v2919 = vsel %vm93, %v2878, 0
  %v2922 = vsel %vm93, %v2879, 0
  %v2925 = vsel %vm93, %v2880, 0
  %v2928 = vsel %vm93, %v2881, 0
  %2930 = vmatprep.subr.mxu0 0.0
  %2931 = vmatpush1.msra.mxu0 0.0
  %2932 = vmatprep.subr.mxu0 0.0
  %2933 = vmatpush1.msra.mxu0 0.0
  %2934 = vmatprep.subr.mxu0 0.0
  %2935 = vmatpush1.msra.mxu0 0.0
  %2936 = vmatprep.subr.mxu0 0.0
  %2937 = vmatpush1.msra.mxu0 0.0
  %2938 = vmatprep.subr.mxu0 0.0
  %2939 = vmatpush1.msra.mxu0 0.0
  %2940 = vmatprep.subr.mxu0 0.0
  %2941 = vmatpush1.msra.mxu0 0.0
  %2942 = vmatprep.subr.mxu0 0.0
  %2943 = vmatpush1.msra.mxu0 0.0
  %2944 = vmatprep.subr.mxu0 0.0
  %2945 = vmatpush1.msra.mxu0 0.0
  %2946 = vmatprep.subr.mxu0 %v2898
  %2947 = vmatpush1.msra.mxu0 %v2897
  %2948 = vmatprep.subr.mxu0 %v2896
  %2949 = vmatpush1.msra.mxu0 %v2895
  %2950 = vmatprep.subr.mxu0 %v2894
  %2951 = vmatpush1.msra.mxu0 %v2893
  %2952 = vmatprep.subr.mxu0 %v2892
  %2953 = vmatpush1.msra.mxu0 %v2891
  %2954 = vmatprep.subr.mxu0 %v2890
  %2955 = vmatpush1.msra.mxu0 %v2889
  %2956 = vmatprep.subr.mxu0 %v2888
  %2957 = vmatpush1.msra.mxu0 %v2887
  %2958 = vmatprep.subr.mxu0 %v2886
  %2959 = vmatpush1.msra.mxu0 %v2885
  %2960 = vmatprep.subr.mxu0 %v2884
  %2961 = vmatpush1.msra.mxu0 %v2883
  %2962 = vmatprep.subr.mxu0 0.0
  %2963 = vmatpush2.msra.mxu0 0.0
  %2964 = vmatprep.subr.mxu0 0.0
  %2965 = vmatpush2.msra.mxu0 0.0
  %2966 = vmatprep.subr.mxu0 0.0
  %2967 = vmatpush2.msra.mxu0 0.0
  %2968 = vmatprep.subr.mxu0 0.0
  %2969 = vmatpush2.msra.mxu0 0.0
  %2970 = vmatprep.subr.mxu0 0.0
  %2971 = vmatpush2.msra.mxu0 0.0
  %2972 = vmatprep.subr.mxu0 0.0
  %2973 = vmatpush2.msra.mxu0 0.0
  %2974 = vmatprep.subr.mxu0 0.0
  %2975 = vmatpush2.msra.mxu0 0.0
  %2976 = vmatprep.subr.mxu0 0.0
  %2977 = vmatpush2.msra.mxu0 0.0
  %2978 = vmatprep.subr.mxu0 0.0
  %2979 = vmatpush2.msra.mxu0 0.0
  %2980 = vmatprep.subr.mxu0 0.0
  %2981 = vmatpush2.msra.mxu0 0.0
  %2982 = vmatprep.subr.mxu0 0.0
  %2983 = vmatpush2.msra.mxu0 0.0
  %2984 = vmatprep.subr.mxu0 0.0
  %2985 = vmatpush2.msra.mxu0 0.0
  %2986 = vmatprep.subr.mxu0 0.0
  %2987 = vmatpush2.msra.mxu0 0.0
  %2988 = vmatprep.subr.mxu0 0.0
  %2989 = vmatpush2.msra.mxu0 0.0
  %2990 = vmatprep.subr.mxu0 0.0
  %2991 = vmatpush2.msra.mxu0 0.0
  %2992 = vmatprep.subr.mxu0 0.0
  %2993 = vmatpush2.msra.mxu0 0.0
  %2994 = vmatprep.mubr.f32.mxu0 0.0
  %2995 = vmatmul.mubr.f32.gmra.mxu0 %v2913
  %v2996 = vpop.f32.mrf.mxu0
  %v2997 = vadd.f32 %v2905, %v2996
  %v2998 = vpop.f32.mrf.mxu0
  %v2999 = vadd.f32 %v2909, %v2998
  %3000 = vmatprep.mubr.f32.mxu0 0.0
  %3001 = vmatmul.mubr.f32.gmra.mxu0 %v2916
  %v3002 = vpop.f32.mrf.mxu0
  %v3003 = vadd.f32 %v2905, %v3002
  %v3004 = vpop.f32.mrf.mxu0
  %v3005 = vadd.f32 %v2909, %v3004
  %3006 = vmatprep.mubr.f32.mxu0 0.0
  %3007 = vmatmul.mubr.f32.gmra.mxu0 %v2919
  %v3008 = vpop.f32.mrf.mxu0
  %v3009 = vadd.f32 %v2905, %v3008
  %v3010 = vpop.f32.mrf.mxu0
  %v3011 = vadd.f32 %v2909, %v3010
  %3012 = vmatprep.mubr.f32.mxu0 0.0
  %3013 = vmatmul.mubr.f32.gmra.mxu0 %v2922
  %v3014 = vpop.f32.mrf.mxu0
  %v3015 = vadd.f32 %v2905, %v3014
  %v3016 = vpop.f32.mrf.mxu0
  %v3017 = vadd.f32 %v2909, %v3016
  %3018 = vmatprep.mubr.f32.mxu0 0.0
  %3019 = vmatmul.mubr.f32.gmra.mxu0 %v2925
  %v3020 = vpop.f32.mrf.mxu0
  %v3021 = vadd.f32 %v2905, %v3020
  %v3022 = vpop.f32.mrf.mxu0
  %v3023 = vadd.f32 %v2909, %v3022
  %3024 = vmatprep.mubr.f32.mxu0 0.0
  %3025 = vmatmul.mubr.f32.gmra.mxu0 %v2928
  %v3026 = vpop.f32.mrf.mxu0
  %v3027 = vadd.f32 %v2905, %v3026
  %v3028 = vpop.f32.mrf.mxu0
  %v3029 = vadd.f32 %v2909, %v3028
  %3030 = vdwg.mxu0
  %3037 = vrot.lane.b32.xlu0 %v2997, 64
  %v3038 = vpop.permute.xlu0 %3037
  %3039 = vrot.lane.b32.xlu0 %v3003, 64
  %v3040 = vpop.permute.xlu0 %3039
  %3041 = vrot.lane.b32.xlu0 %v3009, 64
  %v3042 = vpop.permute.xlu0 %3041
  %3043 = vrot.lane.b32.xlu0 %v3015, 64
  %v3044 = vpop.permute.xlu0 %3043
  %3045 = vrot.lane.b32.xlu0 %v3021, 64
  %v3046 = vpop.permute.xlu0 %3045
  %3047 = vrot.lane.b32.xlu0 %v3027, 64
  %v3048 = vpop.permute.xlu0 %3047
  %v3055 = vmul.f32 %v2997, %v3038
  %v3056 = vmul.f32 %v3003, %v3040
  %v3057 = vmul.f32 %v2997, %v3042
  %v3058 = vmul.f32 %v3003, %v3044
  %v3059 = vmul.f32 %v2997, %v3046
  %v3060 = vmul.f32 %v3003, %v3048
  %v3061 = vmul.f32 %v3009, %v3038
  %v3062 = vmul.f32 %v3015, %v3040
  %v3063 = vmul.f32 %v3009, %v3042
  %v3064 = vmul.f32 %v3015, %v3044
  %v3065 = vmul.f32 %v3009, %v3046
  %v3066 = vmul.f32 %v3015, %v3048
  %v3067 = vmul.f32 %v3021, %v3038
  %v3068 = vmul.f32 %v3027, %v3040
  %v3069 = vmul.f32 %v3021, %v3042
  %v3070 = vmul.f32 %v3027, %v3044
  %v3071 = vmul.f32 %v3021, %v3046
  %v3072 = vmul.f32 %v3027, %v3048
  %v3074 = vsel %vm93, %v3055, 0
  %v3077 = vsel %vm93, %v3056, 0
  %v3080 = vsel %vm93, %v3057, 0
  %v3083 = vsel %vm93, %v3058, 0
  %v3086 = vsel %vm93, %v3059, 0
  %v3089 = vsel %vm93, %v3060, 0
  %v3092 = vsel %vm93, %v3061, 0
  %v3095 = vsel %vm93, %v3062, 0
  %v3098 = vsel %vm93, %v3063, 0
  %v3101 = vsel %vm93, %v3064, 0
  %v3104 = vsel %vm93, %v3065, 0
  %v3107 = vsel %vm93, %v3066, 0
  %v3110 = vsel %vm93, %v3067, 0
  %v3113 = vsel %vm93, %v3068, 0
  %v3116 = vsel %vm93, %v3069, 0
  %v3119 = vsel %vm93, %v3070, 0
  %v3122 = vsel %vm93, %v3071, 0
  %v3125 = vsel %vm93, %v3072, 0
  %3127 = vmatprep.subr.mxu0 0.0
  %3128 = vmatpush1.msra.mxu0 0.0
  %3129 = vmatprep.subr.mxu0 0.0
  %3130 = vmatpush1.msra.mxu0 0.0
  %3131 = vmatprep.subr.mxu0 0.0
  %3132 = vmatpush1.msra.mxu0 0.0
  %3133 = vmatprep.subr.mxu0 0.0
  %3134 = vmatpush1.msra.mxu0 0.0
  %3135 = vmatprep.subr.mxu0 0.0
  %3136 = vmatpush1.msra.mxu0 0.0
  %3137 = vmatprep.subr.mxu0 0.0
  %3138 = vmatpush1.msra.mxu0 0.0
  %3139 = vmatprep.subr.mxu0 0.0
  %3140 = vmatpush1.msra.mxu0 0.0
  %3141 = vmatprep.subr.mxu0 0.0
  %3142 = vmatpush1.msra.mxu0 0.0
  %3143 = vmatprep.subr.mxu0 0.0
  %3144 = vmatpush1.msra.mxu0 %v63
  %3145 = vmatprep.subr.mxu0 0.0
  %3146 = vmatpush1.msra.mxu0 %v62
  %3147 = vmatprep.subr.mxu0 0.0
  %3148 = vmatpush1.msra.mxu0 %v61
  %3149 = vmatprep.subr.mxu0 0.0
  %3150 = vmatpush1.msra.mxu0 %v60
  %3151 = vmatprep.subr.mxu0 0.0
  %3152 = vmatpush1.msra.mxu0 %v59
  %3153 = vmatprep.subr.mxu0 0.0
  %3154 = vmatpush1.msra.mxu0 %v58
  %3155 = vmatprep.subr.mxu0 0.0
  %3156 = vmatpush1.msra.mxu0 %v57
  %3157 = vmatprep.subr.mxu0 0.0
  %3158 = vmatpush1.msra.mxu0 %v56
  %3159 = vmatprep.subr.mxu0 0.0
  %3160 = vmatpush2.msra.mxu0 0.0
  %3161 = vmatprep.subr.mxu0 0.0
  %3162 = vmatpush2.msra.mxu0 0.0
  %3163 = vmatprep.subr.mxu0 0.0
  %3164 = vmatpush2.msra.mxu0 0.0
  %3165 = vmatprep.subr.mxu0 0.0
  %3166 = vmatpush2.msra.mxu0 0.0
  %3167 = vmatprep.subr.mxu0 0.0
  %3168 = vmatpush2.msra.mxu0 0.0
  %3169 = vmatprep.subr.mxu0 0.0
  %3170 = vmatpush2.msra.mxu0 0.0
  %3171 = vmatprep.subr.mxu0 0.0
  %3172 = vmatpush2.msra.mxu0 0.0
  %3173 = vmatprep.subr.mxu0 0.0
  %3174 = vmatpush2.msra.mxu0 0.0
  %3175 = vmatprep.subr.mxu0 0.0
  %3176 = vmatpush2.msra.mxu0 0.0
  %3177 = vmatprep.subr.mxu0 0.0
  %3178 = vmatpush2.msra.mxu0 0.0
  %3179 = vmatprep.subr.mxu0 0.0
  %3180 = vmatpush2.msra.mxu0 0.0
  %3181 = vmatprep.subr.mxu0 0.0
  %3182 = vmatpush2.msra.mxu0 0.0
  %3183 = vmatprep.subr.mxu0 0.0
  %3184 = vmatpush2.msra.mxu0 0.0
  %3185 = vmatprep.subr.mxu0 0.0
  %3186 = vmatpush2.msra.mxu0 0.0
  %3187 = vmatprep.subr.mxu0 0.0
  %3188 = vmatpush2.msra.mxu0 0.0
  %3189 = vmatprep.subr.mxu0 0.0
  %3190 = vmatpush2.msra.mxu0 0.0
  %3191 = vmatprep.mubr.f32.mxu0 0.0
  %3192 = vmatmul.mubr.f32.gmra.mxu0 %v3074
  %v3193 = vpop.f32.mrf.mxu0
  %v3194 = vadd.f32 0.0, %v3193
  %v3195 = vpop.f32.mrf.mxu0
  %3196 = vmatprep.mubr.f32.mxu0 0.0
  %3197 = vmatmul.mubr.f32.gmra.mxu0 %v3077
  %v3198 = vpop.f32.mrf.mxu0
  %v3199 = vadd.f32 0.0, %v3198
  %v3200 = vpop.f32.mrf.mxu0
  %3201 = vmatprep.mubr.f32.mxu0 0.0
  %3202 = vmatmul.mubr.f32.gmra.mxu0 %v3080
  %v3203 = vpop.f32.mrf.mxu0
  %v3204 = vadd.f32 0.0, %v3203
  %v3205 = vpop.f32.mrf.mxu0
  %3206 = vmatprep.mubr.f32.mxu0 0.0
  %3207 = vmatmul.mubr.f32.gmra.mxu0 %v3083
  %v3208 = vpop.f32.mrf.mxu0
  %v3209 = vadd.f32 0.0, %v3208
  %v3210 = vpop.f32.mrf.mxu0
  %3211 = vmatprep.mubr.f32.mxu0 0.0
  %3212 = vmatmul.mubr.f32.gmra.mxu0 %v3086
  %v3213 = vpop.f32.mrf.mxu0
  %v3214 = vadd.f32 0.0, %v3213
  %v3215 = vpop.f32.mrf.mxu0
  %3216 = vmatprep.mubr.f32.mxu0 0.0
  %3217 = vmatmul.mubr.f32.gmra.mxu0 %v3089
  %v3218 = vpop.f32.mrf.mxu0
  %v3219 = vadd.f32 0.0, %v3218
  %v3220 = vpop.f32.mrf.mxu0
  %3221 = vmatprep.mubr.f32.mxu0 0.0
  %3222 = vmatmul.mubr.f32.gmra.mxu0 %v3092
  %v3223 = vpop.f32.mrf.mxu0
  %v3224 = vadd.f32 0.0, %v3223
  %v3225 = vpop.f32.mrf.mxu0
  %3226 = vmatprep.mubr.f32.mxu0 0.0
  %3227 = vmatmul.mubr.f32.gmra.mxu0 %v3095
  %v3228 = vpop.f32.mrf.mxu0
  %v3229 = vadd.f32 0.0, %v3228
  %v3230 = vpop.f32.mrf.mxu0
  %3231 = vmatprep.mubr.f32.mxu0 0.0
  %3232 = vmatmul.mubr.f32.gmra.mxu0 %v3098
  %v3233 = vpop.f32.mrf.mxu0
  %v3234 = vadd.f32 0.0, %v3233
  %v3235 = vpop.f32.mrf.mxu0
  %3236 = vmatprep.mubr.f32.mxu0 0.0
  %3237 = vmatmul.mubr.f32.gmra.mxu0 %v3101
  %v3238 = vpop.f32.mrf.mxu0
  %v3239 = vadd.f32 0.0, %v3238
  %v3240 = vpop.f32.mrf.mxu0
  %3241 = vmatprep.mubr.f32.mxu0 0.0
  %3242 = vmatmul.mubr.f32.gmra.mxu0 %v3104
  %v3243 = vpop.f32.mrf.mxu0
  %v3244 = vadd.f32 0.0, %v3243
  %v3245 = vpop.f32.mrf.mxu0
  %3246 = vmatprep.mubr.f32.mxu0 0.0
  %3247 = vmatmul.mubr.f32.gmra.mxu0 %v3107
  %v3248 = vpop.f32.mrf.mxu0
  %v3249 = vadd.f32 0.0, %v3248
  %v3250 = vpop.f32.mrf.mxu0
  %3251 = vmatprep.mubr.f32.mxu0 0.0
  %3252 = vmatmul.mubr.f32.gmra.mxu0 %v3110
  %v3253 = vpop.f32.mrf.mxu0
  %v3254 = vadd.f32 0.0, %v3253
  %v3255 = vpop.f32.mrf.mxu0
  %3256 = vmatprep.mubr.f32.mxu0 0.0
  %3257 = vmatmul.mubr.f32.gmra.mxu0 %v3113
  %v3258 = vpop.f32.mrf.mxu0
  %v3259 = vadd.f32 0.0, %v3258
  %v3260 = vpop.f32.mrf.mxu0
  %3261 = vmatprep.mubr.f32.mxu0 0.0
  %3262 = vmatmul.mubr.f32.gmra.mxu0 %v3116
  %v3263 = vpop.f32.mrf.mxu0
  %v3264 = vadd.f32 0.0, %v3263
  %v3265 = vpop.f32.mrf.mxu0
  %3266 = vmatprep.mubr.f32.mxu0 0.0
  %3267 = vmatmul.mubr.f32.gmra.mxu0 %v3119
  %v3268 = vpop.f32.mrf.mxu0
  %v3269 = vadd.f32 0.0, %v3268
  %v3270 = vpop.f32.mrf.mxu0
  %3271 = vmatprep.mubr.f32.mxu0 0.0
  %3272 = vmatmul.mubr.f32.gmra.mxu0 %v3122
  %v3273 = vpop.f32.mrf.mxu0
  %v3274 = vadd.f32 0.0, %v3273
  %v3275 = vpop.f32.mrf.mxu0
  %3276 = vmatprep.mubr.f32.mxu0 0.0
  %3277 = vmatmul.mubr.f32.gmra.mxu0 %v3125
  %v3278 = vpop.f32.mrf.mxu0
  %v3279 = vadd.f32 0.0, %v3278
  %v3280 = vpop.f32.mrf.mxu0
  %3281 = vdwg.mxu0
  %v3282 = vsel %vm464, %v3194, -inf
  %v3283 = vsel %vm464, %v3204, -inf
  %v3284 = vmax.f32 %v3282, %v3283
  %v3285 = vsel %vm464, %v3214, -inf
  %v3286 = vmax.f32 %v3284, %v3285
  %v3287 = vsel %vm464, %v3199, -inf
  %v3288 = vsel %vm464, %v3209, -inf
  %v3289 = vmax.f32 %v3287, %v3288
  %v3290 = vsel %vm464, %v3219, -inf
  %v3291 = vmax.f32 %v3289, %v3290
  %v3292 = vsel %vm464, %v3224, -inf
  %v3293 = vsel %vm464, %v3234, -inf
  %v3294 = vmax.f32 %v3292, %v3293
  %v3295 = vsel %vm464, %v3244, -inf
  %v3296 = vmax.f32 %v3294, %v3295
  %v3297 = vsel %vm464, %v3229, -inf
  %v3298 = vsel %vm464, %v3239, -inf
  %v3299 = vmax.f32 %v3297, %v3298
  %v3300 = vsel %vm464, %v3249, -inf
  %v3301 = vmax.f32 %v3299, %v3300
  %v3302 = vsel %vm464, %v3254, -inf
  %v3303 = vsel %vm464, %v3264, -inf
  %v3304 = vmax.f32 %v3302, %v3303
  %v3305 = vsel %vm464, %v3274, -inf
  %v3306 = vmax.f32 %v3304, %v3305
  %v3307 = vsel %vm464, %v3259, -inf
  %v3308 = vsel %vm464, %v3269, -inf
  %v3309 = vmax.f32 %v3307, %v3308
  %v3310 = vsel %vm464, %v3279, -inf
  %v3311 = vmax.f32 %v3309, %v3310
  %v3312 = vsub.f32 %v3194, %v3286
  %v3313 = vsub.f32 %v3199, %v3291
  %v3314 = vsub.f32 %v3204, %v3286
  %v3315 = vsub.f32 %v3209, %v3291
  %v3316 = vsub.f32 %v3214, %v3286
  %v3317 = vsub.f32 %v3219, %v3291
  %v3318 = vsub.f32 %v3224, %v3296
  %v3319 = vsub.f32 %v3229, %v3301
  %v3320 = vsub.f32 %v3234, %v3296
  %v3321 = vsub.f32 %v3239, %v3301
  %v3322 = vsub.f32 %v3244, %v3296
  %v3323 = vsub.f32 %v3249, %v3301
  %v3324 = vsub.f32 %v3254, %v3306
  %v3325 = vsub.f32 %v3259, %v3311
  %v3326 = vsub.f32 %v3264, %v3306
  %v3327 = vsub.f32 %v3269, %v3311
  %v3328 = vsub.f32 %v3274, %v3306
  %v3329 = vsub.f32 %v3279, %v3311
  %v3330 = vmul.f32 %v3312, 1.442695
  %v3331 = vpow.pop %v3330
  %v3332 = vmul.f32 %v3313, 1.442695
  %v3333 = vpow.pop %v3332
  %v3334 = vmul.f32 %v3314, 1.442695
  %v3335 = vpow.pop %v3334
  %v3336 = vmul.f32 %v3315, 1.442695
  %v3337 = vpow.pop %v3336
  %v3338 = vmul.f32 %v3316, 1.442695
  %v3339 = vpow.pop %v3338
  %v3340 = vmul.f32 %v3317, 1.442695
  %v3341 = vpow.pop %v3340
  %v3342 = vmul.f32 %v3318, 1.442695
  %v3343 = vpow.pop %v3342
  %v3344 = vmul.f32 %v3319, 1.442695
  %v3345 = vpow.pop %v3344
  %v3346 = vmul.f32 %v3320, 1.442695
  %v3347 = vpow.pop %v3346
  %v3348 = vmul.f32 %v3321, 1.442695
  %v3349 = vpow.pop %v3348
  %v3350 = vmul.f32 %v3322, 1.442695
  %v3351 = vpow.pop %v3350
  %v3352 = vmul.f32 %v3323, 1.442695
  %v3353 = vpow.pop %v3352
  %v3354 = vmul.f32 %v3324, 1.442695
  %v3355 = vpow.pop %v3354
  %v3356 = vmul.f32 %v3325, 1.442695
  %v3357 = vpow.pop %v3356
  %v3358 = vmul.f32 %v3326, 1.442695
  %v3359 = vpow.pop %v3358
  %v3360 = vmul.f32 %v3327, 1.442695
  %v3361 = vpow.pop %v3360
  %v3362 = vmul.f32 %v3328, 1.442695
  %v3363 = vpow.pop %v3362
  %v3364 = vmul.f32 %v3329, 1.442695
  %v3365 = vpow.pop %v3364
  %v3366 = vsel %vm464, %v3331, 0.0
  %v3367 = vsel %vm464, %v3335, 0.0
  %v3368 = vadd.f32 %v3366, %v3367
  %v3369 = vsel %vm464, %v3339, 0.0
  %v3370 = vadd.f32 %v3368, %v3369
  %v3371 = vsel %vm464, %v3333, 0.0
  %v3372 = vsel %vm464, %v3337, 0.0
  %v3373 = vadd.f32 %v3371, %v3372
  %v3374 = vsel %vm464, %v3341, 0.0
  %v3375 = vadd.f32 %v3373, %v3374
  %v3376 = vsel %vm464, %v3343, 0.0
  %v3377 = vsel %vm464, %v3347, 0.0
  %v3378 = vadd.f32 %v3376, %v3377
  %v3379 = vsel %vm464, %v3351, 0.0
  %v3380 = vadd.f32 %v3378, %v3379
  %v3381 = vsel %vm464, %v3345, 0.0
  %v3382 = vsel %vm464, %v3349, 0.0
  %v3383 = vadd.f32 %v3381, %v3382
  %v3384 = vsel %vm464, %v3353, 0.0
  %v3385 = vadd.f32 %v3383, %v3384
  %v3386 = vsel %vm464, %v3355, 0.0
  %v3387 = vsel %vm464, %v3359, 0.0
  %v3388 = vadd.f32 %v3386, %v3387
  %v3389 = vsel %vm464, %v3363, 0.0
  %v3390 = vadd.f32 %v3388, %v3389
  %v3391 = vsel %vm464, %v3357, 0.0
  %v3392 = vsel %vm464, %v3361, 0.0
  %v3393 = vadd.f32 %v3391, %v3392
  %v3394 = vsel %vm464, %v3365, 0.0
  %v3395 = vadd.f32 %v3393, %v3394
  %v3396 = vrcp.pop %v3370
  %v3397 = vmul.f32 1.0, %v3396
  %v3398 = vrcp.pop %v3375
  %v3399 = vmul.f32 1.0, %v3398
  %v3400 = vrcp.pop %v3380
  %v3401 = vmul.f32 1.0, %v3400
  %v3402 = vrcp.pop %v3385
  %v3403 = vmul.f32 1.0, %v3402
  %v3404 = vrcp.pop %v3390
  %v3405 = vmul.f32 1.0, %v3404
  %v3406 = vrcp.pop %v3395
  %v3407 = vmul.f32 1.0, %v3406
  %v3408 = vmul.f32 %v3331, %v3397
  %v3409 = vmul.f32 %v3333, %v3399
  %v3410 = vmul.f32 %v3335, %v3397
  %v3411 = vmul.f32 %v3337, %v3399
  %v3412 = vmul.f32 %v3339, %v3397
  %v3413 = vmul.f32 %v3341, %v3399
  %v3414 = vmul.f32 %v3343, %v3401
  %v3415 = vmul.f32 %v3345, %v3403
  %v3416 = vmul.f32 %v3347, %v3401
  %v3417 = vmul.f32 %v3349, %v3403
  %v3418 = vmul.f32 %v3351, %v3401
  %v3419 = vmul.f32 %v3353, %v3403
  %v3420 = vmul.f32 %v3355, %v3405
  %v3421 = vmul.f32 %v3357, %v3407
  %v3422 = vmul.f32 %v3359, %v3405
  %v3423 = vmul.f32 %v3361, %v3407
  %v3424 = vmul.f32 %v3363, %v3405
  %v3425 = vmul.f32 %v3365, %v3407
  %v3427 = vsel %vm464, %v3408, 0
  %v3430 = vsel %vm464, %v3409, 0
  %v3433 = vsel %vm464, %v3410, 0
  %v3436 = vsel %vm464, %v3411, 0
  %v3439 = vsel %vm464, %v3412, 0
  %v3442 = vsel %vm464, %v3413, 0
  %v3445 = vsel %vm464, %v3414, 0
  %v3448 = vsel %vm464, %v3415, 0
  %v3451 = vsel %vm464, %v3416, 0
  %v3454 = vsel %vm464, %v3417, 0
  %v3457 = vsel %vm464, %v3418, 0
  %v3460 = vsel %vm464, %v3419, 0
  %v3463 = vsel %vm464, %v3420, 0
  %v3466 = vsel %vm464, %v3421, 0
  %v3469 = vsel %vm464, %v3422, 0
  %v3472 = vsel %vm464, %v3423, 0
  %v3475 = vsel %vm464, %v3424, 0
  %v3478 = vsel %vm464, %v3425, 0
  %3480 = vmatprep.subr.mxu0 0.0
  %3481 = vmatpush1.msra.mxu0 0.0
  %3482 = vmatprep.subr.mxu0 0.0
  %3483 = vmatpush1.msra.mxu0 0.0
  %3484 = vmatprep.subr.mxu0 0.0
  %3485 = vmatpush1.msra.mxu0 0.0
  %3486 = vmatprep.subr.mxu0 0.0
  %3487 = vmatpush1.msra.mxu0 0.0
  %3488 = vmatprep.subr.mxu0 0.0
  %3489 = vmatpush1.msra.mxu0 0.0
  %3490 = vmatprep.subr.mxu0 0.0
  %3491 = vmatpush1.msra.mxu0 0.0
  %3492 = vmatprep.subr.mxu0 0.0
  %3493 = vmatpush1.msra.mxu0 0.0
  %3494 = vmatprep.subr.mxu0 0.0
  %3495 = vmatpush1.msra.mxu0 0.0
  %3496 = vmatprep.subr.mxu0 0.0
  %3497 = vmatpush1.msra.mxu0 0.0
  %3498 = vmatprep.subr.mxu0 0.0
  %3499 = vmatpush1.msra.mxu0 0.0
  %3500 = vmatprep.subr.mxu0 0.0
  %3501 = vmatpush1.msra.mxu0 0.0
  %3502 = vmatprep.subr.mxu0 0.0
  %3503 = vmatpush1.msra.mxu0 0.0
  %3504 = vmatprep.subr.mxu0 0.0
  %3505 = vmatpush1.msra.mxu0 0.0
  %3506 = vmatprep.subr.mxu0 0.0
  %3507 = vmatpush1.msra.mxu0 0.0
  %3508 = vmatprep.subr.mxu0 0.0
  %3509 = vmatpush1.msra.mxu0 0.0
  %3510 = vmatprep.subr.mxu0 0.0
  %3511 = vmatpush1.msra.mxu0 %v665
  %3512 = vmatprep.subr.mxu0 0.0
  %3513 = vmatpush2.msra.mxu0 0.0
  %3514 = vmatprep.subr.mxu0 0.0
  %3515 = vmatpush2.msra.mxu0 0.0
  %3516 = vmatprep.subr.mxu0 0.0
  %3517 = vmatpush2.msra.mxu0 0.0
  %3518 = vmatprep.subr.mxu0 0.0
  %3519 = vmatpush2.msra.mxu0 0.0
  %3520 = vmatprep.subr.mxu0 0.0
  %3521 = vmatpush2.msra.mxu0 0.0
  %3522 = vmatprep.subr.mxu0 0.0
  %3523 = vmatpush2.msra.mxu0 0.0
  %3524 = vmatprep.subr.mxu0 0.0
  %3525 = vmatpush2.msra.mxu0 0.0
  %3526 = vmatprep.subr.mxu0 0.0
  %3527 = vmatpush2.msra.mxu0 0.0
  %3528 = vmatprep.subr.mxu0 0.0
  %3529 = vmatpush2.msra.mxu0 0.0
  %3530 = vmatprep.subr.mxu0 0.0
  %3531 = vmatpush2.msra.mxu0 0.0
  %3532 = vmatprep.subr.mxu0 0.0
  %3533 = vmatpush2.msra.mxu0 0.0
  %3534 = vmatprep.subr.mxu0 0.0
  %3535 = vmatpush2.msra.mxu0 0.0
  %3536 = vmatprep.subr.mxu0 0.0
  %3537 = vmatpush2.msra.mxu0 0.0
  %3538 = vmatprep.subr.mxu0 0.0
  %3539 = vmatpush2.msra.mxu0 0.0
  %3540 = vmatprep.subr.mxu0 0.0
  %3541 = vmatpush2.msra.mxu0 0.0
  %3542 = vmatprep.subr.mxu0 0.0
  %3543 = vmatpush2.msra.mxu0 0.0
  %3544 = vmatprep.mubr.f32.mxu0 0.0
  %3545 = vmatmul.mubr.f32.gmra.mxu0 %v3427
  %v3546 = vpop.f32.mrf.mxu0
  %v3547 = vadd.f32 0.0, %v3546
  %v3548 = vpop.f32.mrf.mxu0
  %3549 = vmatprep.mubr.f32.mxu0 0.0
  %3550 = vmatmul.mubr.f32.gmra.mxu0 %v3430
  %v3551 = vpop.f32.mrf.mxu0
  %v3552 = vadd.f32 0.0, %v3551
  %v3553 = vpop.f32.mrf.mxu0
  %3554 = vmatprep.mubr.f32.mxu0 0.0
  %3555 = vmatmul.mubr.f32.gmra.mxu0 %v3433
  %v3556 = vpop.f32.mrf.mxu0
  %v3557 = vadd.f32 0.0, %v3556
  %v3558 = vpop.f32.mrf.mxu0
  %3559 = vmatprep.mubr.f32.mxu0 0.0
  %3560 = vmatmul.mubr.f32.gmra.mxu0 %v3436
  %v3561 = vpop.f32.mrf.mxu0
  %v3562 = vadd.f32 0.0, %v3561
  %v3563 = vpop.f32.mrf.mxu0
  %3564 = vmatprep.mubr.f32.mxu0 0.0
  %3565 = vmatmul.mubr.f32.gmra.mxu0 %v3439
  %v3566 = vpop.f32.mrf.mxu0
  %v3567 = vadd.f32 0.0, %v3566
  %v3568 = vpop.f32.mrf.mxu0
  %3569 = vmatprep.mubr.f32.mxu0 0.0
  %3570 = vmatmul.mubr.f32.gmra.mxu0 %v3442
  %v3571 = vpop.f32.mrf.mxu0
  %v3572 = vadd.f32 0.0, %v3571
  %v3573 = vpop.f32.mrf.mxu0
  %3574 = vmatprep.mubr.f32.mxu0 0.0
  %3575 = vmatmul.mubr.f32.gmra.mxu0 %v3445
  %v3576 = vpop.f32.mrf.mxu0
  %v3577 = vadd.f32 0.0, %v3576
  %v3578 = vpop.f32.mrf.mxu0
  %3579 = vmatprep.mubr.f32.mxu0 0.0
  %3580 = vmatmul.mubr.f32.gmra.mxu0 %v3448
  %v3581 = vpop.f32.mrf.mxu0
  %v3582 = vadd.f32 0.0, %v3581
  %v3583 = vpop.f32.mrf.mxu0
  %3584 = vmatprep.mubr.f32.mxu0 0.0
  %3585 = vmatmul.mubr.f32.gmra.mxu0 %v3451
  %v3586 = vpop.f32.mrf.mxu0
  %v3587 = vadd.f32 0.0, %v3586
  %v3588 = vpop.f32.mrf.mxu0
  %3589 = vmatprep.mubr.f32.mxu0 0.0
  %3590 = vmatmul.mubr.f32.gmra.mxu0 %v3454
  %v3591 = vpop.f32.mrf.mxu0
  %v3592 = vadd.f32 0.0, %v3591
  %v3593 = vpop.f32.mrf.mxu0
  %3594 = vmatprep.mubr.f32.mxu0 0.0
  %3595 = vmatmul.mubr.f32.gmra.mxu0 %v3457
  %v3596 = vpop.f32.mrf.mxu0
  %v3597 = vadd.f32 0.0, %v3596
  %v3598 = vpop.f32.mrf.mxu0
  %3599 = vmatprep.mubr.f32.mxu0 0.0
  %3600 = vmatmul.mubr.f32.gmra.mxu0 %v3460
  %v3601 = vpop.f32.mrf.mxu0
  %v3602 = vadd.f32 0.0, %v3601
  %v3603 = vpop.f32.mrf.mxu0
  %3604 = vmatprep.mubr.f32.mxu0 0.0
  %3605 = vmatmul.mubr.f32.gmra.mxu0 %v3463
  %v3606 = vpop.f32.mrf.mxu0
  %v3607 = vadd.f32 0.0, %v3606
  %v3608 = vpop.f32.mrf.mxu0
  %3609 = vmatprep.mubr.f32.mxu0 0.0
  %3610 = vmatmul.mubr.f32.gmra.mxu0 %v3466
  %v3611 = vpop.f32.mrf.mxu0
  %v3612 = vadd.f32 0.0, %v3611
  %v3613 = vpop.f32.mrf.mxu0
  %3614 = vmatprep.mubr.f32.mxu0 0.0
  %3615 = vmatmul.mubr.f32.gmra.mxu0 %v3469
  %v3616 = vpop.f32.mrf.mxu0
  %v3617 = vadd.f32 0.0, %v3616
  %v3618 = vpop.f32.mrf.mxu0
  %3619 = vmatprep.mubr.f32.mxu0 0.0
  %3620 = vmatmul.mubr.f32.gmra.mxu0 %v3472
  %v3621 = vpop.f32.mrf.mxu0
  %v3622 = vadd.f32 0.0, %v3621
  %v3623 = vpop.f32.mrf.mxu0
  %3624 = vmatprep.mubr.f32.mxu0 0.0
  %3625 = vmatmul.mubr.f32.gmra.mxu0 %v3475
  %v3626 = vpop.f32.mrf.mxu0
  %v3627 = vadd.f32 0.0, %v3626
  %v3628 = vpop.f32.mrf.mxu0
  %3629 = vmatprep.mubr.f32.mxu0 0.0
  %3630 = vmatmul.mubr.f32.gmra.mxu0 %v3478
  %v3631 = vpop.f32.mrf.mxu0
  %v3632 = vadd.f32 0.0, %v3631
  %v3633 = vpop.f32.mrf.mxu0
  %3634 = vdwg.mxu0
  %v3635 = vmul.f32 %v3547, %v2999
  %v3636 = vmul.f32 %v3552, %v3005
  %v3637 = vmul.f32 %v3557, %v3011
  %v3638 = vmul.f32 %v3562, %v3017
  %v3639 = vmul.f32 %v3567, %v3023
  %v3640 = vmul.f32 %v3572, %v3029
  %v3641 = vmul.f32 %v3577, %v2999
  %v3642 = vmul.f32 %v3582, %v3005
  %v3643 = vmul.f32 %v3587, %v3011
  %v3644 = vmul.f32 %v3592, %v3017
  %v3645 = vmul.f32 %v3597, %v3023
  %v3646 = vmul.f32 %v3602, %v3029
  %v3647 = vmul.f32 %v3607, %v2999
  %v3648 = vmul.f32 %v3612, %v3005
  %v3649 = vmul.f32 %v3617, %v3011
  %v3650 = vmul.f32 %v3622, %v3017
  %v3651 = vmul.f32 %v3627, %v3023
  %v3652 = vmul.f32 %v3632, %v3029
  %v3653 = vsel %vm93, %v3635, 0.0
  %v3654 = vsel %vm93, %v3637, 0.0
  %v3655 = vadd.f32 %v3653, %v3654
  %v3656 = vsel %vm93, %v3639, 0.0
  %v3657 = vadd.f32 %v3655, %v3656
  %v3658 = vsel %vm93, %v3636, 0.0
  %v3659 = vsel %vm93, %v3638, 0.0
  %v3660 = vadd.f32 %v3658, %v3659
  %v3661 = vsel %vm93, %v3640, 0.0
  %v3662 = vadd.f32 %v3660, %v3661
  %v3663 = vsel %vm93, %v3641, 0.0
  %v3664 = vsel %vm93, %v3643, 0.0
  %v3665 = vadd.f32 %v3663, %v3664
  %v3666 = vsel %vm93, %v3645, 0.0
  %v3667 = vadd.f32 %v3665, %v3666
  %v3668 = vsel %vm93, %v3642, 0.0
  %v3669 = vsel %vm93, %v3644, 0.0
  %v3670 = vadd.f32 %v3668, %v3669
  %v3671 = vsel %vm93, %v3646, 0.0
  %v3672 = vadd.f32 %v3670, %v3671
  %v3673 = vsel %vm93, %v3647, 0.0
  %v3674 = vsel %vm93, %v3649, 0.0
  %v3675 = vadd.f32 %v3673, %v3674
  %v3676 = vsel %vm93, %v3651, 0.0
  %v3677 = vadd.f32 %v3675, %v3676
  %v3678 = vsel %vm93, %v3648, 0.0
  %v3679 = vsel %vm93, %v3650, 0.0
  %v3680 = vadd.f32 %v3678, %v3679
  %v3681 = vsel %vm93, %v3652, 0.0
  %v3682 = vadd.f32 %v3680, %v3681
  %s3683 = scalar_lea.vmem %s3, 128
  %v3684 = vld [vmem:[%s3683] sm:$0xff]
  %v3685 = vld [vmem:[%s3683 + $0x8] sm:$0xff]
  %v3686 = vld [vmem:[%s3683 + $0x10] sm:$0xff]
  %v3687 = vld [vmem:[%s3683 + $0x18] sm:$0xff]
  %v3688 = vld [vmem:[%s3683 + $0x20] sm:$0xff]
  %v3689 = vld [vmem:[%s3683 + $0x28] sm:$0xff]
  %v3690 = vld [vmem:[%s3683 + $0x30] sm:$0xff]
  %v3691 = vld [vmem:[%s3683 + $0x38] sm:$0xff]
  %s3692 = scalar_lea.vmem %s4, 2
  %v3693 = vld [vmem:[%s3692] sm:$0x1]
  %v3695 = vlaneseq
  %v3696 = vshrl.u32 %v3695, 7
  %v3697 = vsub.s32 0, %v3696
  %v3698 = vrot.slane %v3693, %v3697
  %v3701 = vsel %vm93, %v3657, 0
  %v3704 = vsel %vm93, %v3662, 0
  %v3707 = vsel %vm93, %v3667, 0
  %v3710 = vsel %vm93, %v3672, 0
  %v3713 = vsel %vm93, %v3677, 0
  %v3716 = vsel %vm93, %v3682, 0
  %3718 = vmatprep.subr.mxu0 0.0
  %3719 = vmatpush1.msra.mxu0 0.0
  %3720 = vmatprep.subr.mxu0 0.0
  %3721 = vmatpush1.msra.mxu0 0.0
  %3722 = vmatprep.subr.mxu0 0.0
  %3723 = vmatpush1.msra.mxu0 0.0
  %3724 = vmatprep.subr.mxu0 0.0
  %3725 = vmatpush1.msra.mxu0 0.0
  %3726 = vmatprep.subr.mxu0 0.0
  %3727 = vmatpush1.msra.mxu0 0.0
  %3728 = vmatprep.subr.mxu0 0.0
  %3729 = vmatpush1.msra.mxu0 0.0
  %3730 = vmatprep.subr.mxu0 0.0
  %3731 = vmatpush1.msra.mxu0 0.0
  %3732 = vmatprep.subr.mxu0 0.0
  %3733 = vmatpush1.msra.mxu0 0.0
  %3734 = vmatprep.subr.mxu0 0.0
  %3735 = vmatpush1.msra.mxu0 %v3691
  %3736 = vmatprep.subr.mxu0 0.0
  %3737 = vmatpush1.msra.mxu0 %v3690
  %3738 = vmatprep.subr.mxu0 0.0
  %3739 = vmatpush1.msra.mxu0 %v3689
  %3740 = vmatprep.subr.mxu0 0.0
  %3741 = vmatpush1.msra.mxu0 %v3688
  %3742 = vmatprep.subr.mxu0 0.0
  %3743 = vmatpush1.msra.mxu0 %v3687
  %3744 = vmatprep.subr.mxu0 0.0
  %3745 = vmatpush1.msra.mxu0 %v3686
  %3746 = vmatprep.subr.mxu0 0.0
  %3747 = vmatpush1.msra.mxu0 %v3685
  %3748 = vmatprep.subr.mxu0 0.0
  %3749 = vmatpush1.msra.mxu0 %v3684
  %3750 = vmatprep.subr.mxu0 0.0
  %3751 = vmatpush2.msra.mxu0 0.0
  %3752 = vmatprep.subr.mxu0 0.0
  %3753 = vmatpush2.msra.mxu0 0.0
  %3754 = vmatprep.subr.mxu0 0.0
  %3755 = vmatpush2.msra.mxu0 0.0
  %3756 = vmatprep.subr.mxu0 0.0
  %3757 = vmatpush2.msra.mxu0 0.0
  %3758 = vmatprep.subr.mxu0 0.0
  %3759 = vmatpush2.msra.mxu0 0.0
  %3760 = vmatprep.subr.mxu0 0.0
  %3761 = vmatpush2.msra.mxu0 0.0
  %3762 = vmatprep.subr.mxu0 0.0
  %3763 = vmatpush2.msra.mxu0 0.0
  %3764 = vmatprep.subr.mxu0 0.0
  %3765 = vmatpush2.msra.mxu0 0.0
  %3766 = vmatprep.subr.mxu0 0.0
  %3767 = vmatpush2.msra.mxu0 0.0
  %3768 = vmatprep.subr.mxu0 0.0
  %3769 = vmatpush2.msra.mxu0 0.0
  %3770 = vmatprep.subr.mxu0 0.0
  %3771 = vmatpush2.msra.mxu0 0.0
  %3772 = vmatprep.subr.mxu0 0.0
  %3773 = vmatpush2.msra.mxu0 0.0
  %3774 = vmatprep.subr.mxu0 0.0
  %3775 = vmatpush2.msra.mxu0 0.0
  %3776 = vmatprep.subr.mxu0 0.0
  %3777 = vmatpush2.msra.mxu0 0.0
  %3778 = vmatprep.subr.mxu0 0.0
  %3779 = vmatpush2.msra.mxu0 0.0
  %3780 = vmatprep.subr.mxu0 0.0
  %3781 = vmatpush2.msra.mxu0 0.0
  %3782 = vmatprep.mubr.f32.mxu0 0.0
  %3783 = vmatmul.mubr.f32.gmra.mxu0 %v3701
  %v3784 = vpop.f32.mrf.mxu0
  %v3785 = vadd.f32 %v3698, %v3784
  %v3786 = vpop.f32.mrf.mxu0
  %3787 = vmatprep.mubr.f32.mxu0 0.0
  %3788 = vmatmul.mubr.f32.gmra.mxu0 %v3704
  %v3789 = vpop.f32.mrf.mxu0
  %v3790 = vadd.f32 %v3698, %v3789
  %v3791 = vpop.f32.mrf.mxu0
  %3792 = vmatprep.mubr.f32.mxu0 0.0
  %3793 = vmatmul.mubr.f32.gmra.mxu0 %v3707
  %v3794 = vpop.f32.mrf.mxu0
  %v3795 = vadd.f32 %v3698, %v3794
  %v3796 = vpop.f32.mrf.mxu0
  %3797 = vmatprep.mubr.f32.mxu0 0.0
  %3798 = vmatmul.mubr.f32.gmra.mxu0 %v3710
  %v3799 = vpop.f32.mrf.mxu0
  %v3800 = vadd.f32 %v3698, %v3799
  %v3801 = vpop.f32.mrf.mxu0
  %3802 = vmatprep.mubr.f32.mxu0 0.0
  %3803 = vmatmul.mubr.f32.gmra.mxu0 %v3713
  %v3804 = vpop.f32.mrf.mxu0
  %v3805 = vadd.f32 %v3698, %v3804
  %v3806 = vpop.f32.mrf.mxu0
  %3807 = vmatprep.mubr.f32.mxu0 0.0
  %3808 = vmatmul.mubr.f32.gmra.mxu0 %v3716
  %v3809 = vpop.f32.mrf.mxu0
  %v3810 = vadd.f32 %v3698, %v3809
  %v3811 = vpop.f32.mrf.mxu0
  %3812 = vdwg.mxu0
  %v3813 = vadd.f32 %v2876, %v3785
  %v3814 = vadd.f32 %v2877, %v3790
  %v3815 = vadd.f32 %v2878, %v3795
  %v3816 = vadd.f32 %v2879, %v3800
  %v3817 = vadd.f32 %v2880, %v3805
  %v3818 = vadd.f32 %v2881, %v3810
  %s3819 = scalar_lea.vmem %s9, 2
  %v3820 = vld [vmem:[%s3819] sm:$0x1]
  %s3821 = scalar_lea.vmem %s10, 2
  %v3822 = vld [vmem:[%s3821] sm:$0x1]
  %v3823 = vsel %vm93, %v3813, 0.0
  %3824 = vadd.xlane.f32.xlu0 %v3823
  %v3825 = vpop.xlane.xlu0 %3824
  %v3826 = vsel %vm93, %v3814, 0.0
  %3827 = vadd.xlane.f32.xlu0 %v3826
  %v3828 = vpop.xlane.xlu0 %3827
  %v3829 = vsel %vm93, %v3815, 0.0
  %3830 = vadd.xlane.f32.xlu0 %v3829
  %v3831 = vpop.xlane.xlu0 %3830
  %v3832 = vsel %vm93, %v3816, 0.0
  %3833 = vadd.xlane.f32.xlu0 %v3832
  %v3834 = vpop.xlane.xlu0 %3833
  %v3835 = vsel %vm93, %v3817, 0.0
  %3836 = vadd.xlane.f32.xlu0 %v3835
  %v3837 = vpop.xlane.xlu0 %3836
  %v3838 = vsel %vm93, %v3818, 0.0
  %3839 = vadd.xlane.f32.xlu0 %v3838
  %v3840 = vpop.xlane.xlu0 %3839
  %v3841 = vmul.f32 %v3825, %v1024
  %v3842 = vmul.f32 %v3828, %v1024
  %v3843 = vmul.f32 %v3831, %v1024
  %v3844 = vmul.f32 %v3834, %v1024
  %v3845 = vmul.f32 %v3837, %v1024
  %v3846 = vmul.f32 %v3840, %v1024
  %v3847 = vsub.f32 %v3813, %v3841
  %v3848 = vsub.f32 %v3814, %v3842
  %v3849 = vsub.f32 %v3815, %v3843
  %v3850 = vsub.f32 %v3816, %v3844
  %v3851 = vsub.f32 %v3817, %v3845
  %v3852 = vsub.f32 %v3818, %v3846
  %v3853 = vmul.f32 %v3847, %v3847
  %v3854 = vmul.f32 %v3848, %v3848
  %v3855 = vmul.f32 %v3849, %v3849
  %v3856 = vmul.f32 %v3850, %v3850
  %v3857 = vmul.f32 %v3851, %v3851
  %v3858 = vmul.f32 %v3852, %v3852
  %v3859 = vsel %vm93, %v3853, 0.0
  %3860 = vadd.xlane.f32.xlu0 %v3859
  %v3861 = vpop.xlane.xlu0 %3860
  %v3862 = vsel %vm93, %v3854, 0.0
  %3863 = vadd.xlane.f32.xlu0 %v3862
  %v3864 = vpop.xlane.xlu0 %3863
  %v3865 = vsel %vm93, %v3855, 0.0
  %3866 = vadd.xlane.f32.xlu0 %v3865
  %v3867 = vpop.xlane.xlu0 %3866
  %v3868 = vsel %vm93, %v3856, 0.0
  %3869 = vadd.xlane.f32.xlu0 %v3868
  %v3870 = vpop.xlane.xlu0 %3869
  %v3871 = vsel %vm93, %v3857, 0.0
  %3872 = vadd.xlane.f32.xlu0 %v3871
  %v3873 = vpop.xlane.xlu0 %3872
  %v3874 = vsel %vm93, %v3858, 0.0
  %3875 = vadd.xlane.f32.xlu0 %v3874
  %v3876 = vpop.xlane.xlu0 %3875
  %v3877 = vmul.f32 %v3861, %v1024
  %v3878 = vmul.f32 %v3864, %v1024
  %v3879 = vmul.f32 %v3867, %v1024
  %v3880 = vmul.f32 %v3870, %v1024
  %v3881 = vmul.f32 %v3873, %v1024
  %v3882 = vmul.f32 %v3876, %v1024
  %v3883 = vadd.f32 %v3877, 1e-05
  %v3884 = vadd.f32 %v3878, 1e-05
  %v3885 = vadd.f32 %v3879, 1e-05
  %v3886 = vadd.f32 %v3880, 1e-05
  %v3887 = vadd.f32 %v3881, 1e-05
  %v3888 = vadd.f32 %v3882, 1e-05
  %v3889 = vrsqrt.pop %v3883
  %v3890 = vrsqrt.pop %v3884
  %v3891 = vrsqrt.pop %v3885
  %v3892 = vrsqrt.pop %v3886
  %v3893 = vrsqrt.pop %v3887
  %v3894 = vrsqrt.pop %v3888
  %v3895 = vmul.f32 %v3847, %v3889
  %v3896 = vmul.f32 %v3848, %v3890
  %v3897 = vmul.f32 %v3849, %v3891
  %v3898 = vmul.f32 %v3850, %v3892
  %v3899 = vmul.f32 %v3851, %v3893
  %v3900 = vmul.f32 %v3852, %v3894
  %v3902 = vlaneseq
  %v3903 = vshrl.u32 %v3902, 7
  %v3904 = vsub.s32 0, %v3903
  %v3905 = vrot.slane %v3820, %v3904
  %v3907 = vmul.f32 %v3895, %v3905
  %v3908 = vmul.f32 %v3896, %v3905
  %v3909 = vmul.f32 %v3897, %v3905
  %v3910 = vmul.f32 %v3898, %v3905
  %v3911 = vmul.f32 %v3899, %v3905
  %v3912 = vmul.f32 %v3900, %v3905
  %v3914 = vlaneseq
  %v3915 = vshrl.u32 %v3914, 7
  %v3916 = vsub.s32 0, %v3915
  %v3917 = vrot.slane %v3822, %v3916
  %v3919 = vadd.f32 %v3907, %v3917
  %v3920 = vadd.f32 %v3908, %v3917
  %v3921 = vadd.f32 %v3909, %v3917
  %v3922 = vadd.f32 %v3910, %v3917
  %v3923 = vadd.f32 %v3911, %v3917
  %v3924 = vadd.f32 %v3912, %v3917
  %s3925 = scalar_lea.vmem %s5, 128
  %v3926 = vld [vmem:[%s3925] sm:$0xff]
  %v3927 = vld [vmem:[%s3925 + $0x8] sm:$0xff]
  %v3928 = vld [vmem:[%s3925 + $0x10] sm:$0xff]
  %v3929 = vld [vmem:[%s3925 + $0x18] sm:$0xff]
  %v3930 = vld [vmem:[%s3925 + $0x20] sm:$0xff]
  %v3931 = vld [vmem:[%s3925 + $0x28] sm:$0xff]
  %v3932 = vld [vmem:[%s3925 + $0x30] sm:$0xff]
  %v3933 = vld [vmem:[%s3925 + $0x38] sm:$0xff]
  %s3934 = scalar_lea.vmem %s6, 2
  %v3935 = vld [vmem:[%s3934] sm:$0x1]
  %v3937 = vlaneseq
  %v3938 = vshrl.u32 %v3937, 7
  %v3939 = vsub.s32 0, %v3938
  %v3940 = vrot.slane %v3935, %v3939
  %v3943 = vsel %vm93, %v3919, 0
  %v3946 = vsel %vm93, %v3920, 0
  %v3949 = vsel %vm93, %v3921, 0
  %v3952 = vsel %vm93, %v3922, 0
  %v3955 = vsel %vm93, %v3923, 0
  %v3958 = vsel %vm93, %v3924, 0
  %3960 = vmatprep.subr.mxu0 0.0
  %3961 = vmatpush1.msra.mxu0 0.0
  %3962 = vmatprep.subr.mxu0 0.0
  %3963 = vmatpush1.msra.mxu0 0.0
  %3964 = vmatprep.subr.mxu0 0.0
  %3965 = vmatpush1.msra.mxu0 0.0
  %3966 = vmatprep.subr.mxu0 0.0
  %3967 = vmatpush1.msra.mxu0 0.0
  %3968 = vmatprep.subr.mxu0 0.0
  %3969 = vmatpush1.msra.mxu0 0.0
  %3970 = vmatprep.subr.mxu0 0.0
  %3971 = vmatpush1.msra.mxu0 0.0
  %3972 = vmatprep.subr.mxu0 0.0
  %3973 = vmatpush1.msra.mxu0 0.0
  %3974 = vmatprep.subr.mxu0 0.0
  %3975 = vmatpush1.msra.mxu0 0.0
  %3976 = vmatprep.subr.mxu0 0.0
  %3977 = vmatpush1.msra.mxu0 %v3933
  %3978 = vmatprep.subr.mxu0 0.0
  %3979 = vmatpush1.msra.mxu0 %v3932
  %3980 = vmatprep.subr.mxu0 0.0
  %3981 = vmatpush1.msra.mxu0 %v3931
  %3982 = vmatprep.subr.mxu0 0.0
  %3983 = vmatpush1.msra.mxu0 %v3930
  %3984 = vmatprep.subr.mxu0 0.0
  %3985 = vmatpush1.msra.mxu0 %v3929
  %3986 = vmatprep.subr.mxu0 0.0
  %3987 = vmatpush1.msra.mxu0 %v3928
  %3988 = vmatprep.subr.mxu0 0.0
  %3989 = vmatpush1.msra.mxu0 %v3927
  %3990 = vmatprep.subr.mxu0 0.0
  %3991 = vmatpush1.msra.mxu0 %v3926
  %3992 = vmatprep.subr.mxu0 0.0
  %3993 = vmatpush2.msra.mxu0 0.0
  %3994 = vmatprep.subr.mxu0 0.0
  %3995 = vmatpush2.msra.mxu0 0.0
  %3996 = vmatprep.subr.mxu0 0.0
  %3997 = vmatpush2.msra.mxu0 0.0
  %3998 = vmatprep.subr.mxu0 0.0
  %3999 = vmatpush2.msra.mxu0 0.0
  %4000 = vmatprep.subr.mxu0 0.0
  %4001 = vmatpush2.msra.mxu0 0.0
  %4002 = vmatprep.subr.mxu0 0.0
  %4003 = vmatpush2.msra.mxu0 0.0
  %4004 = vmatprep.subr.mxu0 0.0
  %4005 = vmatpush2.msra.mxu0 0.0
  %4006 = vmatprep.subr.mxu0 0.0
  %4007 = vmatpush2.msra.mxu0 0.0
  %4008 = vmatprep.subr.mxu0 0.0
  %4009 = vmatpush2.msra.mxu0 0.0
  %4010 = vmatprep.subr.mxu0 0.0
  %4011 = vmatpush2.msra.mxu0 0.0
  %4012 = vmatprep.subr.mxu0 0.0
  %4013 = vmatpush2.msra.mxu0 0.0
  %4014 = vmatprep.subr.mxu0 0.0
  %4015 = vmatpush2.msra.mxu0 0.0
  %4016 = vmatprep.subr.mxu0 0.0
  %4017 = vmatpush2.msra.mxu0 0.0
  %4018 = vmatprep.subr.mxu0 0.0
  %4019 = vmatpush2.msra.mxu0 0.0
  %4020 = vmatprep.subr.mxu0 0.0
  %4021 = vmatpush2.msra.mxu0 0.0
  %4022 = vmatprep.subr.mxu0 0.0
  %4023 = vmatpush2.msra.mxu0 0.0
  %4024 = vmatprep.mubr.f32.mxu0 0.0
  %4025 = vmatmul.mubr.f32.gmra.mxu0 %v3943
  %v4026 = vpop.f32.mrf.mxu0
  %v4027 = vadd.f32 %v3940, %v4026
  %v4028 = vpop.f32.mrf.mxu0
  %4029 = vmatprep.mubr.f32.mxu0 0.0
  %4030 = vmatmul.mubr.f32.gmra.mxu0 %v3946
  %v4031 = vpop.f32.mrf.mxu0
  %v4032 = vadd.f32 %v3940, %v4031
  %v4033 = vpop.f32.mrf.mxu0
  %4034 = vmatprep.mubr.f32.mxu0 0.0
  %4035 = vmatmul.mubr.f32.gmra.mxu0 %v3949
  %v4036 = vpop.f32.mrf.mxu0
  %v4037 = vadd.f32 %v3940, %v4036
  %v4038 = vpop.f32.mrf.mxu0
  %4039 = vmatprep.mubr.f32.mxu0 0.0
  %4040 = vmatmul.mubr.f32.gmra.mxu0 %v3952
  %v4041 = vpop.f32.mrf.mxu0
  %v4042 = vadd.f32 %v3940, %v4041
  %v4043 = vpop.f32.mrf.mxu0
  %4044 = vmatprep.mubr.f32.mxu0 0.0
  %4045 = vmatmul.mubr.f32.gmra.mxu0 %v3955
  %v4046 = vpop.f32.mrf.mxu0
  %v4047 = vadd.f32 %v3940, %v4046
  %v4048 = vpop.f32.mrf.mxu0
  %4049 = vmatprep.mubr.f32.mxu0 0.0
  %4050 = vmatmul.mubr.f32.gmra.mxu0 %v3958
  %v4051 = vpop.f32.mrf.mxu0
  %v4052 = vadd.f32 %v3940, %v4051
  %v4053 = vpop.f32.mrf.mxu0
  %4054 = vdwg.mxu0
  %v4055 = vmax.f32 %v4027, 0.0
  %v4056 = vmax.f32 %v4032, 0.0
  %v4057 = vmax.f32 %v4037, 0.0
  %v4058 = vmax.f32 %v4042, 0.0
  %v4059 = vmax.f32 %v4047, 0.0
  %v4060 = vmax.f32 %v4052, 0.0
  %s4061 = scalar_lea.vmem %s7, 256
  %v4062 = vld [vmem:[%s4061] sm:$0xff]
  %v4063 = vld [vmem:[%s4061 + $0x8] sm:$0xff]
  %v4064 = vld [vmem:[%s4061 + $0x10] sm:$0xff]
  %v4065 = vld [vmem:[%s4061 + $0x18] sm:$0xff]
  %v4066 = vld [vmem:[%s4061 + $0x20] sm:$0xff]
  %v4067 = vld [vmem:[%s4061 + $0x28] sm:$0xff]
  %v4068 = vld [vmem:[%s4061 + $0x30] sm:$0xff]
  %v4069 = vld [vmem:[%s4061 + $0x38] sm:$0xff]
  %v4070 = vld [vmem:[%s4061 + $0x40] sm:$0xff]
  %v4071 = vld [vmem:[%s4061 + $0x48] sm:$0xff]
  %v4072 = vld [vmem:[%s4061 + $0x50] sm:$0xff]
  %v4073 = vld [vmem:[%s4061 + $0x58] sm:$0xff]
  %v4074 = vld [vmem:[%s4061 + $0x60] sm:$0xff]
  %v4075 = vld [vmem:[%s4061 + $0x68] sm:$0xff]
  %v4076 = vld [vmem:[%s4061 + $0x70] sm:$0xff]
  %v4077 = vld [vmem:[%s4061 + $0x78] sm:$0xff]
  %s4078 = scalar_lea.vmem %s8, 2
  %v4079 = vld [vmem:[%s4078] sm:$0x1]
  %v4081 = vlaneseq
  %v4082 = vshrl.u32 %v4081, 7
  %v4083 = vsub.s32 0, %v4082
  %v4084 = vrot.slane %v4079, %v4083
  %4086 = vmatprep.subr.mxu0 0.0
  %4087 = vmatpush1.msra.mxu0 %v4077
  %4088 = vmatprep.subr.mxu0 0.0
  %4089 = vmatpush1.msra.mxu0 %v4076
  %4090 = vmatprep.subr.mxu0 0.0
  %4091 = vmatpush1.msra.mxu0 %v4075
  %4092 = vmatprep.subr.mxu0 0.0
  %4093 = vmatpush1.msra.mxu0 %v4074
  %4094 = vmatprep.subr.mxu0 0.0
  %4095 = vmatpush1.msra.mxu0 %v4073
  %4096 = vmatprep.subr.mxu0 0.0
  %4097 = vmatpush1.msra.mxu0 %v4072
  %4098 = vmatprep.subr.mxu0 0.0
  %4099 = vmatpush1.msra.mxu0 %v4071
  %4100 = vmatprep.subr.mxu0 0.0
  %4101 = vmatpush1.msra.mxu0 %v4070
  %4102 = vmatprep.subr.mxu0 0.0
  %4103 = vmatpush1.msra.mxu0 %v4069
  %4104 = vmatprep.subr.mxu0 0.0
  %4105 = vmatpush1.msra.mxu0 %v4068
  %4106 = vmatprep.subr.mxu0 0.0
  %4107 = vmatpush1.msra.mxu0 %v4067
  %4108 = vmatprep.subr.mxu0 0.0
  %4109 = vmatpush1.msra.mxu0 %v4066
  %4110 = vmatprep.subr.mxu0 0.0
  %4111 = vmatpush1.msra.mxu0 %v4065
  %4112 = vmatprep.subr.mxu0 0.0
  %4113 = vmatpush1.msra.mxu0 %v4064
  %4114 = vmatprep.subr.mxu0 0.0
  %4115 = vmatpush1.msra.mxu0 %v4063
  %4116 = vmatprep.subr.mxu0 0.0
  %4117 = vmatpush1.msra.mxu0 %v4062
  %4118 = vmatprep.subr.mxu0 0.0
  %4119 = vmatpush2.msra.mxu0 0.0
  %4120 = vmatprep.subr.mxu0 0.0
  %4121 = vmatpush2.msra.mxu0 0.0
  %4122 = vmatprep.subr.mxu0 0.0
  %4123 = vmatpush2.msra.mxu0 0.0
  %4124 = vmatprep.subr.mxu0 0.0
  %4125 = vmatpush2.msra.mxu0 0.0
  %4126 = vmatprep.subr.mxu0 0.0
  %4127 = vmatpush2.msra.mxu0 0.0
  %4128 = vmatprep.subr.mxu0 0.0
  %4129 = vmatpush2.msra.mxu0 0.0
  %4130 = vmatprep.subr.mxu0 0.0
  %4131 = vmatpush2.msra.mxu0 0.0
  %4132 = vmatprep.subr.mxu0 0.0
  %4133 = vmatpush2.msra.mxu0 0.0
  %4134 = vmatprep.subr.mxu0 0.0
  %4135 = vmatpush2.msra.mxu0 0.0
  %4136 = vmatprep.subr.mxu0 0.0
  %4137 = vmatpush2.msra.mxu0 0.0
  %4138 = vmatprep.subr.mxu0 0.0
  %4139 = vmatpush2.msra.mxu0 0.0
  %4140 = vmatprep.subr.mxu0 0.0
  %4141 = vmatpush2.msra.mxu0 0.0
  %4142 = vmatprep.subr.mxu0 0.0
  %4143 = vmatpush2.msra.mxu0 0.0
  %4144 = vmatprep.subr.mxu0 0.0
  %4145 = vmatpush2.msra.mxu0 0.0
  %4146 = vmatprep.subr.mxu0 0.0
  %4147 = vmatpush2.msra.mxu0 0.0
  %4148 = vmatprep.subr.mxu0 0.0
  %4149 = vmatpush2.msra.mxu0 0.0
  %4150 = vmatprep.mubr.f32.mxu0 0.0
  %4151 = vmatmul.mubr.f32.gmra.mxu0 %v4055
  %v4152 = vpop.f32.mrf.mxu0
  %v4153 = vadd.f32 %v4084, %v4152
  %v4154 = vpop.f32.mrf.mxu0
  %4155 = vmatprep.mubr.f32.mxu0 0.0
  %4156 = vmatmul.mubr.f32.gmra.mxu0 %v4056
  %v4157 = vpop.f32.mrf.mxu0
  %v4158 = vadd.f32 %v4084, %v4157
  %v4159 = vpop.f32.mrf.mxu0
  %4160 = vmatprep.mubr.f32.mxu0 0.0
  %4161 = vmatmul.mubr.f32.gmra.mxu0 %v4057
  %v4162 = vpop.f32.mrf.mxu0
  %v4163 = vadd.f32 %v4084, %v4162
  %v4164 = vpop.f32.mrf.mxu0
  %4165 = vmatprep.mubr.f32.mxu0 0.0
  %4166 = vmatmul.mubr.f32.gmra.mxu0 %v4058
  %v4167 = vpop.f32.mrf.mxu0
  %v4168 = vadd.f32 %v4084, %v4167
  %v4169 = vpop.f32.mrf.mxu0
  %4170 = vmatprep.mubr.f32.mxu0 0.0
  %4171 = vmatmul.mubr.f32.gmra.mxu0 %v4059
  %v4172 = vpop.f32.mrf.mxu0
  %v4173 = vadd.f32 %v4084, %v4172
  %v4174 = vpop.f32.mrf.mxu0
  %4175 = vmatprep.mubr.f32.mxu0 0.0
  %4176 = vmatmul.mubr.f32.gmra.mxu0 %v4060
  %v4177 = vpop.f32.mrf.mxu0
  %v4178 = vadd.f32 %v4084, %v4177
  %v4179 = vpop.f32.mrf.mxu0
  %4180 = vdwg.mxu0
  %v4181 = vadd.f32 %v3919, %v4153
  %v4182 = vadd.f32 %v3920, %v4158
  %v4183 = vadd.f32 %v3921, %v4163
  %v4184 = vadd.f32 %v3922, %v4168
  %v4185 = vadd.f32 %v3923, %v4173
  %v4186 = vadd.f32 %v3924, %v4178
  %s4187 = scalar_lea.vmem %s11, 2
  %v4188 = vld [vmem:[%s4187] sm:$0x1]
  %s4189 = scalar_lea.vmem %s12, 2
  %v4190 = vld [vmem:[%s4189] sm:$0x1]
  %v4191 = vsel %vm93, %v4181, 0.0
  %4192 = vadd.xlane.f32.xlu0 %v4191
  %v4193 = vpop.xlane.xlu0 %4192
  %v4194 = vsel %vm93, %v4182, 0.0
  %4195 = vadd.xlane.f32.xlu0 %v4194
  %v4196 = vpop.xlane.xlu0 %4195
  %v4197 = vsel %vm93, %v4183, 0.0
  %4198 = vadd.xlane.f32.xlu0 %v4197
  %v4199 = vpop.xlane.xlu0 %4198
  %v4200 = vsel %vm93, %v4184, 0.0
  %4201 = vadd.xlane.f32.xlu0 %v4200
  %v4202 = vpop.xlane.xlu0 %4201
  %v4203 = vsel %vm93, %v4185, 0.0
  %4204 = vadd.xlane.f32.xlu0 %v4203
  %v4205 = vpop.xlane.xlu0 %4204
  %v4206 = vsel %vm93, %v4186, 0.0
  %4207 = vadd.xlane.f32.xlu0 %v4206
  %v4208 = vpop.xlane.xlu0 %4207
  %v4209 = vmul.f32 %v4193, %v1024
  %v4210 = vmul.f32 %v4196, %v1024
  %v4211 = vmul.f32 %v4199, %v1024
  %v4212 = vmul.f32 %v4202, %v1024
  %v4213 = vmul.f32 %v4205, %v1024
  %v4214 = vmul.f32 %v4208, %v1024
  %v4215 = vsub.f32 %v4181, %v4209
  %v4216 = vsub.f32 %v4182, %v4210
  %v4217 = vsub.f32 %v4183, %v4211
  %v4218 = vsub.f32 %v4184, %v4212
  %v4219 = vsub.f32 %v4185, %v4213
  %v4220 = vsub.f32 %v4186, %v4214
  %v4221 = vmul.f32 %v4215, %v4215
  %v4222 = vmul.f32 %v4216, %v4216
  %v4223 = vmul.f32 %v4217, %v4217
  %v4224 = vmul.f32 %v4218, %v4218
  %v4225 = vmul.f32 %v4219, %v4219
  %v4226 = vmul.f32 %v4220, %v4220
  %v4227 = vsel %vm93, %v4221, 0.0
  %4228 = vadd.xlane.f32.xlu0 %v4227
  %v4229 = vpop.xlane.xlu0 %4228
  %v4230 = vsel %vm93, %v4222, 0.0
  %4231 = vadd.xlane.f32.xlu0 %v4230
  %v4232 = vpop.xlane.xlu0 %4231
  %v4233 = vsel %vm93, %v4223, 0.0
  %4234 = vadd.xlane.f32.xlu0 %v4233
  %v4235 = vpop.xlane.xlu0 %4234
  %v4236 = vsel %vm93, %v4224, 0.0
  %4237 = vadd.xlane.f32.xlu0 %v4236
  %v4238 = vpop.xlane.xlu0 %4237
  %v4239 = vsel %vm93, %v4225, 0.0
  %4240 = vadd.xlane.f32.xlu0 %v4239
  %v4241 = vpop.xlane.xlu0 %4240
  %v4242 = vsel %vm93, %v4226, 0.0
  %4243 = vadd.xlane.f32.xlu0 %v4242
  %v4244 = vpop.xlane.xlu0 %4243
  %v4245 = vmul.f32 %v4229, %v1024
  %v4246 = vmul.f32 %v4232, %v1024
  %v4247 = vmul.f32 %v4235, %v1024
  %v4248 = vmul.f32 %v4238, %v1024
  %v4249 = vmul.f32 %v4241, %v1024
  %v4250 = vmul.f32 %v4244, %v1024
  %v4251 = vadd.f32 %v4245, 1e-05
  %v4252 = vadd.f32 %v4246, 1e-05
  %v4253 = vadd.f32 %v4247, 1e-05
  %v4254 = vadd.f32 %v4248, 1e-05
  %v4255 = vadd.f32 %v4249, 1e-05
  %v4256 = vadd.f32 %v4250, 1e-05
  %v4257 = vrsqrt.pop %v4251
  %v4258 = vrsqrt.pop %v4252
  %v4259 = vrsqrt.pop %v4253
  %v4260 = vrsqrt.pop %v4254
  %v4261 = vrsqrt.pop %v4255
  %v4262 = vrsqrt.pop %v4256
  %v4263 = vmul.f32 %v4215, %v4257
  %v4264 = vmul.f32 %v4216, %v4258
  %v4265 = vmul.f32 %v4217, %v4259
  %v4266 = vmul.f32 %v4218, %v4260
  %v4267 = vmul.f32 %v4219, %v4261
  %v4268 = vmul.f32 %v4220, %v4262
  %v4270 = vlaneseq
  %v4271 = vshrl.u32 %v4270, 7
  %v4272 = vsub.s32 0, %v4271
  %v4273 = vrot.slane %v4188, %v4272
  %v4275 = vmul.f32 %v4263, %v4273
  %v4276 = vmul.f32 %v4264, %v4273
  %v4277 = vmul.f32 %v4265, %v4273
  %v4278 = vmul.f32 %v4266, %v4273
  %v4279 = vmul.f32 %v4267, %v4273
  %v4280 = vmul.f32 %v4268, %v4273
  %v4282 = vlaneseq
  %v4283 = vshrl.u32 %v4282, 7
  %v4284 = vsub.s32 0, %v4283
  %v4285 = vrot.slane %v4190, %v4284
  %v4287 = vadd.f32 %v4275, %v4285
  %v4288 = vadd.f32 %v4276, %v4285
  %v4289 = vadd.f32 %v4277, %v4285
  %v4290 = vadd.f32 %v4278, %v4285
  %v4291 = vadd.f32 %v4279, %v4285
  %v4292 = vadd.f32 %v4280, %v4285
  %4293 = vst.msk [vmem:[%s15] sm:$0xff] %vm93, %v4287
  %4294 = vst.msk [vmem:[%s15 + $0x8] sm:$0xff] %vm93, %v4288
  %4295 = vst.msk [vmem:[%s15 + $0x10] sm:$0xff] %vm93, %v4289
  %4296 = vst.msk [vmem:[%s15 + $0x18] sm:$0xff] %vm93, %v4290
  %4297 = vst.msk [vmem:[%s15 + $0x20] sm:$0xff] %vm93, %v4291
  %4298 = vst.msk [vmem:[%s15 + $0x28] sm:$0xff] %vm93, %v4292
  // Predicated region
  $region62: #{spatial_transformer_encoder_p7.1} parent=0 // pred_check
    _
  $region63: #{spatial_transformer_encoder_p7.1} parent=0 // pred_check_branch
    %4300 = sbr.rel (0) target = $region65
  $region64: #{spatial_transformer_encoder_p7.1} parent=0 // pred_region
    _
  $region65: #{spatial_transformer_encoder_p7.1} parent=0 // pred_fallthru
    _
  // Predicated region
  $region66: #{spatial_transformer_encoder_p7.1} parent=0 // pred_check
    _
  $region67: #{spatial_transformer_encoder_p7.1} parent=0 // pred_check_branch
    %4302 = sbr.rel (0) target = $region69
  $region68: #{spatial_transformer_encoder_p7.1} parent=0 // pred_region
    _
  $region69: #{spatial_transformer_encoder_p7.1} parent=0 // pred_fallthru
    _

</llo_original>
